<compile_context>
chip_gen: v6e
topology: v6e:2x2x1
jax: 0.10.0
libtpu: 0.0.40
codegen_flags: <defaults>
</compile_context>

<pallas_src>
import functools

import jax
import jax.numpy as jnp
from jax import lax
from jax.experimental import pallas as pl
from jax.experimental.pallas import tpu as pltpu


# ----------------------------- fused kernel ---------------------------------

def _cnn_fused_kernel(x_ref, wc_ref, bc_ref, wl_ref, fold_ref, bl_ref, o_ref,
                      xs_ref, *, nb, c, k, wp, lqv, lp, hd, nc):
    """Whole CNN forward for a tile of `nb` images.

    x_ref    : (nb*C, LQ)       zero-padded images, row-major flattened (Hp, Wp)
    wc_ref   : (HD, k*k*C)      conv weight, column t*C + c = W[:, c, di, dj]
    bc_ref   : (HD, 1)          conv bias
    wl_ref   : (LP, HD*NC)      linear weight, zero except at valid pool offsets
    fold_ref : (HD*NC, NC_pad)  0/1 fold matrix: channel column block -> class axis
    bl_ref   : (1, NC_pad)      linear bias (zero-padded to the lane width)
    o_ref    : (nb, NC_pad)     class scores for this batch tile
    xs_ref   : (k*k*C, nb*LQV)  VMEM scratch: K-stacked shifted windows
    """
    f32 = jnp.float32
    hi = lax.Precision.HIGHEST

    # 1) K-stack the k*k shifted windows of every image into ONE matmul operand.
    for t in range(k * k):
        s = (t // k) * wp + (t % k)                     # tap shift in flat coords
        for b in range(nb):
            xs_ref[t * c:(t + 1) * c, b * lqv:(b + 1) * lqv] = (
                x_ref[b * c:(b + 1) * c, s:s + lqv])

    # 2) conv + bias + ReLU: a single MXU matmul (K = k*k*C), kept in registers.
    conv = jnp.dot(wc_ref[...], xs_ref[...],
                   preferred_element_type=f32, precision=hi)
    conv = jnp.maximum(conv + bc_ref[...], 0.0)          # (HD, nb*LQV)

    # 3) 2x2 max pool on register slices; stack the images along sublanes.
    ms = []
    for b in range(nb):
        seg = conv[:, b * lqv:(b + 1) * lqv]
        m = jnp.maximum(
            jnp.maximum(seg[:, 0:lp],       seg[:, 1:lp + 1]),
            jnp.maximum(seg[:, wp:wp + lp], seg[:, wp + 1:wp + 1 + lp]))
        ms.append(m)
    m_all = jnp.concatenate(ms, axis=0) if nb > 1 else ms[0]   # (nb*HD, LP)

    # 4) block-diagonal linear + vectorized diagonal extraction (no per-h loop).
    r = jnp.dot(m_all, wl_ref[...], preferred_element_type=f32, precision=hi)
    rows = lax.broadcasted_iota(jnp.int32, (nb * hd, hd * nc), 0)
    cols = lax.broadcasted_iota(jnp.int32, (nb * hd, hd * nc), 1)
    blk = cols - (rows % hd) * nc            # position inside this row's block
    masked = jnp.where((blk >= 0) & (blk < nc), r, 0.0)
    # per-image sum over the HD channel rows via a tiny selector matmul
    gi = lax.broadcasted_iota(jnp.int32, (nb, nb * hd), 0)
    gr = lax.broadcasted_iota(jnp.int32, (nb, nb * hd), 1)
    gsel = ((gr >= gi * hd) & (gr < (gi + 1) * hd)).astype(f32)
    colsum = jnp.dot(gsel, masked, preferred_element_type=f32, precision=hi)

    # 5) fold channel blocks onto the class axis + bias; one lane-dense store.
    scores = jnp.dot(colsum, fold_ref[...],
                     preferred_element_type=f32, precision=hi) + bl_ref[...]
    o_ref[...] = scores.astype(o_ref.dtype)


# ------------------------------ wrapper --------------------------------------

def cnn_forward(images, params, *, images_per_step=None):
    """Pallas implementation of CNN.forward.  images: (N, C, H, W) float32.

    images_per_step: images handled by one grid step.  Default = whole batch
    (a single grid step: minimal overhead on single-TensorCore v5e/v6e).
    On v7x pass ceil(N/2) so the 'parallel' batch axis uses both TensorCores.
    """
    w_conv, b_conv, w_lin, b_lin = params
    n, c, h, w = images.shape
    hd, c_in, k, k2 = w_conv.shape
    nc = w_lin.shape[0]
    assert c_in == c and k == k2
    assert k % 2 == 1, "fused kernel assumes odd kernel size with 'same' padding"
    assert h % 2 == 0 and w % 2 == 0, "MaxPool2d(2) path assumes even H, W"
    # TODO(synk): odd H/W (PyTorch drops the last row/col in the pool) not handled.
    pad = (k - 1) // 2
    hp, wp = h + 2 * pad, w + 2 * pad
    h2, w2 = h // 2, w // 2

    # geometry of the flattened padded feature map
    lp = (h - 2) * wp + (w - 2) + 1          # covers every 2x2-pool base offset
    lqv = lp + wp + 1                        # conv-output length the pool reads
    max_shift = (k - 1) * wp + (k - 1)
    lq = pl.cdiv(max(lqv + max_shift, hp * wp), 128) * 128

    nb = n if images_per_step is None else int(images_per_step)
    n_pad = pl.cdiv(n, nb) * nb
    assert nb == n_pad or ((nb * c) % 8 == 0 and nb % 8 == 0), (
        "with multiple grid steps the per-step block must be (8,128)-aligned")
    nc_pad = pl.cdiv(nc, 128) * 128          # lane-dense output width

    # ---- input: batch-pad + zero-pad + flatten (the only per-activation glue)
    xp = jnp.pad(images.astype(jnp.float32),
                 ((0, n_pad - n), (0, 0), (pad, pad), (pad, pad)))
    xflat = xp.reshape(n_pad, c, hp * wp)
    x2d = jnp.pad(xflat, ((0, 0), (0, 0), (0, lq - hp * wp)))
    x2d = x2d.reshape(n_pad * c, lq)                                 # (N*C, LQ)

    # ---- weights: permuted once at trace time (free, weights only) ----------
    wc2 = jnp.transpose(w_conv, (0, 2, 3, 1)).reshape(hd, k * k * c)
    bc = b_conv.reshape(hd, 1)
    # Linear weight re-indexed to the in-kernel pooled layout:
    #   WL[2y*wp + 2x, hc*nc + cls] = w_lin[cls, hc*h2*w2 + y*w2 + x]
    w4 = jnp.transpose(w_lin.reshape(nc, hd, h2, w2), (2, 3, 1, 0))
    w4 = w4.reshape(h2 * w2, hd * nc)
    q_idx = (2 * jnp.arange(h2)[:, None] * wp
             + 2 * jnp.arange(w2)[None, :]).reshape(-1)
    wl = jnp.zeros((lp, hd * nc), jnp.float32).at[q_idx].set(w4)
    # Fold matrix: column hc*nc + cls of the block-diagonal result -> class cls.
    fold = (jnp.arange(hd * nc)[:, None] % nc
            == jnp.arange(nc_pad)[None, :]).astype(jnp.float32)
    bl = jnp.zeros((1, nc_pad), jnp.float32).at[0, :nc].set(b_lin)

    kernel = functools.partial(_cnn_fused_kernel, nb=nb, c=c, k=k, wp=wp,
                               lqv=lqv, lp=lp, hd=hd, nc=nc)
    scores = pl.pallas_call(
        kernel,
        out_shape=jax.ShapeDtypeStruct((n_pad, nc_pad), jnp.float32),
        grid=(n_pad // nb,),
        in_specs=[
            pl.BlockSpec((nb * c, lq), lambda i: (i, 0)),        # images (tile)
            pl.BlockSpec((hd, k * k * c), lambda i: (0, 0)),     # conv W
            pl.BlockSpec((hd, 1), lambda i: (0, 0)),             # conv b
            pl.BlockSpec((lp, hd * nc), lambda i: (0, 0)),       # linear W
            pl.BlockSpec((hd * nc, nc_pad), lambda i: (0, 0)),   # fold matrix
            pl.BlockSpec((1, nc_pad), lambda i: (0, 0)),         # linear b
        ],
        out_specs=pl.BlockSpec((nb, nc_pad), lambda i: (i, 0)),
        scratch_shapes=[pltpu.VMEM((k * k * c, nb * lqv), jnp.float32)],
        compiler_params=pltpu.CompilerParams(
            dimension_semantics=("parallel",)),
    )(x2d, wc2, bc, wl, fold, bl)
    # TODO(synk): on v6e/v7x the matmul operands could be cast to bfloat16 for
    # MXU peak; kept in f32 so the result matches the reference to ~1e-5.
    return scores[:n, :nc].astype(images.dtype)


# ----------------------------- reference (pure JAX) --------------------------

def cnn_reference(images, params):
    w_conv, b_conv, w_lin, b_lin = params
    pad = (w_conv.shape[2] - 1) // 2
    conv = jax.lax.conv_general_dilated(
        images, w_conv, window_strides=(1, 1),
        padding=[(pad, pad), (pad, pad)],
        dimension_numbers=("NCHW", "OIHW", "NCHW"),
        precision=lax.Precision.HIGHEST)
    conv = jnp.maximum(conv + b_conv[None, :, None, None], 0.0)
    n, ch, h, w = conv.shape
    pooled = conv.reshape(n, ch, h // 2, 2, w // 2, 2).max(axis=(3, 5))
    feats = pooled.reshape(n, -1)
    return jnp.dot(feats, w_lin.T, precision=lax.Precision.HIGHEST) + b_lin


# --------------------------------- main ---------------------------------------

if __name__ == "__main__":
    # Module config: im_size=(4, 16, 16), hidden_dim=8, kernel_size=3, n_classes=10
    N, C, H, W = 2, 4, 16, 16
    hidden_dim, ksz, n_classes = 8, 3, 10

    key = jax.random.PRNGKey(0)
    k1, k2, k3, k4, k5 = jax.random.split(key, 5)

    images = jax.random.normal(k1, (N, C, H, W), jnp.float32)

    # deterministic parameter init (PyTorch-style uniform bounds)
    fan_in_conv = C * ksz * ksz
    b1 = 1.0 / (fan_in_conv ** 0.5)
    w_conv = jax.random.uniform(k2, (hidden_dim, C, ksz, ksz), jnp.float32, -b1, b1)
    b_conv = jax.random.uniform(k3, (hidden_dim,), jnp.float32, -b1, b1)

    feat_dim = hidden_dim * (H // 2) * (W // 2)
    b2 = 1.0 / (feat_dim ** 0.5)
    w_lin = jax.random.uniform(k4, (n_classes, feat_dim), jnp.float32, -b2, b2)
    b_lin = jax.random.uniform(k5, (n_classes,), jnp.float32, -b2, b2)

    params = (w_conv, b_conv, w_lin, b_lin)

    fwd = jax.jit(cnn_forward)
    scores = jax.block_until_ready(fwd(images, params))
    assert scores.shape == (N, n_classes)

    ref = jax.block_until_ready(cnn_reference(images, params))
    err = float(jnp.max(jnp.abs(scores - ref)))
    assert err < 2e-3, f"mismatch vs. reference: max abs err = {err}"

    print("KERNEL_OK")
</pallas_src>

<mosaic_0001>
module attributes {stable_mosaic.version = 11 : i64} {
  func.func @_cnn_fused_kernel(%arg0: i32, %arg1: memref<8x384xf32, #tpu.memory_space<vmem>>, %arg2: memref<8x36xf32, #tpu.memory_space<vmem>>, %arg3: memref<8x1xf32, #tpu.memory_space<vmem>>, %arg4: memref<267x80xf32, #tpu.memory_space<vmem>>, %arg5: memref<80x128xf32, #tpu.memory_space<vmem>>, %arg6: memref<1x128xf32, #tpu.memory_space<vmem>>, %arg7: memref<2x128xf32, #tpu.memory_space<vmem>>, %arg8: memref<36x572xf32, #tpu.memory_space<vmem>>) attributes {dimension_semantics = [#tpu.dimension_semantics<parallel>], iteration_bounds = array<i64: 1>, scalar_prefetch = 0 : i64, scratch_operands = 1 : i64, tpu.core_type = #tpu.core_type<tc>, window_params = [{transform_indices = @transform_0, window_bounds = array<i64: 8, 384>}, {pipeline_mode = #tpu.pipeline_mode<synchronous>, transform_indices = @transform_1, window_bounds = array<i64: 8, 36>}, {pipeline_mode = #tpu.pipeline_mode<synchronous>, transform_indices = @transform_2, window_bounds = array<i64: 8, 1>}, {pipeline_mode = #tpu.pipeline_mode<synchronous>, transform_indices = @transform_3, window_bounds = array<i64: 267, 80>}, {pipeline_mode = #tpu.pipeline_mode<synchronous>, transform_indices = @transform_4, window_bounds = array<i64: 80, 128>}, {pipeline_mode = #tpu.pipeline_mode<synchronous>, transform_indices = @transform_5, window_bounds = array<i64: 1, 128>}, {transform_indices = @transform_6, window_bounds = array<i64: 2, 128>}]} {
    %c0 = arith.constant 0 : index
    %c0_0 = arith.constant 0 : index
    %0 = vector.load %arg1[%c0, %c0_0] : memref<8x384xf32, #tpu.memory_space<vmem>>, vector<4x286xf32>
    %c0_1 = arith.constant 0 : index
    %c0_2 = arith.constant 0 : index
    %1 = vector.load %arg8[%c0_1, %c0_2] : memref<36x572xf32, #tpu.memory_space<vmem>>, vector<4x286xf32>
    tpu.vector_store %arg8[%c0_1, %c0_2], %0 {strides = array<i32>} : memref<36x572xf32, #tpu.memory_space<vmem>>, vector<4x286xf32>,
    %c4 = arith.constant 4 : index
    %c0_3 = arith.constant 0 : index
    %2 = vector.load %arg1[%c4, %c0_3] : memref<8x384xf32, #tpu.memory_space<vmem>>, vector<4x286xf32>
    %c0_4 = arith.constant 0 : index
    %c286 = arith.constant 286 : index
    %3 = vector.load %arg8[%c0_4, %c286] : memref<36x572xf32, #tpu.memory_space<vmem>>, vector<4x286xf32>
    tpu.vector_store %arg8[%c0_4, %c286], %2 {strides = array<i32>} : memref<36x572xf32, #tpu.memory_space<vmem>>, vector<4x286xf32>,
    %c0_5 = arith.constant 0 : index
    %c1 = arith.constant 1 : index
    %4 = vector.load %arg1[%c0_5, %c1] : memref<8x384xf32, #tpu.memory_space<vmem>>, vector<4x286xf32>
    %c4_6 = arith.constant 4 : index
    %c0_7 = arith.constant 0 : index
    %5 = vector.load %arg8[%c4_6, %c0_7] : memref<36x572xf32, #tpu.memory_space<vmem>>, vector<4x286xf32>
    tpu.vector_store %arg8[%c4_6, %c0_7], %4 {strides = array<i32>} : memref<36x572xf32, #tpu.memory_space<vmem>>, vector<4x286xf32>,
    %c4_8 = arith.constant 4 : index
    %c1_9 = arith.constant 1 : index
    %6 = vector.load %arg1[%c4_8, %c1_9] : memref<8x384xf32, #tpu.memory_space<vmem>>, vector<4x286xf32>
    %c4_10 = arith.constant 4 : index
    %c286_11 = arith.constant 286 : index
    %7 = vector.load %arg8[%c4_10, %c286_11] : memref<36x572xf32, #tpu.memory_space<vmem>>, vector<4x286xf32>
    tpu.vector_store %arg8[%c4_10, %c286_11], %6 {strides = array<i32>} : memref<36x572xf32, #tpu.memory_space<vmem>>, vector<4x286xf32>,
    %c0_12 = arith.constant 0 : index
    %c2 = arith.constant 2 : index
    %8 = vector.load %arg1[%c0_12, %c2] : memref<8x384xf32, #tpu.memory_space<vmem>>, vector<4x286xf32>
    %c8 = arith.constant 8 : index
    %c0_13 = arith.constant 0 : index
    %9 = vector.load %arg8[%c8, %c0_13] : memref<36x572xf32, #tpu.memory_space<vmem>>, vector<4x286xf32>
    tpu.vector_store %arg8[%c8, %c0_13], %8 {strides = array<i32>} : memref<36x572xf32, #tpu.memory_space<vmem>>, vector<4x286xf32>,
    %c4_14 = arith.constant 4 : index
    %c2_15 = arith.constant 2 : index
    %10 = vector.load %arg1[%c4_14, %c2_15] : memref<8x384xf32, #tpu.memory_space<vmem>>, vector<4x286xf32>
    %c8_16 = arith.constant 8 : index
    %c286_17 = arith.constant 286 : index
    %11 = vector.load %arg8[%c8_16, %c286_17] : memref<36x572xf32, #tpu.memory_space<vmem>>, vector<4x286xf32>
    tpu.vector_store %arg8[%c8_16, %c286_17], %10 {strides = array<i32>} : memref<36x572xf32, #tpu.memory_space<vmem>>, vector<4x286xf32>,
    %c0_18 = arith.constant 0 : index
    %c18 = arith.constant 18 : index
    %12 = vector.load %arg1[%c0_18, %c18] : memref<8x384xf32, #tpu.memory_space<vmem>>, vector<4x286xf32>
    %c12 = arith.constant 12 : index
    %c0_19 = arith.constant 0 : index
    %13 = vector.load %arg8[%c12, %c0_19] : memref<36x572xf32, #tpu.memory_space<vmem>>, vector<4x286xf32>
    tpu.vector_store %arg8[%c12, %c0_19], %12 {strides = array<i32>} : memref<36x572xf32, #tpu.memory_space<vmem>>, vector<4x286xf32>,
    %c4_20 = arith.constant 4 : index
    %c18_21 = arith.constant 18 : index
    %14 = vector.load %arg1[%c4_20, %c18_21] : memref<8x384xf32, #tpu.memory_space<vmem>>, vector<4x286xf32>
    %c12_22 = arith.constant 12 : index
    %c286_23 = arith.constant 286 : index
    %15 = vector.load %arg8[%c12_22, %c286_23] : memref<36x572xf32, #tpu.memory_space<vmem>>, vector<4x286xf32>
    tpu.vector_store %arg8[%c12_22, %c286_23], %14 {strides = array<i32>} : memref<36x572xf32, #tpu.memory_space<vmem>>, vector<4x286xf32>,
    %c0_24 = arith.constant 0 : index
    %c19 = arith.constant 19 : index
    %16 = vector.load %arg1[%c0_24, %c19] : memref<8x384xf32, #tpu.memory_space<vmem>>, vector<4x286xf32>
    %c16 = arith.constant 16 : index
    %c0_25 = arith.constant 0 : index
    %17 = vector.load %arg8[%c16, %c0_25] : memref<36x572xf32, #tpu.memory_space<vmem>>, vector<4x286xf32>
    tpu.vector_store %arg8[%c16, %c0_25], %16 {strides = array<i32>} : memref<36x572xf32, #tpu.memory_space<vmem>>, vector<4x286xf32>,
    %c4_26 = arith.constant 4 : index
    %c19_27 = arith.constant 19 : index
    %18 = vector.load %arg1[%c4_26, %c19_27] : memref<8x384xf32, #tpu.memory_space<vmem>>, vector<4x286xf32>
    %c16_28 = arith.constant 16 : index
    %c286_29 = arith.constant 286 : index
    %19 = vector.load %arg8[%c16_28, %c286_29] : memref<36x572xf32, #tpu.memory_space<vmem>>, vector<4x286xf32>
    tpu.vector_store %arg8[%c16_28, %c286_29], %18 {strides = array<i32>} : memref<36x572xf32, #tpu.memory_space<vmem>>, vector<4x286xf32>,
    %c0_30 = arith.constant 0 : index
    %c20 = arith.constant 20 : index
    %20 = vector.load %arg1[%c0_30, %c20] : memref<8x384xf32, #tpu.memory_space<vmem>>, vector<4x286xf32>
    %c20_31 = arith.constant 20 : index
    %c0_32 = arith.constant 0 : index
    %21 = vector.load %arg8[%c20_31, %c0_32] : memref<36x572xf32, #tpu.memory_space<vmem>>, vector<4x286xf32>
    tpu.vector_store %arg8[%c20_31, %c0_32], %20 {strides = array<i32>} : memref<36x572xf32, #tpu.memory_space<vmem>>, vector<4x286xf32>,
    %c4_33 = arith.constant 4 : index
    %c20_34 = arith.constant 20 : index
    %22 = vector.load %arg1[%c4_33, %c20_34] : memref<8x384xf32, #tpu.memory_space<vmem>>, vector<4x286xf32>
    %c20_35 = arith.constant 20 : index
    %c286_36 = arith.constant 286 : index
    %23 = vector.load %arg8[%c20_35, %c286_36] : memref<36x572xf32, #tpu.memory_space<vmem>>, vector<4x286xf32>
    tpu.vector_store %arg8[%c20_35, %c286_36], %22 {strides = array<i32>} : memref<36x572xf32, #tpu.memory_space<vmem>>, vector<4x286xf32>,
    %c0_37 = arith.constant 0 : index
    %c36 = arith.constant 36 : index
    %24 = vector.load %arg1[%c0_37, %c36] : memref<8x384xf32, #tpu.memory_space<vmem>>, vector<4x286xf32>
    %c24 = arith.constant 24 : index
    %c0_38 = arith.constant 0 : index
    %25 = vector.load %arg8[%c24, %c0_38] : memref<36x572xf32, #tpu.memory_space<vmem>>, vector<4x286xf32>
    tpu.vector_store %arg8[%c24, %c0_38], %24 {strides = array<i32>} : memref<36x572xf32, #tpu.memory_space<vmem>>, vector<4x286xf32>,
    %c4_39 = arith.constant 4 : index
    %c36_40 = arith.constant 36 : index
    %26 = vector.load %arg1[%c4_39, %c36_40] : memref<8x384xf32, #tpu.memory_space<vmem>>, vector<4x286xf32>
    %c24_41 = arith.constant 24 : index
    %c286_42 = arith.constant 286 : index
    %27 = vector.load %arg8[%c24_41, %c286_42] : memref<36x572xf32, #tpu.memory_space<vmem>>, vector<4x286xf32>
    tpu.vector_store %arg8[%c24_41, %c286_42], %26 {strides = array<i32>} : memref<36x572xf32, #tpu.memory_space<vmem>>, vector<4x286xf32>,
    %c0_43 = arith.constant 0 : index
    %c37 = arith.constant 37 : index
    %28 = vector.load %arg1[%c0_43, %c37] : memref<8x384xf32, #tpu.memory_space<vmem>>, vector<4x286xf32>
    %c28 = arith.constant 28 : index
    %c0_44 = arith.constant 0 : index
    %29 = vector.load %arg8[%c28, %c0_44] : memref<36x572xf32, #tpu.memory_space<vmem>>, vector<4x286xf32>
    tpu.vector_store %arg8[%c28, %c0_44], %28 {strides = array<i32>} : memref<36x572xf32, #tpu.memory_space<vmem>>, vector<4x286xf32>,
    %c4_45 = arith.constant 4 : index
    %c37_46 = arith.constant 37 : index
    %30 = vector.load %arg1[%c4_45, %c37_46] : memref<8x384xf32, #tpu.memory_space<vmem>>, vector<4x286xf32>
    %c28_47 = arith.constant 28 : index
    %c286_48 = arith.constant 286 : index
    %31 = vector.load %arg8[%c28_47, %c286_48] : memref<36x572xf32, #tpu.memory_space<vmem>>, vector<4x286xf32>
    tpu.vector_store %arg8[%c28_47, %c286_48], %30 {strides = array<i32>} : memref<36x572xf32, #tpu.memory_space<vmem>>, vector<4x286xf32>,
    %c0_49 = arith.constant 0 : index
    %c38 = arith.constant 38 : index
    %32 = vector.load %arg1[%c0_49, %c38] : memref<8x384xf32, #tpu.memory_space<vmem>>, vector<4x286xf32>
    %c32 = arith.constant 32 : index
    %c0_50 = arith.constant 0 : index
    %33 = vector.load %arg8[%c32, %c0_50] : memref<36x572xf32, #tpu.memory_space<vmem>>, vector<4x286xf32>
    tpu.vector_store %arg8[%c32, %c0_50], %32 {strides = array<i32>} : memref<36x572xf32, #tpu.memory_space<vmem>>, vector<4x286xf32>,
    %c4_51 = arith.constant 4 : index
    %c38_52 = arith.constant 38 : index
    %34 = vector.load %arg1[%c4_51, %c38_52] : memref<8x384xf32, #tpu.memory_space<vmem>>, vector<4x286xf32>
    %c32_53 = arith.constant 32 : index
    %c286_54 = arith.constant 286 : index
    %35 = vector.load %arg8[%c32_53, %c286_54] : memref<36x572xf32, #tpu.memory_space<vmem>>, vector<4x286xf32>
    tpu.vector_store %arg8[%c32_53, %c286_54], %34 {strides = array<i32>} : memref<36x572xf32, #tpu.memory_space<vmem>>, vector<4x286xf32>,
    %c0_55 = arith.constant 0 : index
    %c0_56 = arith.constant 0 : index
    %36 = vector.load %arg2[%c0_55, %c0_56] : memref<8x36xf32, #tpu.memory_space<vmem>>, vector<8x36xf32>
    %c0_57 = arith.constant 0 : index
    %c0_58 = arith.constant 0 : index
    %37 = vector.load %arg8[%c0_57, %c0_58] : memref<36x572xf32, #tpu.memory_space<vmem>>, vector<36x572xf32>
    %cst = arith.constant dense<0.000000e+00> : vector<8x572xf32>
    %38 = tpu.matmul %36, %37, %cst {dimension_numbers = #tpu.dot_dimension_numbers<[1], [0], [0], [1], [0, 0, 1, 1], [], []>, precision = #tpu.contract_precision<fp32>} : vector<8x36xf32>, vector<36x572xf32>, vector<8x572xf32> -> vector<8x572xf32>
    %c0_59 = arith.constant 0 : index
    %c0_60 = arith.constant 0 : index
    %39 = vector.load %arg3[%c0_59, %c0_60] : memref<8x1xf32, #tpu.memory_space<vmem>>, vector<8x1xf32>
    %40 = vector.broadcast %39 : vector<8x1xf32> to vector<8x572xf32>
    %41 = arith.addf %38, %40 : vector<8x572xf32>
    %cst_61 = arith.constant 0.000000e+00 : f32
    %42 = vector.broadcast %cst_61 : f32 to vector<8x572xf32>
    %43 = arith.maximumf %41, %42 : vector<8x572xf32>
    %44 = vector.extract_strided_slice %43 {offsets = [0, 0], sizes = [8, 286], strides = [1, 1]} : vector<8x572xf32> to vector<8x286xf32>
    %45 = vector.extract_strided_slice %44 {offsets = [0, 0], sizes = [8, 267], strides = [1, 1]} : vector<8x286xf32> to vector<8x267xf32>
    %46 = vector.extract_strided_slice %44 {offsets = [0, 1], sizes = [8, 267], strides = [1, 1]} : vector<8x286xf32> to vector<8x267xf32>
    %47 = arith.maximumf %45, %46 : vector<8x267xf32>
    %48 = vector.extract_strided_slice %44 {offsets = [0, 18], sizes = [8, 267], strides = [1, 1]} : vector<8x286xf32> to vector<8x267xf32>
    %49 = vector.extract_strided_slice %44 {offsets = [0, 19], sizes = [8, 267], strides = [1, 1]} : vector<8x286xf32> to vector<8x267xf32>
    %50 = arith.maximumf %48, %49 : vector<8x267xf32>
    %51 = arith.maximumf %47, %50 : vector<8x267xf32>
    %52 = vector.extract_strided_slice %43 {offsets = [0, 286], sizes = [8, 286], strides = [1, 1]} : vector<8x572xf32> to vector<8x286xf32>
    %53 = vector.extract_strided_slice %52 {offsets = [0, 0], sizes = [8, 267], strides = [1, 1]} : vector<8x286xf32> to vector<8x267xf32>
    %54 = vector.extract_strided_slice %52 {offsets = [0, 1], sizes = [8, 267], strides = [1, 1]} : vector<8x286xf32> to vector<8x267xf32>
    %55 = arith.maximumf %53, %54 : vector<8x267xf32>
    %56 = vector.extract_strided_slice %52 {offsets = [0, 18], sizes = [8, 267], strides = [1, 1]} : vector<8x286xf32> to vector<8x267xf32>
    %57 = vector.extract_strided_slice %52 {offsets = [0, 19], sizes = [8, 267], strides = [1, 1]} : vector<8x286xf32> to vector<8x267xf32>
    %58 = arith.maximumf %56, %57 : vector<8x267xf32>
    %59 = arith.maximumf %55, %58 : vector<8x267xf32>
    %60 = tpu.concatenate %51, %59 in 0 : vector<8x267xf32>, vector<8x267xf32> -> vector<16x267xf32>
    %c0_62 = arith.constant 0 : index
    %c0_63 = arith.constant 0 : index
    %61 = vector.load %arg4[%c0_62, %c0_63] : memref<267x80xf32, #tpu.memory_space<vmem>>, vector<267x80xf32>
    %cst_64 = arith.constant dense<0.000000e+00> : vector<16x80xf32>
    %62 = tpu.matmul %60, %61, %cst_64 {dimension_numbers = #tpu.dot_dimension_numbers<[1], [0], [0], [1], [0, 0, 1, 1], [], []>, precision = #tpu.contract_precision<fp32>} : vector<16x267xf32>, vector<267x80xf32>, vector<16x80xf32> -> vector<16x80xf32>
    %63 = tpu.iota {dimensions = array<i32: 0>} : vector<16x80xi32>
    %64 = tpu.iota {dimensions = array<i32: 1>} : vector<16x80xi32>
    %c8_i32 = arith.constant 8 : i32
    %c0_i32 = arith.constant 0 : i32
    %65 = arith.cmpi eq, %c8_i32, %c0_i32 : i32
    %c1_i32 = arith.constant 1 : i32
    %66 = arith.select %65, %c1_i32, %c8_i32 : i32
    %67 = vector.broadcast %66 : i32 to vector<16x80xi32>
    %68 = arith.remsi %63, %67 : vector<16x80xi32>
    %c0_i32_65 = arith.constant 0 : i32
    %69 = vector.broadcast %c0_i32_65 : i32 to vector<16x80xi32>
    %70 = arith.cmpi ne, %68, %69 : vector<16x80xi32>
    %c0_i32_66 = arith.constant 0 : i32
    %71 = vector.broadcast %c0_i32_66 : i32 to vector<16x80xi32>
    %72 = arith.cmpi slt, %68, %71 : vector<16x80xi32>
    %c0_i32_67 = arith.constant 0 : i32
    %73 = arith.cmpi slt, %66, %c0_i32_67 : i32
    %74 = vector.broadcast %73 : i1 to vector<16x80xi1>
    %75 = vector.broadcast %74 : vector<16x80xi1> to vector<16x80xi1>
    %76 = arith.xori %72, %75 : vector<16x80xi1>
    %77 = arith.andi %76, %70 : vector<16x80xi1>
    %78 = vector.broadcast %66 : i32 to vector<16x80xi32>
    %79 = arith.addi %68, %78 : vector<16x80xi32>
    %80 = arith.select %77, %79, %68 : vector<16x80xi1>, vector<16x80xi32>
    %c10_i32 = arith.constant 10 : i32
    %81 = vector.broadcast %c10_i32 : i32 to vector<16x80xi32>
    %82 = arith.muli %80, %81 : vector<16x80xi32>
    %83 = arith.subi %64, %82 : vector<16x80xi32>
    %c0_i32_68 = arith.constant 0 : i32
    %84 = vector.broadcast %c0_i32_68 : i32 to vector<16x80xi32>
    %85 = arith.cmpi sge, %83, %84 : vector<16x80xi32>
    %c10_i32_69 = arith.constant 10 : i32
    %86 = vector.broadcast %c10_i32_69 : i32 to vector<16x80xi32>
    %87 = arith.cmpi slt, %83, %86 : vector<16x80xi32>
    %88 = arith.andi %85, %87 : vector<16x80xi1>
    %cst_70 = arith.constant 0.000000e+00 : f32
    %89 = vector.broadcast %cst_70 : f32 to vector<16x80xf32>
    %90 = arith.select %88, %62, %89 : vector<16x80xi1>, vector<16x80xf32>
    %91 = tpu.iota {dimensions = array<i32: 0>} : vector<2x16xi32>
    %92 = tpu.iota {dimensions = array<i32: 1>} : vector<2x16xi32>
    %c8_i32_71 = arith.constant 8 : i32
    %93 = vector.broadcast %c8_i32_71 : i32 to vector<2x16xi32>
    %94 = arith.muli %91, %93 : vector<2x16xi32>
    %95 = arith.cmpi sge, %92, %94 : vector<2x16xi32>
    %c1_i32_72 = arith.constant 1 : i32
    %96 = vector.broadcast %c1_i32_72 : i32 to vector<2x16xi32>
    %97 = arith.addi %91, %96 : vector<2x16xi32>
    %c8_i32_73 = arith.constant 8 : i32
    %98 = vector.broadcast %c8_i32_73 : i32 to vector<2x16xi32>
    %99 = arith.muli %97, %98 : vector<2x16xi32>
    %100 = arith.cmpi slt, %92, %99 : vector<2x16xi32>
    %101 = arith.andi %95, %100 : vector<2x16xi1>
    %102 = arith.extui %101 : vector<2x16xi1> to vector<2x16xi32>
    %103 = arith.sitofp %102 : vector<2x16xi32> to vector<2x16xf32>
    %cst_74 = arith.constant dense<0.000000e+00> : vector<2x80xf32>
    %104 = tpu.matmul %103, %90, %cst_74 {dimension_numbers = #tpu.dot_dimension_numbers<[1], [0], [0], [1], [0, 0, 1, 1], [], []>, precision = #tpu.contract_precision<fp32>} : vector<2x16xf32>, vector<16x80xf32>, vector<2x80xf32> -> vector<2x80xf32>
    %c0_75 = arith.constant 0 : index
    %c0_76 = arith.constant 0 : index
    %105 = vector.load %arg5[%c0_75, %c0_76] : memref<80x128xf32, #tpu.memory_space<vmem>>, vector<80x128xf32>
    %cst_77 = arith.constant dense<0.000000e+00> : vector<2x128xf32>
    %106 = tpu.matmul %104, %105, %cst_77 {dimension_numbers = #tpu.dot_dimension_numbers<[1], [0], [0], [1], [0, 0, 1, 1], [], []>, precision = #tpu.contract_precision<fp32>} : vector<2x80xf32>, vector<80x128xf32>, vector<2x128xf32> -> vector<2x128xf32>
    %c0_78 = arith.constant 0 : index
    %c0_79 = arith.constant 0 : index
    %107 = vector.load %arg6[%c0_78, %c0_79] : memref<1x128xf32, #tpu.memory_space<vmem>>, vector<1x128xf32>
    %108 = vector.broadcast %107 : vector<1x128xf32> to vector<2x128xf32>
    %109 = arith.addf %106, %108 : vector<2x128xf32>
    %c0_80 = arith.constant 0 : index
    %c0_81 = arith.constant 0 : index
    %110 = vector.load %arg7[%c0_80, %c0_81] : memref<2x128xf32, #tpu.memory_space<vmem>>, vector<2x128xf32>
    tpu.vector_store %arg7[%c0_80, %c0_81], %109 {strides = array<i32>} : memref<2x128xf32, #tpu.memory_space<vmem>>, vector<2x128xf32>,
    return
  }
  func.func @transform_0(%arg0: i32) -> (i32, i32) {
    %c0_i32 = arith.constant 0 : i32
    %c0_i32_0 = arith.constant 0 : i32
    return %arg0, %c0_i32 : i32, i32
  }
  func.func @transform_1(%arg0: i32) -> (i32, i32) {
    %c0_i32 = arith.constant 0 : i32
    %c0_i32_0 = arith.constant 0 : i32
    %c0_i32_1 = arith.constant 0 : i32
    return %c0_i32, %c0_i32_0 : i32, i32
  }
  func.func @transform_2(%arg0: i32) -> (i32, i32) {
    %c0_i32 = arith.constant 0 : i32
    %c0_i32_0 = arith.constant 0 : i32
    %c0_i32_1 = arith.constant 0 : i32
    return %c0_i32, %c0_i32_0 : i32, i32
  }
  func.func @transform_3(%arg0: i32) -> (i32, i32) {
    %c0_i32 = arith.constant 0 : i32
    %c0_i32_0 = arith.constant 0 : i32
    %c0_i32_1 = arith.constant 0 : i32
    return %c0_i32, %c0_i32_0 : i32, i32
  }
  func.func @transform_4(%arg0: i32) -> (i32, i32) {
    %c0_i32 = arith.constant 0 : i32
    %c0_i32_0 = arith.constant 0 : i32
    %c0_i32_1 = arith.constant 0 : i32
    return %c0_i32, %c0_i32_0 : i32, i32
  }
  func.func @transform_5(%arg0: i32) -> (i32, i32) {
    %c0_i32 = arith.constant 0 : i32
    %c0_i32_0 = arith.constant 0 : i32
    %c0_i32_1 = arith.constant 0 : i32
    return %c0_i32, %c0_i32_0 : i32, i32
  }
  func.func @transform_6(%arg0: i32) -> (i32, i32) {
    %c0_i32 = arith.constant 0 : i32
    %c0_i32_0 = arith.constant 0 : i32
    return %arg0, %c0_i32 : i32, i32
  }
}

</mosaic_0001>

<llo_original>
// kernel: cnn_forward.1
$region0: #{cnn_forward.1}
  #allocation0 [shape = 'u32[]', space=smem, size = 0x4, offset = 0x4, fixed_abs, tag = 'smem constant byte address 0x4 - core index']
  #allocation1 [shape = 'u32[144,128]{1,0:T(1,128)}', space=vmem, size = 0x12000, scoped, tag = 'internal scratch']
  #allocation2 [shape = 'f32[36,572]{1,0:T(8,128)}', space=vmem, size = 0x19000, scoped, tag = 'scratch operand']
  %s0 = inlined_call_operand.vmem [shape: f32[8,384], index: 0, kind: input, shape index: {}]
  %s1 = inlined_call_operand.vmem [shape: f32[8,36], index: 1, kind: input, shape index: {}]
  %s2 = inlined_call_operand.vmem [shape: f32[8,1], index: 2, kind: input, shape index: {}]
  %s3 = inlined_call_operand.vmem [shape: f32[267,80], index: 3, kind: input, shape index: {}]
  %s4 = inlined_call_operand.vmem [shape: f32[80,128], index: 4, kind: input, shape index: {}]
  %s5 = inlined_call_operand.vmem [shape: f32[1,128], index: 5, kind: input, shape index: {}]
  %s6 = inlined_call_operand.hbm [shape: f32[2,128], index: 6, kind: output, shape index: {}]
  %s7 = sld [smem:[#allocation0]]
  $region34: #{cnn_forward.1} parent=0
    _
  %s9 = ssub.s32 1, %s7
  %s10 = scalar_select 0, %s9, %s7
  $region1: #{cnn_forward.1} parent=0
    #allocation3 [shape = 'u8[1024]{0}', space=vmem, size = 0x400, scoped, tag = 'output window, operand 0, single buffered']
    #allocation4 [shape = 's32[1]{0}', space=sflag, size = 0x4, scoped, tag = 'scoped memory for cnn_forward.1']
    %11 = vsyncpa [#allocation4], 0
    // Predicated region
    $region2: #{cnn_forward.1} parent=1 // pred_check
      _
    $region3: #{cnn_forward.1} parent=1 // pred_check_branch
      %13 = sbr.rel (0) target = $region5
    $region4: #{cnn_forward.1} parent=1 // pred_region
      _
    $region5: #{cnn_forward.1} parent=1 // pred_fallthru
      _
    // Predicated region
    $region6: #{cnn_forward.1} parent=1 // pred_check
      _
    $region7: #{cnn_forward.1} parent=1 // pred_check_branch
      %15 = sbr.rel (0) target = $region9
    $region8: #{cnn_forward.1} parent=1 // pred_region
      _
    $region9: #{cnn_forward.1} parent=1 // pred_fallthru
      _
    // Predicated region
    $region10: #{cnn_forward.1} parent=1 // pred_check
      _
    $region11: #{cnn_forward.1} parent=1 // pred_check_branch
      %17 = sbr.rel (0) target = $region13
    $region12: #{cnn_forward.1} parent=1 // pred_region
      _
    $region13: #{cnn_forward.1} parent=1 // pred_fallthru
      _
    // Predicated region
    $region14: #{cnn_forward.1} parent=1 // pred_check
      _
    $region15: #{cnn_forward.1} parent=1 // pred_check_branch
      %19 = sbr.rel (0) target = $region17
    $region16: #{cnn_forward.1} parent=1 // pred_region
      _
    $region17: #{cnn_forward.1} parent=1 // pred_fallthru
      _
    // Predicated region
    $region18: #{cnn_forward.1} parent=1 // pred_check
      _
    $region19: #{cnn_forward.1} parent=1 // pred_check_branch
      %21 = sbr.rel (0) target = $region21
    $region20: #{cnn_forward.1} parent=1 // pred_region
      _
    $region21: #{cnn_forward.1} parent=1 // pred_fallthru
      _
    // Predicated region
    $region22: #{cnn_forward.1} parent=1 // pred_check
      _
    $region23: #{cnn_forward.1} parent=1 // pred_check_branch
      %23 = sbr.rel (0) target = $region25
    $region24: #{cnn_forward.1} parent=1 // pred_region
      _
    $region25: #{cnn_forward.1} parent=1 // pred_fallthru
      _
    %v24 = vld [vmem:[%s0] sm:$0xf]
    %v25 = vld [vmem:[%s0 + $0x8] sm:$0xf]
    %v26 = vld [vmem:[%s0 + $0x10] sm:$0xf]
    %27 = vst [vmem:[#allocation2] sm:$0xf] %v24
    %28 = vst [vmem:[#allocation2 + $0x8] sm:$0xf] %v25
    %vm29 = vcmask 240640
    %30 = vst.msk [vmem:[#allocation2 + $0x10] sm:$0xf] %vm29, %v26
    %v31 = vld [vmem:[%s0] sm:$0xf0]
    %v32 = vld [vmem:[%s0 + $0x8] sm:$0xf0]
    %v33 = vld [vmem:[%s0 + $0x10] sm:$0xf0]
    %v37 = vrot.slane %v31, 4
    %v38 = vrot.slane %v32, 4
    %v39 = vrot.slane %v33, 4
    %40 = vrot.lane.b32.xlu0 %v37, 30
    %v41 = vpop.permute.xlu0 %40
    %42 = vrot.lane.b32.xlu0 %v38, 30
    %v43 = vpop.permute.xlu0 %42
    %44 = vrot.lane.b32.xlu0 %v39, 30
    %v45 = vpop.permute.xlu0 %44
    %vm46 = vcmask 244736
    %v47 = vsel %vm46, %v41, %v43
    %v48 = vsel %vm46, %v43, %v45
    %vm52 = vcmask 1043696
    %53 = vst.msk [vmem:[#allocation2 + $0x10] sm:$0xf] %vm52, %v41
    %54 = vst [vmem:[#allocation2 + $0x18] sm:$0xf] %v47
    %vm55 = vcmask 486400
    %56 = vst.msk [vmem:[#allocation2 + $0x20] sm:$0xf] %vm55, %v48
    %v57 = vld [vmem:[%s0] sm:$0xf]
    %v58 = vld [vmem:[%s0 + $0x8] sm:$0xf]
    %v59 = vld [vmem:[%s0 + $0x10] sm:$0xf]
    %v63 = vrot.slane %v57, 4
    %v64 = vrot.slane %v58, 4
    %v65 = vrot.slane %v59, 4
    %66 = vrot.lane.b32.xlu0 %v63, 127
    %v67 = vpop.permute.xlu0 %66
    %68 = vrot.lane.b32.xlu0 %v64, 127
    %v69 = vpop.permute.xlu0 %68
    %70 = vrot.lane.b32.xlu0 %v65, 127
    %v71 = vpop.permute.xlu0 %70
    %vm72 = vcmask 1039360
    %v73 = vsel %vm72, %v67, %v69
    %v74 = vsel %vm72, %v69, %v71
    %78 = vst [vmem:[#allocation2] sm:$0xf0] %v73
    %79 = vst [vmem:[#allocation2 + $0x8] sm:$0xf0] %v74
    %vm80 = vcmask 244740
    %81 = vst.msk [vmem:[#allocation2 + $0x10] sm:$0xf0] %vm80, %v71
    %v82 = vld [vmem:[%s0] sm:$0xf0]
    %v83 = vld [vmem:[%s0 + $0x8] sm:$0xf0]
    %v84 = vld [vmem:[%s0 + $0x10] sm:$0xf0]
    %88 = vrot.lane.b32.xlu0 %v82, 29
    %v89 = vpop.permute.xlu0 %88
    %90 = vrot.lane.b32.xlu0 %v83, 29
    %v91 = vpop.permute.xlu0 %90
    %92 = vrot.lane.b32.xlu0 %v84, 29
    %v93 = vpop.permute.xlu0 %92
    %vm94 = vcmask 236544
    %v95 = vsel %vm94, %v89, %v91
    %v96 = vsel %vm94, %v91, %v93
    %vm100 = vcmask 1047796
    %101 = vst.msk [vmem:[#allocation2 + $0x10] sm:$0xf0] %vm100, %v89
    %102 = vst [vmem:[#allocation2 + $0x18] sm:$0xf0] %v95
    %vm103 = vcmask 490500
    %104 = vst.msk [vmem:[#allocation2 + $0x20] sm:$0xf0] %vm103, %v96
    %v105 = vld [vmem:[%s0] sm:$0xf]
    %v106 = vld [vmem:[%s0 + $0x8] sm:$0xf]
    %v107 = vld [vmem:[%s0 + $0x10] sm:$0xf]
    %111 = vrot.lane.b32.xlu0 %v105, 126
    %v112 = vpop.permute.xlu0 %111
    %113 = vrot.lane.b32.xlu0 %v106, 126
    %v114 = vpop.permute.xlu0 %113
    %115 = vrot.lane.b32.xlu0 %v107, 126
    %v116 = vpop.permute.xlu0 %115
    %vm117 = vcmask 1031168
    %v118 = vsel %vm117, %v112, %v114
    %v119 = vsel %vm117, %v114, %v116
    %123 = vst [vmem:[#allocation2 + $0x28] sm:$0xf] %v118
    %124 = vst [vmem:[#allocation2 + $0x30] sm:$0xf] %v119
    %125 = vst.msk [vmem:[#allocation2 + $0x38] sm:$0xf] %vm29, %v116
    %v126 = vld [vmem:[%s0] sm:$0xf0]
    %v127 = vld [vmem:[%s0 + $0x8] sm:$0xf0]
    %v128 = vld [vmem:[%s0 + $0x10] sm:$0xf0]
    %v132 = vrot.slane %v126, 4
    %v133 = vrot.slane %v127, 4
    %v134 = vrot.slane %v128, 4
    %135 = vrot.lane.b32.xlu0 %v132, 28
    %v136 = vpop.permute.xlu0 %135
    %137 = vrot.lane.b32.xlu0 %v133, 28
    %v138 = vpop.permute.xlu0 %137
    %139 = vrot.lane.b32.xlu0 %v134, 28
    %v140 = vpop.permute.xlu0 %139
    %vm141 = vcmask 228352
    %v142 = vsel %vm141, %v136, %v138
    %v143 = vsel %vm141, %v138, %v140
    %147 = vst.msk [vmem:[#allocation2 + $0x38] sm:$0xf] %vm52, %v136
    %148 = vst [vmem:[#allocation2 + $0x40] sm:$0xf] %v142
    %149 = vst.msk [vmem:[#allocation2 + $0x48] sm:$0xf] %vm55, %v143
    %v150 = vld [vmem:[%s0] sm:$0xf]
    %v151 = vld [vmem:[%s0 + $0x8] sm:$0xf]
    %v152 = vld [vmem:[%s0 + $0x10] sm:$0xf]
    %v156 = vrot.slane %v150, 4
    %v157 = vrot.slane %v151, 4
    %v158 = vrot.slane %v152, 4
    %159 = vrot.lane.b32.xlu0 %v156, 110
    %v160 = vpop.permute.xlu0 %159
    %161 = vrot.lane.b32.xlu0 %v157, 110
    %v162 = vpop.permute.xlu0 %161
    %163 = vrot.lane.b32.xlu0 %v158, 110
    %v164 = vpop.permute.xlu0 %163
    %vm165 = vcmask 900096
    %v166 = vsel %vm165, %v160, %v162
    %v167 = vsel %vm165, %v162, %v164
    %171 = vst [vmem:[#allocation2 + $0x28] sm:$0xf0] %v166
    %172 = vst [vmem:[#allocation2 + $0x30] sm:$0xf0] %v167
    %173 = vst.msk [vmem:[#allocation2 + $0x38] sm:$0xf0] %vm80, %v164
    %v174 = vld [vmem:[%s0] sm:$0xf0]
    %v175 = vld [vmem:[%s0 + $0x8] sm:$0xf0]
    %v176 = vld [vmem:[%s0 + $0x10] sm:$0xf0]
    %180 = vrot.lane.b32.xlu0 %v174, 12
    %v181 = vpop.permute.xlu0 %180
    %182 = vrot.lane.b32.xlu0 %v175, 12
    %v183 = vpop.permute.xlu0 %182
    %184 = vrot.lane.b32.xlu0 %v176, 12
    %v185 = vpop.permute.xlu0 %184
    %vm186 = vcmask 97280
    %v187 = vsel %vm186, %v181, %v183
    %v188 = vsel %vm186, %v183, %v185
    %192 = vst.msk [vmem:[#allocation2 + $0x38] sm:$0xf0] %vm100, %v181
    %193 = vst [vmem:[#allocation2 + $0x40] sm:$0xf0] %v187
    %194 = vst.msk [vmem:[#allocation2 + $0x48] sm:$0xf0] %vm103, %v188
    %v195 = vld [vmem:[%s0] sm:$0xf]
    %v196 = vld [vmem:[%s0 + $0x8] sm:$0xf]
    %v197 = vld [vmem:[%s0 + $0x10] sm:$0xf]
    %201 = vrot.lane.b32.xlu0 %v195, 109
    %v202 = vpop.permute.xlu0 %201
    %203 = vrot.lane.b32.xlu0 %v196, 109
    %v204 = vpop.permute.xlu0 %203
    %205 = vrot.lane.b32.xlu0 %v197, 109
    %v206 = vpop.permute.xlu0 %205
    %vm207 = vcmask 891904
    %v208 = vsel %vm207, %v202, %v204
    %v209 = vsel %vm207, %v204, %v206
    %213 = vst [vmem:[#allocation2 + $0x50] sm:$0xf] %v208
    %214 = vst [vmem:[#allocation2 + $0x58] sm:$0xf] %v209
    %215 = vst.msk [vmem:[#allocation2 + $0x60] sm:$0xf] %vm29, %v206
    %v216 = vld [vmem:[%s0] sm:$0xf0]
    %v217 = vld [vmem:[%s0 + $0x8] sm:$0xf0]
    %v218 = vld [vmem:[%s0 + $0x10] sm:$0xf0]
    %v222 = vrot.slane %v216, 4
    %v223 = vrot.slane %v217, 4
    %v224 = vrot.slane %v218, 4
    %225 = vrot.lane.b32.xlu0 %v222, 11
    %v226 = vpop.permute.xlu0 %225
    %227 = vrot.lane.b32.xlu0 %v223, 11
    %v228 = vpop.permute.xlu0 %227
    %229 = vrot.lane.b32.xlu0 %v224, 11
    %v230 = vpop.permute.xlu0 %229
    %vm231 = vcmask 89088
    %v232 = vsel %vm231, %v226, %v228
    %v233 = vsel %vm231, %v228, %v230
    %237 = vst.msk [vmem:[#allocation2 + $0x60] sm:$0xf] %vm52, %v226
    %238 = vst [vmem:[#allocation2 + $0x68] sm:$0xf] %v232
    %239 = vst.msk [vmem:[#allocation2 + $0x70] sm:$0xf] %vm55, %v233
    %v240 = vld [vmem:[%s0] sm:$0xf]
    %v241 = vld [vmem:[%s0 + $0x8] sm:$0xf]
    %v242 = vld [vmem:[%s0 + $0x10] sm:$0xf]
    %v246 = vrot.slane %v240, 4
    %v247 = vrot.slane %v241, 4
    %v248 = vrot.slane %v242, 4
    %249 = vrot.lane.b32.xlu0 %v246, 108
    %v250 = vpop.permute.xlu0 %249
    %251 = vrot.lane.b32.xlu0 %v247, 108
    %v252 = vpop.permute.xlu0 %251
    %253 = vrot.lane.b32.xlu0 %v248, 108
    %v254 = vpop.permute.xlu0 %253
    %vm255 = vcmask 883712
    %v256 = vsel %vm255, %v250, %v252
    %v257 = vsel %vm255, %v252, %v254
    %261 = vst [vmem:[#allocation2 + $0x50] sm:$0xf0] %v256
    %262 = vst [vmem:[#allocation2 + $0x58] sm:$0xf0] %v257
    %263 = vst.msk [vmem:[#allocation2 + $0x60] sm:$0xf0] %vm80, %v254
    %v264 = vld [vmem:[%s0] sm:$0xf0]
    %v265 = vld [vmem:[%s0 + $0x8] sm:$0xf0]
    %v266 = vld [vmem:[%s0 + $0x10] sm:$0xf0]
    %270 = vrot.lane.b32.xlu0 %v264, 10
    %v271 = vpop.permute.xlu0 %270
    %272 = vrot.lane.b32.xlu0 %v265, 10
    %v273 = vpop.permute.xlu0 %272
    %274 = vrot.lane.b32.xlu0 %v266, 10
    %v275 = vpop.permute.xlu0 %274
    %vm276 = vcmask 80896
    %v277 = vsel %vm276, %v271, %v273
    %v278 = vsel %vm276, %v273, %v275
    %282 = vst.msk [vmem:[#allocation2 + $0x60] sm:$0xf0] %vm100, %v271
    %283 = vst [vmem:[#allocation2 + $0x68] sm:$0xf0] %v277
    %284 = vst.msk [vmem:[#allocation2 + $0x70] sm:$0xf0] %vm103, %v278
    %v285 = vld [vmem:[%s0] sm:$0xf]
    %v286 = vld [vmem:[%s0 + $0x8] sm:$0xf]
    %v287 = vld [vmem:[%s0 + $0x10] sm:$0xf]
    %291 = vrot.lane.b32.xlu0 %v285, 92
    %v292 = vpop.permute.xlu0 %291
    %293 = vrot.lane.b32.xlu0 %v286, 92
    %v294 = vpop.permute.xlu0 %293
    %295 = vrot.lane.b32.xlu0 %v287, 92
    %v296 = vpop.permute.xlu0 %295
    %vm297 = vcmask 752640
    %v298 = vsel %vm297, %v292, %v294
    %v299 = vsel %vm297, %v294, %v296
    %303 = vst [vmem:[#allocation2 + $0x78] sm:$0xf] %v298
    %304 = vst [vmem:[#allocation2 + $0x80] sm:$0xf] %v299
    %305 = vst.msk [vmem:[#allocation2 + $0x88] sm:$0xf] %vm29, %v296
    %v306 = vld [vmem:[%s0] sm:$0xf0]
    %v307 = vld [vmem:[%s0 + $0x8] sm:$0xf0]
    %v308 = vld [vmem:[%s0 + $0x10] sm:$0xf0]
    %v312 = vrot.slane %v306, 4
    %v313 = vrot.slane %v307, 4
    %v314 = vrot.slane %v308, 4
    %315 = vrot.lane.b32.xlu0 %v312, 122
    %v316 = vpop.permute.xlu0 %315
    %317 = vrot.lane.b32.xlu0 %v313, 122
    %v318 = vpop.permute.xlu0 %317
    %319 = vrot.lane.b32.xlu0 %v314, 122
    %v320 = vpop.permute.xlu0 %319
    %vm321 = vcmask 998400
    %v322 = vsel %vm321, %v316, %v318
    %v323 = vsel %vm321, %v318, %v320
    %327 = vst.msk [vmem:[#allocation2 + $0x88] sm:$0xf] %vm52, %v322
    %328 = vst [vmem:[#allocation2 + $0x90] sm:$0xf] %v323
    %329 = vst.msk [vmem:[#allocation2 + $0x98] sm:$0xf] %vm55, %v320
    %v330 = vld [vmem:[%s0] sm:$0xf]
    %v331 = vld [vmem:[%s0 + $0x8] sm:$0xf]
    %v332 = vld [vmem:[%s0 + $0x10] sm:$0xf]
    %v336 = vrot.slane %v330, 4
    %v337 = vrot.slane %v331, 4
    %v338 = vrot.slane %v332, 4
    %339 = vrot.lane.b32.xlu0 %v336, 91
    %v340 = vpop.permute.xlu0 %339
    %341 = vrot.lane.b32.xlu0 %v337, 91
    %v342 = vpop.permute.xlu0 %341
    %343 = vrot.lane.b32.xlu0 %v338, 91
    %v344 = vpop.permute.xlu0 %343
    %vm345 = vcmask 744448
    %v346 = vsel %vm345, %v340, %v342
    %v347 = vsel %vm345, %v342, %v344
    %351 = vst [vmem:[#allocation2 + $0x78] sm:$0xf0] %v346
    %352 = vst [vmem:[#allocation2 + $0x80] sm:$0xf0] %v347
    %353 = vst.msk [vmem:[#allocation2 + $0x88] sm:$0xf0] %vm80, %v344
    %v354 = vld [vmem:[%s0] sm:$0xf0]
    %v355 = vld [vmem:[%s0 + $0x8] sm:$0xf0]
    %v356 = vld [vmem:[%s0 + $0x10] sm:$0xf0]
    %360 = vrot.lane.b32.xlu0 %v354, 121
    %v361 = vpop.permute.xlu0 %360
    %362 = vrot.lane.b32.xlu0 %v355, 121
    %v363 = vpop.permute.xlu0 %362
    %364 = vrot.lane.b32.xlu0 %v356, 121
    %v365 = vpop.permute.xlu0 %364
    %vm366 = vcmask 990208
    %v367 = vsel %vm366, %v361, %v363
    %v368 = vsel %vm366, %v363, %v365
    %372 = vst.msk [vmem:[#allocation2 + $0x88] sm:$0xf0] %vm100, %v367
    %373 = vst [vmem:[#allocation2 + $0x90] sm:$0xf0] %v368
    %374 = vst.msk [vmem:[#allocation2 + $0x98] sm:$0xf0] %vm103, %v365
    %v375 = vld [vmem:[%s0] sm:$0xf]
    %v376 = vld [vmem:[%s0 + $0x8] sm:$0xf]
    %v377 = vld [vmem:[%s0 + $0x10] sm:$0xf]
    %381 = vrot.lane.b32.xlu0 %v375, 90
    %v382 = vpop.permute.xlu0 %381
    %383 = vrot.lane.b32.xlu0 %v376, 90
    %v384 = vpop.permute.xlu0 %383
    %385 = vrot.lane.b32.xlu0 %v377, 90
    %v386 = vpop.permute.xlu0 %385
    %vm387 = vcmask 736256
    %v388 = vsel %vm387, %v382, %v384
    %v389 = vsel %vm387, %v384, %v386
    %393 = vst [vmem:[#allocation2 + $0xa0] sm:$0xf] %v388
    %394 = vst [vmem:[#allocation2 + $0xa8] sm:$0xf] %v389
    %395 = vst.msk [vmem:[#allocation2 + $0xb0] sm:$0xf] %vm29, %v386
    %v396 = vld [vmem:[%s0] sm:$0xf0]
    %v397 = vld [vmem:[%s0 + $0x8] sm:$0xf0]
    %v398 = vld [vmem:[%s0 + $0x10] sm:$0xf0]
    %v402 = vrot.slane %v396, 4
    %v403 = vrot.slane %v397, 4
    %v404 = vrot.slane %v398, 4
    %405 = vrot.lane.b32.xlu0 %v402, 120
    %v406 = vpop.permute.xlu0 %405
    %407 = vrot.lane.b32.xlu0 %v403, 120
    %v408 = vpop.permute.xlu0 %407
    %409 = vrot.lane.b32.xlu0 %v404, 120
    %v410 = vpop.permute.xlu0 %409
    %vm411 = vcmask 982016
    %v412 = vsel %vm411, %v406, %v408
    %v413 = vsel %vm411, %v408, %v410
    %417 = vst.msk [vmem:[#allocation2 + $0xb0] sm:$0xf] %vm52, %v412
    %418 = vst [vmem:[#allocation2 + $0xb8] sm:$0xf] %v413
    %419 = vst.msk [vmem:[#allocation2 + $0xc0] sm:$0xf] %vm55, %v410
    %v420 = vld [vmem:[%s1] sm:$0xff]
    %v421 = vld [vmem:[#allocation2] sm:$0xff]
    %v422 = vld [vmem:[#allocation2 + $0x8] sm:$0xff]
    %v423 = vld [vmem:[#allocation2 + $0x10] sm:$0xff]
    %v424 = vld [vmem:[#allocation2 + $0x18] sm:$0xff]
    %v425 = vld [vmem:[#allocation2 + $0x20] sm:$0xff]
    %v426 = vld [vmem:[#allocation2 + $0x28] sm:$0xff]
    %v427 = vld [vmem:[#allocation2 + $0x30] sm:$0xff]
    %v428 = vld [vmem:[#allocation2 + $0x38] sm:$0xff]
    %v429 = vld [vmem:[#allocation2 + $0x40] sm:$0xff]
    %v430 = vld [vmem:[#allocation2 + $0x48] sm:$0xff]
    %v431 = vld [vmem:[#allocation2 + $0x50] sm:$0xff]
    %v432 = vld [vmem:[#allocation2 + $0x58] sm:$0xff]
    %v433 = vld [vmem:[#allocation2 + $0x60] sm:$0xff]
    %v434 = vld [vmem:[#allocation2 + $0x68] sm:$0xff]
    %v435 = vld [vmem:[#allocation2 + $0x70] sm:$0xff]
    %v436 = vld [vmem:[#allocation2 + $0x78] sm:$0xff]
    %v437 = vld [vmem:[#allocation2 + $0x80] sm:$0xff]
    %v438 = vld [vmem:[#allocation2 + $0x88] sm:$0xff]
    %v439 = vld [vmem:[#allocation2 + $0x90] sm:$0xff]
    %v440 = vld [vmem:[#allocation2 + $0x98] sm:$0xff]
    %v441 = vld [vmem:[#allocation2 + $0xa0] sm:$0xf]
    %v442 = vld [vmem:[#allocation2 + $0xa8] sm:$0xf]
    %v443 = vld [vmem:[#allocation2 + $0xb0] sm:$0xf]
    %v444 = vld [vmem:[#allocation2 + $0xb8] sm:$0xf]
    %v445 = vld [vmem:[#allocation2 + $0xc0] sm:$0xf]
    %v446 = vld [vmem:[%s2] sm:$0xff]
    %448 = vset.pattern.permute.xlu0 0
    %449 = vperm.xlu0 %448, %v446
    %v450 = vpop.permute.xlu0 %449
    %vm452 = vcmask 293888
    %v454 = vsel %vm452, %v420, 0
    %vm456 = vcmask 1043456
    %v458 = vsel %vm456, %v441, 0
    %v461 = vsel %vm456, %v442, 0
    %v464 = vsel %vm456, %v443, 0
    %v467 = vsel %vm456, %v444, 0
    %v470 = vsel %vm456, %v445, 0
    %472 = vmatprep.subr.mxu0 0.0
    %473 = vmatpush1.msra.mxu0 0.0
    %474 = vmatprep.subr.mxu0 0.0
    %475 = vmatpush1.msra.mxu0 0.0
    %476 = vmatprep.subr.mxu0 0.0
    %477 = vmatpush1.msra.mxu0 0.0
    %478 = vmatprep.subr.mxu0 0.0
    %479 = vmatpush1.msra.mxu0 0.0
    %480 = vmatprep.subr.mxu0 0.0
    %481 = vmatpush1.msra.mxu0 0.0
    %482 = vmatprep.subr.mxu0 0.0
    %483 = vmatpush1.msra.mxu0 0.0
    %484 = vmatprep.subr.mxu0 0.0
    %485 = vmatpush1.msra.mxu0 0.0
    %486 = vmatprep.subr.mxu0 0.0
    %487 = vmatpush1.msra.mxu0 0.0
    %488 = vmatprep.subr.mxu0 0.0
    %489 = vmatpush1.msra.mxu0 0.0
    %490 = vmatprep.subr.mxu0 0.0
    %491 = vmatpush1.msra.mxu0 0.0
    %492 = vmatprep.subr.mxu0 0.0
    %493 = vmatpush1.msra.mxu0 0.0
    %v494 = vand.u32 %v461, 4294901760
    %495 = vmatprep.subr.mxu0 %v494
    %v496 = vand.u32 %v458, 4294901760
    %497 = vmatpush1.msra.mxu0 %v496
    %v498 = vand.u32 %v437, 4294901760
    %499 = vmatprep.subr.mxu0 %v498
    %v500 = vand.u32 %v436, 4294901760
    %501 = vmatpush1.msra.mxu0 %v500
    %v502 = vand.u32 %v432, 4294901760
    %503 = vmatprep.subr.mxu0 %v502
    %v504 = vand.u32 %v431, 4294901760
    %505 = vmatpush1.msra.mxu0 %v504
    %v506 = vand.u32 %v427, 4294901760
    %507 = vmatprep.subr.mxu0 %v506
    %v508 = vand.u32 %v426, 4294901760
    %509 = vmatpush1.msra.mxu0 %v508
    %v510 = vand.u32 %v422, 4294901760
    %511 = vmatprep.subr.mxu0 %v510
    %v512 = vand.u32 %v421, 4294901760
    %513 = vmatpush1.msra.mxu0 %v512
    %514 = vmatprep.subr.mxu0 0.0
    %515 = vmatpush2.msra.mxu0 0.0
    %516 = vmatprep.subr.mxu0 0.0
    %517 = vmatpush2.msra.mxu0 0.0
    %518 = vmatprep.subr.mxu0 0.0
    %519 = vmatpush2.msra.mxu0 0.0
    %520 = vmatprep.subr.mxu0 0.0
    %521 = vmatpush2.msra.mxu0 0.0
    %522 = vmatprep.subr.mxu0 0.0
    %523 = vmatpush2.msra.mxu0 0.0
    %524 = vmatprep.subr.mxu0 0.0
    %525 = vmatpush2.msra.mxu0 0.0
    %526 = vmatprep.subr.mxu0 0.0
    %527 = vmatpush2.msra.mxu0 0.0
    %528 = vmatprep.subr.mxu0 0.0
    %529 = vmatpush2.msra.mxu0 0.0
    %530 = vmatprep.subr.mxu0 0.0
    %531 = vmatpush2.msra.mxu0 0.0
    %532 = vmatprep.subr.mxu0 0.0
    %533 = vmatpush2.msra.mxu0 0.0
    %534 = vmatprep.subr.mxu0 0.0
    %535 = vmatpush2.msra.mxu0 0.0
    %536 = vmatprep.subr.mxu0 0.0
    %537 = vmatpush2.msra.mxu0 0.0
    %538 = vmatprep.subr.mxu0 0.0
    %539 = vmatpush2.msra.mxu0 0.0
    %540 = vmatprep.subr.mxu0 0.0
    %541 = vmatpush2.msra.mxu0 0.0
    %542 = vmatprep.subr.mxu0 0.0
    %543 = vmatpush2.msra.mxu0 0.0
    %544 = vmatprep.subr.mxu0 0.0
    %545 = vmatpush2.msra.mxu0 0.0
    %546 = vmatprep.mubr.f32.mxu0 0.0
    %v547 = vand.u32 %v454, 4294901760
    %v548 = vsub.f32 %v454, %v547
    %v549 = vand.u32 %v548, 4294901760
    %v550 = vsub.f32 %v548, %v549
    %v551 = vand.u32 %v550, 4294901760
    %552 = vmatmul.mubr.f32.gmra.mxu0 %v551
    %v553 = vpop.f32.mrf.mxu0
    %v554 = vadd.f32 %v450, %v553
    %v555 = vpop.f32.mrf.mxu0
    %v556 = vadd.f32 %v450, %v555
    %557 = vdwg.mxu0
    %558 = vmatprep.subr.mxu0 0.0
    %559 = vmatpush1.msra.mxu0 0.0
    %560 = vmatprep.subr.mxu0 0.0
    %561 = vmatpush1.msra.mxu0 0.0
    %562 = vmatprep.subr.mxu0 0.0
    %563 = vmatpush1.msra.mxu0 0.0
    %564 = vmatprep.subr.mxu0 0.0
    %565 = vmatpush1.msra.mxu0 0.0
    %566 = vmatprep.subr.mxu0 0.0
    %567 = vmatpush1.msra.mxu0 0.0
    %568 = vmatprep.subr.mxu0 0.0
    %569 = vmatpush1.msra.mxu0 0.0
    %570 = vmatprep.subr.mxu0 0.0
    %571 = vmatpush1.msra.mxu0 0.0
    %572 = vmatprep.subr.mxu0 0.0
    %573 = vmatpush1.msra.mxu0 0.0
    %574 = vmatprep.subr.mxu0 0.0
    %575 = vmatpush1.msra.mxu0 0.0
    %576 = vmatprep.subr.mxu0 0.0
    %577 = vmatpush1.msra.mxu0 0.0
    %578 = vmatprep.subr.mxu0 0.0
    %579 = vmatpush1.msra.mxu0 0.0
    %v580 = vand.u32 %v461, 4294901760
    %v581 = vsub.f32 %v461, %v580
    %v582 = vand.u32 %v581, 4294901760
    %v583 = vsub.f32 %v581, %v582
    %v584 = vand.u32 %v583, 4294901760
    %585 = vmatprep.subr.mxu0 %v584
    %v586 = vand.u32 %v458, 4294901760
    %v587 = vsub.f32 %v458, %v586
    %v588 = vand.u32 %v587, 4294901760
    %v589 = vsub.f32 %v587, %v588
    %v590 = vand.u32 %v589, 4294901760
    %591 = vmatpush1.msra.mxu0 %v590
    %v592 = vand.u32 %v437, 4294901760
    %v593 = vsub.f32 %v437, %v592
    %v594 = vand.u32 %v593, 4294901760
    %v595 = vsub.f32 %v593, %v594
    %v596 = vand.u32 %v595, 4294901760
    %597 = vmatprep.subr.mxu0 %v596
    %v598 = vand.u32 %v436, 4294901760
    %v599 = vsub.f32 %v436, %v598
    %v600 = vand.u32 %v599, 4294901760
    %v601 = vsub.f32 %v599, %v600
    %v602 = vand.u32 %v601, 4294901760
    %603 = vmatpush1.msra.mxu0 %v602
    %v604 = vand.u32 %v432, 4294901760
    %v605 = vsub.f32 %v432, %v604
    %v606 = vand.u32 %v605, 4294901760
    %v607 = vsub.f32 %v605, %v606
    %v608 = vand.u32 %v607, 4294901760
    %609 = vmatprep.subr.mxu0 %v608
    %v610 = vand.u32 %v431, 4294901760
    %v611 = vsub.f32 %v431, %v610
    %v612 = vand.u32 %v611, 4294901760
    %v613 = vsub.f32 %v611, %v612
    %v614 = vand.u32 %v613, 4294901760
    %615 = vmatpush1.msra.mxu0 %v614
    %v616 = vand.u32 %v427, 4294901760
    %v617 = vsub.f32 %v427, %v616
    %v618 = vand.u32 %v617, 4294901760
    %v619 = vsub.f32 %v617, %v618
    %v620 = vand.u32 %v619, 4294901760
    %621 = vmatprep.subr.mxu0 %v620
    %v622 = vand.u32 %v426, 4294901760
    %v623 = vsub.f32 %v426, %v622
    %v624 = vand.u32 %v623, 4294901760
    %v625 = vsub.f32 %v623, %v624
    %v626 = vand.u32 %v625, 4294901760
    %627 = vmatpush1.msra.mxu0 %v626
    %v628 = vand.u32 %v422, 4294901760
    %v629 = vsub.f32 %v422, %v628
    %v630 = vand.u32 %v629, 4294901760
    %v631 = vsub.f32 %v629, %v630
    %v632 = vand.u32 %v631, 4294901760
    %633 = vmatprep.subr.mxu0 %v632
    %v634 = vand.u32 %v421, 4294901760
    %v635 = vsub.f32 %v421, %v634
    %v636 = vand.u32 %v635, 4294901760
    %v637 = vsub.f32 %v635, %v636
    %v638 = vand.u32 %v637, 4294901760
    %639 = vmatpush1.msra.mxu0 %v638
    %640 = vmatprep.subr.mxu0 0.0
    %641 = vmatpush2.msra.mxu0 0.0
    %642 = vmatprep.subr.mxu0 0.0
    %643 = vmatpush2.msra.mxu0 0.0
    %644 = vmatprep.subr.mxu0 0.0
    %645 = vmatpush2.msra.mxu0 0.0
    %646 = vmatprep.subr.mxu0 0.0
    %647 = vmatpush2.msra.mxu0 0.0
    %648 = vmatprep.subr.mxu0 0.0
    %649 = vmatpush2.msra.mxu0 0.0
    %650 = vmatprep.subr.mxu0 0.0
    %651 = vmatpush2.msra.mxu0 0.0
    %652 = vmatprep.subr.mxu0 0.0
    %653 = vmatpush2.msra.mxu0 0.0
    %654 = vmatprep.subr.mxu0 0.0
    %655 = vmatpush2.msra.mxu0 0.0
    %656 = vmatprep.subr.mxu0 0.0
    %657 = vmatpush2.msra.mxu0 0.0
    %658 = vmatprep.subr.mxu0 0.0
    %659 = vmatpush2.msra.mxu0 0.0
    %660 = vmatprep.subr.mxu0 0.0
    %661 = vmatpush2.msra.mxu0 0.0
    %662 = vmatprep.subr.mxu0 0.0
    %663 = vmatpush2.msra.mxu0 0.0
    %664 = vmatprep.subr.mxu0 0.0
    %665 = vmatpush2.msra.mxu0 0.0
    %666 = vmatprep.subr.mxu0 0.0
    %667 = vmatpush2.msra.mxu0 0.0
    %668 = vmatprep.subr.mxu0 0.0
    %669 = vmatpush2.msra.mxu0 0.0
    %670 = vmatprep.subr.mxu0 0.0
    %671 = vmatpush2.msra.mxu0 0.0
    %672 = vmatprep.mubr.f32.mxu0 0.0
    %v673 = vand.u32 %v454, 4294901760
    %674 = vmatmul.mubr.f32.gmra.mxu0 %v673
    %v675 = vpop.f32.mrf.mxu0
    %v676 = vadd.f32 %v554, %v675
    %v677 = vpop.f32.mrf.mxu0
    %v678 = vadd.f32 %v556, %v677
    %679 = vdwg.mxu0
    %680 = vmatprep.subr.mxu0 0.0
    %681 = vmatpush1.msra.mxu0 0.0
    %682 = vmatprep.subr.mxu0 0.0
    %683 = vmatpush1.msra.mxu0 0.0
    %684 = vmatprep.subr.mxu0 0.0
    %685 = vmatpush1.msra.mxu0 0.0
    %686 = vmatprep.subr.mxu0 0.0
    %687 = vmatpush1.msra.mxu0 0.0
    %688 = vmatprep.subr.mxu0 0.0
    %689 = vmatpush1.msra.mxu0 0.0
    %690 = vmatprep.subr.mxu0 0.0
    %691 = vmatpush1.msra.mxu0 0.0
    %692 = vmatprep.subr.mxu0 0.0
    %693 = vmatpush1.msra.mxu0 0.0
    %694 = vmatprep.subr.mxu0 0.0
    %695 = vmatpush1.msra.mxu0 0.0
    %696 = vmatprep.subr.mxu0 0.0
    %697 = vmatpush1.msra.mxu0 0.0
    %698 = vmatprep.subr.mxu0 0.0
    %699 = vmatpush1.msra.mxu0 0.0
    %700 = vmatprep.subr.mxu0 0.0
    %701 = vmatpush1.msra.mxu0 0.0
    %v702 = vand.u32 %v461, 4294901760
    %v703 = vsub.f32 %v461, %v702
    %704 = vmatprep.subr.mxu0 %v703
    %v705 = vand.u32 %v458, 4294901760
    %v706 = vsub.f32 %v458, %v705
    %707 = vmatpush1.msra.mxu0 %v706
    %v708 = vand.u32 %v437, 4294901760
    %v709 = vsub.f32 %v437, %v708
    %710 = vmatprep.subr.mxu0 %v709
    %v711 = vand.u32 %v436, 4294901760
    %v712 = vsub.f32 %v436, %v711
    %713 = vmatpush1.msra.mxu0 %v712
    %v714 = vand.u32 %v432, 4294901760
    %v715 = vsub.f32 %v432, %v714
    %716 = vmatprep.subr.mxu0 %v715
    %v717 = vand.u32 %v431, 4294901760
    %v718 = vsub.f32 %v431, %v717
    %719 = vmatpush1.msra.mxu0 %v718
    %v720 = vand.u32 %v427, 4294901760
    %v721 = vsub.f32 %v427, %v720
    %722 = vmatprep.subr.mxu0 %v721
    %v723 = vand.u32 %v426, 4294901760
    %v724 = vsub.f32 %v426, %v723
    %725 = vmatpush1.msra.mxu0 %v724
    %v726 = vand.u32 %v422, 4294901760
    %v727 = vsub.f32 %v422, %v726
    %728 = vmatprep.subr.mxu0 %v727
    %v729 = vand.u32 %v421, 4294901760
    %v730 = vsub.f32 %v421, %v729
    %731 = vmatpush1.msra.mxu0 %v730
    %732 = vmatprep.subr.mxu0 0.0
    %733 = vmatpush2.msra.mxu0 0.0
    %734 = vmatprep.subr.mxu0 0.0
    %735 = vmatpush2.msra.mxu0 0.0
    %736 = vmatprep.subr.mxu0 0.0
    %737 = vmatpush2.msra.mxu0 0.0
    %738 = vmatprep.subr.mxu0 0.0
    %739 = vmatpush2.msra.mxu0 0.0
    %740 = vmatprep.subr.mxu0 0.0
    %741 = vmatpush2.msra.mxu0 0.0
    %742 = vmatprep.subr.mxu0 0.0
    %743 = vmatpush2.msra.mxu0 0.0
    %744 = vmatprep.subr.mxu0 0.0
    %745 = vmatpush2.msra.mxu0 0.0
    %746 = vmatprep.subr.mxu0 0.0
    %747 = vmatpush2.msra.mxu0 0.0
    %748 = vmatprep.subr.mxu0 0.0
    %749 = vmatpush2.msra.mxu0 0.0
    %750 = vmatprep.subr.mxu0 0.0
    %751 = vmatpush2.msra.mxu0 0.0
    %752 = vmatprep.subr.mxu0 0.0
    %753 = vmatpush2.msra.mxu0 0.0
    %754 = vmatprep.subr.mxu0 0.0
    %755 = vmatpush2.msra.mxu0 0.0
    %756 = vmatprep.subr.mxu0 0.0
    %757 = vmatpush2.msra.mxu0 0.0
    %758 = vmatprep.subr.mxu0 0.0
    %759 = vmatpush2.msra.mxu0 0.0
    %760 = vmatprep.subr.mxu0 0.0
    %761 = vmatpush2.msra.mxu0 0.0
    %762 = vmatprep.subr.mxu0 0.0
    %763 = vmatpush2.msra.mxu0 0.0
    %764 = vmatprep.mubr.f32.mxu0 0.0
    %v765 = vand.u32 %v454, 4294901760
    %v766 = vsub.f32 %v454, %v765
    %767 = vmatmul.mubr.f32.gmra.mxu0 %v766
    %v768 = vpop.f32.mrf.mxu0
    %v769 = vadd.f32 %v676, %v768
    %v770 = vpop.f32.mrf.mxu0
    %v771 = vadd.f32 %v678, %v770
    %772 = vdwg.mxu0
    %773 = vmatprep.subr.mxu0 0.0
    %774 = vmatpush1.msra.mxu0 0.0
    %775 = vmatprep.subr.mxu0 0.0
    %776 = vmatpush1.msra.mxu0 0.0
    %777 = vmatprep.subr.mxu0 0.0
    %778 = vmatpush1.msra.mxu0 0.0
    %779 = vmatprep.subr.mxu0 0.0
    %780 = vmatpush1.msra.mxu0 0.0
    %781 = vmatprep.subr.mxu0 0.0
    %782 = vmatpush1.msra.mxu0 0.0
    %783 = vmatprep.subr.mxu0 0.0
    %784 = vmatpush1.msra.mxu0 0.0
    %785 = vmatprep.subr.mxu0 0.0
    %786 = vmatpush1.msra.mxu0 0.0
    %787 = vmatprep.subr.mxu0 0.0
    %788 = vmatpush1.msra.mxu0 0.0
    %789 = vmatprep.subr.mxu0 0.0
    %790 = vmatpush1.msra.mxu0 0.0
    %791 = vmatprep.subr.mxu0 0.0
    %792 = vmatpush1.msra.mxu0 0.0
    %793 = vmatprep.subr.mxu0 0.0
    %794 = vmatpush1.msra.mxu0 0.0
    %v795 = vand.u32 %v461, 4294901760
    %796 = vmatprep.subr.mxu0 %v795
    %v797 = vand.u32 %v458, 4294901760
    %798 = vmatpush1.msra.mxu0 %v797
    %v799 = vand.u32 %v437, 4294901760
    %800 = vmatprep.subr.mxu0 %v799
    %v801 = vand.u32 %v436, 4294901760
    %802 = vmatpush1.msra.mxu0 %v801
    %v803 = vand.u32 %v432, 4294901760
    %804 = vmatprep.subr.mxu0 %v803
    %v805 = vand.u32 %v431, 4294901760
    %806 = vmatpush1.msra.mxu0 %v805
    %v807 = vand.u32 %v427, 4294901760
    %808 = vmatprep.subr.mxu0 %v807
    %v809 = vand.u32 %v426, 4294901760
    %810 = vmatpush1.msra.mxu0 %v809
    %v811 = vand.u32 %v422, 4294901760
    %812 = vmatprep.subr.mxu0 %v811
    %v813 = vand.u32 %v421, 4294901760
    %814 = vmatpush1.msra.mxu0 %v813
    %815 = vmatprep.subr.mxu0 0.0
    %816 = vmatpush2.msra.mxu0 0.0
    %817 = vmatprep.subr.mxu0 0.0
    %818 = vmatpush2.msra.mxu0 0.0
    %819 = vmatprep.subr.mxu0 0.0
    %820 = vmatpush2.msra.mxu0 0.0
    %821 = vmatprep.subr.mxu0 0.0
    %822 = vmatpush2.msra.mxu0 0.0
    %823 = vmatprep.subr.mxu0 0.0
    %824 = vmatpush2.msra.mxu0 0.0
    %825 = vmatprep.subr.mxu0 0.0
    %826 = vmatpush2.msra.mxu0 0.0
    %827 = vmatprep.subr.mxu0 0.0
    %828 = vmatpush2.msra.mxu0 0.0
    %829 = vmatprep.subr.mxu0 0.0
    %830 = vmatpush2.msra.mxu0 0.0
    %831 = vmatprep.subr.mxu0 0.0
    %832 = vmatpush2.msra.mxu0 0.0
    %833 = vmatprep.subr.mxu0 0.0
    %834 = vmatpush2.msra.mxu0 0.0
    %835 = vmatprep.subr.mxu0 0.0
    %836 = vmatpush2.msra.mxu0 0.0
    %837 = vmatprep.subr.mxu0 0.0
    %838 = vmatpush2.msra.mxu0 0.0
    %839 = vmatprep.subr.mxu0 0.0
    %840 = vmatpush2.msra.mxu0 0.0
    %841 = vmatprep.subr.mxu0 0.0
    %842 = vmatpush2.msra.mxu0 0.0
    %843 = vmatprep.subr.mxu0 0.0
    %844 = vmatpush2.msra.mxu0 0.0
    %845 = vmatprep.subr.mxu0 0.0
    %846 = vmatpush2.msra.mxu0 0.0
    %847 = vmatprep.mubr.f32.mxu0 0.0
    %v848 = vand.u32 %v454, 4294901760
    %v849 = vsub.f32 %v454, %v848
    %v850 = vand.u32 %v849, 4294901760
    %851 = vmatmul.mubr.f32.gmra.mxu0 %v850
    %v852 = vpop.f32.mrf.mxu0
    %v853 = vadd.f32 %v769, %v852
    %v854 = vpop.f32.mrf.mxu0
    %v855 = vadd.f32 %v771, %v854
    %856 = vdwg.mxu0
    %857 = vmatprep.subr.mxu0 0.0
    %858 = vmatpush1.msra.mxu0 0.0
    %859 = vmatprep.subr.mxu0 0.0
    %860 = vmatpush1.msra.mxu0 0.0
    %861 = vmatprep.subr.mxu0 0.0
    %862 = vmatpush1.msra.mxu0 0.0
    %863 = vmatprep.subr.mxu0 0.0
    %864 = vmatpush1.msra.mxu0 0.0
    %865 = vmatprep.subr.mxu0 0.0
    %866 = vmatpush1.msra.mxu0 0.0
    %867 = vmatprep.subr.mxu0 0.0
    %868 = vmatpush1.msra.mxu0 0.0
    %869 = vmatprep.subr.mxu0 0.0
    %870 = vmatpush1.msra.mxu0 0.0
    %871 = vmatprep.subr.mxu0 0.0
    %872 = vmatpush1.msra.mxu0 0.0
    %873 = vmatprep.subr.mxu0 0.0
    %874 = vmatpush1.msra.mxu0 0.0
    %875 = vmatprep.subr.mxu0 0.0
    %876 = vmatpush1.msra.mxu0 0.0
    %877 = vmatprep.subr.mxu0 0.0
    %878 = vmatpush1.msra.mxu0 0.0
    %v879 = vand.u32 %v461, 4294901760
    %v880 = vsub.f32 %v461, %v879
    %v881 = vand.u32 %v880, 4294901760
    %882 = vmatprep.subr.mxu0 %v881
    %v883 = vand.u32 %v458, 4294901760
    %v884 = vsub.f32 %v458, %v883
    %v885 = vand.u32 %v884, 4294901760
    %886 = vmatpush1.msra.mxu0 %v885
    %v887 = vand.u32 %v437, 4294901760
    %v888 = vsub.f32 %v437, %v887
    %v889 = vand.u32 %v888, 4294901760
    %890 = vmatprep.subr.mxu0 %v889
    %v891 = vand.u32 %v436, 4294901760
    %v892 = vsub.f32 %v436, %v891
    %v893 = vand.u32 %v892, 4294901760
    %894 = vmatpush1.msra.mxu0 %v893
    %v895 = vand.u32 %v432, 4294901760
    %v896 = vsub.f32 %v432, %v895
    %v897 = vand.u32 %v896, 4294901760
    %898 = vmatprep.subr.mxu0 %v897
    %v899 = vand.u32 %v431, 4294901760
    %v900 = vsub.f32 %v431, %v899
    %v901 = vand.u32 %v900, 4294901760
    %902 = vmatpush1.msra.mxu0 %v901
    %v903 = vand.u32 %v427, 4294901760
    %v904 = vsub.f32 %v427, %v903
    %v905 = vand.u32 %v904, 4294901760
    %906 = vmatprep.subr.mxu0 %v905
    %v907 = vand.u32 %v426, 4294901760
    %v908 = vsub.f32 %v426, %v907
    %v909 = vand.u32 %v908, 4294901760
    %910 = vmatpush1.msra.mxu0 %v909
    %v911 = vand.u32 %v422, 4294901760
    %v912 = vsub.f32 %v422, %v911
    %v913 = vand.u32 %v912, 4294901760
    %914 = vmatprep.subr.mxu0 %v913
    %v915 = vand.u32 %v421, 4294901760
    %v916 = vsub.f32 %v421, %v915
    %v917 = vand.u32 %v916, 4294901760
    %918 = vmatpush1.msra.mxu0 %v917
    %919 = vmatprep.subr.mxu0 0.0
    %920 = vmatpush2.msra.mxu0 0.0
    %921 = vmatprep.subr.mxu0 0.0
    %922 = vmatpush2.msra.mxu0 0.0
    %923 = vmatprep.subr.mxu0 0.0
    %924 = vmatpush2.msra.mxu0 0.0
    %925 = vmatprep.subr.mxu0 0.0
    %926 = vmatpush2.msra.mxu0 0.0
    %927 = vmatprep.subr.mxu0 0.0
    %928 = vmatpush2.msra.mxu0 0.0
    %929 = vmatprep.subr.mxu0 0.0
    %930 = vmatpush2.msra.mxu0 0.0
    %931 = vmatprep.subr.mxu0 0.0
    %932 = vmatpush2.msra.mxu0 0.0
    %933 = vmatprep.subr.mxu0 0.0
    %934 = vmatpush2.msra.mxu0 0.0
    %935 = vmatprep.subr.mxu0 0.0
    %936 = vmatpush2.msra.mxu0 0.0
    %937 = vmatprep.subr.mxu0 0.0
    %938 = vmatpush2.msra.mxu0 0.0
    %939 = vmatprep.subr.mxu0 0.0
    %940 = vmatpush2.msra.mxu0 0.0
    %941 = vmatprep.subr.mxu0 0.0
    %942 = vmatpush2.msra.mxu0 0.0
    %943 = vmatprep.subr.mxu0 0.0
    %944 = vmatpush2.msra.mxu0 0.0
    %945 = vmatprep.subr.mxu0 0.0
    %946 = vmatpush2.msra.mxu0 0.0
    %947 = vmatprep.subr.mxu0 0.0
    %948 = vmatpush2.msra.mxu0 0.0
    %949 = vmatprep.subr.mxu0 0.0
    %950 = vmatpush2.msra.mxu0 0.0
    %951 = vmatprep.mubr.f32.mxu0 0.0
    %v952 = vand.u32 %v454, 4294901760
    %953 = vmatmul.mubr.f32.gmra.mxu0 %v952
    %v954 = vpop.f32.mrf.mxu0
    %v955 = vadd.f32 %v853, %v954
    %v956 = vpop.f32.mrf.mxu0
    %v957 = vadd.f32 %v855, %v956
    %958 = vdwg.mxu0
    %959 = vmatprep.subr.mxu0 0.0
    %960 = vmatpush1.msra.mxu0 0.0
    %961 = vmatprep.subr.mxu0 0.0
    %962 = vmatpush1.msra.mxu0 0.0
    %963 = vmatprep.subr.mxu0 0.0
    %964 = vmatpush1.msra.mxu0 0.0
    %965 = vmatprep.subr.mxu0 0.0
    %966 = vmatpush1.msra.mxu0 0.0
    %967 = vmatprep.subr.mxu0 0.0
    %968 = vmatpush1.msra.mxu0 0.0
    %969 = vmatprep.subr.mxu0 0.0
    %970 = vmatpush1.msra.mxu0 0.0
    %971 = vmatprep.subr.mxu0 0.0
    %972 = vmatpush1.msra.mxu0 0.0
    %973 = vmatprep.subr.mxu0 0.0
    %974 = vmatpush1.msra.mxu0 0.0
    %975 = vmatprep.subr.mxu0 0.0
    %976 = vmatpush1.msra.mxu0 0.0
    %977 = vmatprep.subr.mxu0 0.0
    %978 = vmatpush1.msra.mxu0 0.0
    %979 = vmatprep.subr.mxu0 0.0
    %980 = vmatpush1.msra.mxu0 0.0
    %v981 = vand.u32 %v461, 4294901760
    %982 = vmatprep.subr.mxu0 %v981
    %v983 = vand.u32 %v458, 4294901760
    %984 = vmatpush1.msra.mxu0 %v983
    %v985 = vand.u32 %v437, 4294901760
    %986 = vmatprep.subr.mxu0 %v985
    %v987 = vand.u32 %v436, 4294901760
    %988 = vmatpush1.msra.mxu0 %v987
    %v989 = vand.u32 %v432, 4294901760
    %990 = vmatprep.subr.mxu0 %v989
    %v991 = vand.u32 %v431, 4294901760
    %992 = vmatpush1.msra.mxu0 %v991
    %v993 = vand.u32 %v427, 4294901760
    %994 = vmatprep.subr.mxu0 %v993
    %v995 = vand.u32 %v426, 4294901760
    %996 = vmatpush1.msra.mxu0 %v995
    %v997 = vand.u32 %v422, 4294901760
    %998 = vmatprep.subr.mxu0 %v997
    %v999 = vand.u32 %v421, 4294901760
    %1000 = vmatpush1.msra.mxu0 %v999
    %1001 = vmatprep.subr.mxu0 0.0
    %1002 = vmatpush2.msra.mxu0 0.0
    %1003 = vmatprep.subr.mxu0 0.0
    %1004 = vmatpush2.msra.mxu0 0.0
    %1005 = vmatprep.subr.mxu0 0.0
    %1006 = vmatpush2.msra.mxu0 0.0
    %1007 = vmatprep.subr.mxu0 0.0
    %1008 = vmatpush2.msra.mxu0 0.0
    %1009 = vmatprep.subr.mxu0 0.0
    %1010 = vmatpush2.msra.mxu0 0.0
    %1011 = vmatprep.subr.mxu0 0.0
    %1012 = vmatpush2.msra.mxu0 0.0
    %1013 = vmatprep.subr.mxu0 0.0
    %1014 = vmatpush2.msra.mxu0 0.0
    %1015 = vmatprep.subr.mxu0 0.0
    %1016 = vmatpush2.msra.mxu0 0.0
    %1017 = vmatprep.subr.mxu0 0.0
    %1018 = vmatpush2.msra.mxu0 0.0
    %1019 = vmatprep.subr.mxu0 0.0
    %1020 = vmatpush2.msra.mxu0 0.0
    %1021 = vmatprep.subr.mxu0 0.0
    %1022 = vmatpush2.msra.mxu0 0.0
    %1023 = vmatprep.subr.mxu0 0.0
    %1024 = vmatpush2.msra.mxu0 0.0
    %1025 = vmatprep.subr.mxu0 0.0
    %1026 = vmatpush2.msra.mxu0 0.0
    %1027 = vmatprep.subr.mxu0 0.0
    %1028 = vmatpush2.msra.mxu0 0.0
    %1029 = vmatprep.subr.mxu0 0.0
    %1030 = vmatpush2.msra.mxu0 0.0
    %1031 = vmatprep.subr.mxu0 0.0
    %1032 = vmatpush2.msra.mxu0 0.0
    %1033 = vmatprep.mubr.f32.mxu0 0.0
    %v1034 = vand.u32 %v454, 4294901760
    %1035 = vmatmul.mubr.f32.gmra.mxu0 %v1034
    %v1036 = vpop.f32.mrf.mxu0
    %v1037 = vadd.f32 %v955, %v1036
    %v1038 = vpop.f32.mrf.mxu0
    %v1039 = vadd.f32 %v957, %v1038
    %1040 = vdwg.mxu0
    %1041 = vmatprep.subr.mxu0 0.0
    %1042 = vmatpush1.msra.mxu0 0.0
    %1043 = vmatprep.subr.mxu0 0.0
    %1044 = vmatpush1.msra.mxu0 0.0
    %1045 = vmatprep.subr.mxu0 0.0
    %1046 = vmatpush1.msra.mxu0 0.0
    %1047 = vmatprep.subr.mxu0 0.0
    %1048 = vmatpush1.msra.mxu0 0.0
    %1049 = vmatprep.subr.mxu0 0.0
    %1050 = vmatpush1.msra.mxu0 0.0
    %1051 = vmatprep.subr.mxu0 0.0
    %1052 = vmatpush1.msra.mxu0 0.0
    %1053 = vmatprep.subr.mxu0 0.0
    %1054 = vmatpush1.msra.mxu0 0.0
    %1055 = vmatprep.subr.mxu0 0.0
    %1056 = vmatpush1.msra.mxu0 0.0
    %1057 = vmatprep.subr.mxu0 0.0
    %1058 = vmatpush1.msra.mxu0 0.0
    %1059 = vmatprep.subr.mxu0 0.0
    %1060 = vmatpush1.msra.mxu0 0.0
    %1061 = vmatprep.subr.mxu0 0.0
    %1062 = vmatpush1.msra.mxu0 0.0
    %v1063 = vand.u32 %v467, 4294901760
    %1064 = vmatprep.subr.mxu0 %v1063
    %v1065 = vand.u32 %v464, 4294901760
    %1066 = vmatpush1.msra.mxu0 %v1065
    %v1067 = vand.u32 %v439, 4294901760
    %1068 = vmatprep.subr.mxu0 %v1067
    %v1069 = vand.u32 %v438, 4294901760
    %1070 = vmatpush1.msra.mxu0 %v1069
    %v1071 = vand.u32 %v434, 4294901760
    %1072 = vmatprep.subr.mxu0 %v1071
    %v1073 = vand.u32 %v433, 4294901760
    %1074 = vmatpush1.msra.mxu0 %v1073
    %v1075 = vand.u32 %v429, 4294901760
    %1076 = vmatprep.subr.mxu0 %v1075
    %v1077 = vand.u32 %v428, 4294901760
    %1078 = vmatpush1.msra.mxu0 %v1077
    %v1079 = vand.u32 %v424, 4294901760
    %1080 = vmatprep.subr.mxu0 %v1079
    %v1081 = vand.u32 %v423, 4294901760
    %1082 = vmatpush1.msra.mxu0 %v1081
    %1083 = vmatprep.subr.mxu0 0.0
    %1084 = vmatpush2.msra.mxu0 0.0
    %1085 = vmatprep.subr.mxu0 0.0
    %1086 = vmatpush2.msra.mxu0 0.0
    %1087 = vmatprep.subr.mxu0 0.0
    %1088 = vmatpush2.msra.mxu0 0.0
    %1089 = vmatprep.subr.mxu0 0.0
    %1090 = vmatpush2.msra.mxu0 0.0
    %1091 = vmatprep.subr.mxu0 0.0
    %1092 = vmatpush2.msra.mxu0 0.0
    %1093 = vmatprep.subr.mxu0 0.0
    %1094 = vmatpush2.msra.mxu0 0.0
    %1095 = vmatprep.subr.mxu0 0.0
    %1096 = vmatpush2.msra.mxu0 0.0
    %1097 = vmatprep.subr.mxu0 0.0
    %1098 = vmatpush2.msra.mxu0 0.0
    %1099 = vmatprep.subr.mxu0 0.0
    %1100 = vmatpush2.msra.mxu0 0.0
    %1101 = vmatprep.subr.mxu0 0.0
    %1102 = vmatpush2.msra.mxu0 0.0
    %1103 = vmatprep.subr.mxu0 0.0
    %1104 = vmatpush2.msra.mxu0 0.0
    %1105 = vmatprep.subr.mxu0 0.0
    %1106 = vmatpush2.msra.mxu0 0.0
    %1107 = vmatprep.subr.mxu0 0.0
    %1108 = vmatpush2.msra.mxu0 0.0
    %1109 = vmatprep.subr.mxu0 0.0
    %1110 = vmatpush2.msra.mxu0 0.0
    %1111 = vmatprep.subr.mxu0 0.0
    %1112 = vmatpush2.msra.mxu0 0.0
    %1113 = vmatprep.subr.mxu0 0.0
    %1114 = vmatpush2.msra.mxu0 0.0
    %1115 = vmatprep.mubr.f32.mxu0 0.0
    %v1116 = vand.u32 %v454, 4294901760
    %v1117 = vsub.f32 %v454, %v1116
    %v1118 = vand.u32 %v1117, 4294901760
    %v1119 = vsub.f32 %v1117, %v1118
    %v1120 = vand.u32 %v1119, 4294901760
    %1121 = vmatmul.mubr.f32.gmra.mxu0 %v1120
    %v1122 = vpop.f32.mrf.mxu0
    %v1123 = vadd.f32 %v450, %v1122
    %v1124 = vpop.f32.mrf.mxu0
    %v1125 = vadd.f32 %v450, %v1124
    %1126 = vdwg.mxu0
    %1127 = vmatprep.subr.mxu0 0.0
    %1128 = vmatpush1.msra.mxu0 0.0
    %1129 = vmatprep.subr.mxu0 0.0
    %1130 = vmatpush1.msra.mxu0 0.0
    %1131 = vmatprep.subr.mxu0 0.0
    %1132 = vmatpush1.msra.mxu0 0.0
    %1133 = vmatprep.subr.mxu0 0.0
    %1134 = vmatpush1.msra.mxu0 0.0
    %1135 = vmatprep.subr.mxu0 0.0
    %1136 = vmatpush1.msra.mxu0 0.0
    %1137 = vmatprep.subr.mxu0 0.0
    %1138 = vmatpush1.msra.mxu0 0.0
    %1139 = vmatprep.subr.mxu0 0.0
    %1140 = vmatpush1.msra.mxu0 0.0
    %1141 = vmatprep.subr.mxu0 0.0
    %1142 = vmatpush1.msra.mxu0 0.0
    %1143 = vmatprep.subr.mxu0 0.0
    %1144 = vmatpush1.msra.mxu0 0.0
    %1145 = vmatprep.subr.mxu0 0.0
    %1146 = vmatpush1.msra.mxu0 0.0
    %1147 = vmatprep.subr.mxu0 0.0
    %1148 = vmatpush1.msra.mxu0 0.0
    %v1149 = vand.u32 %v467, 4294901760
    %v1150 = vsub.f32 %v467, %v1149
    %v1151 = vand.u32 %v1150, 4294901760
    %v1152 = vsub.f32 %v1150, %v1151
    %v1153 = vand.u32 %v1152, 4294901760
    %1154 = vmatprep.subr.mxu0 %v1153
    %v1155 = vand.u32 %v464, 4294901760
    %v1156 = vsub.f32 %v464, %v1155
    %v1157 = vand.u32 %v1156, 4294901760
    %v1158 = vsub.f32 %v1156, %v1157
    %v1159 = vand.u32 %v1158, 4294901760
    %1160 = vmatpush1.msra.mxu0 %v1159
    %v1161 = vand.u32 %v439, 4294901760
    %v1162 = vsub.f32 %v439, %v1161
    %v1163 = vand.u32 %v1162, 4294901760
    %v1164 = vsub.f32 %v1162, %v1163
    %v1165 = vand.u32 %v1164, 4294901760
    %1166 = vmatprep.subr.mxu0 %v1165
    %v1167 = vand.u32 %v438, 4294901760
    %v1168 = vsub.f32 %v438, %v1167
    %v1169 = vand.u32 %v1168, 4294901760
    %v1170 = vsub.f32 %v1168, %v1169
    %v1171 = vand.u32 %v1170, 4294901760
    %1172 = vmatpush1.msra.mxu0 %v1171
    %v1173 = vand.u32 %v434, 4294901760
    %v1174 = vsub.f32 %v434, %v1173
    %v1175 = vand.u32 %v1174, 4294901760
    %v1176 = vsub.f32 %v1174, %v1175
    %v1177 = vand.u32 %v1176, 4294901760
    %1178 = vmatprep.subr.mxu0 %v1177
    %v1179 = vand.u32 %v433, 4294901760
    %v1180 = vsub.f32 %v433, %v1179
    %v1181 = vand.u32 %v1180, 4294901760
    %v1182 = vsub.f32 %v1180, %v1181
    %v1183 = vand.u32 %v1182, 4294901760
    %1184 = vmatpush1.msra.mxu0 %v1183
    %v1185 = vand.u32 %v429, 4294901760
    %v1186 = vsub.f32 %v429, %v1185
    %v1187 = vand.u32 %v1186, 4294901760
    %v1188 = vsub.f32 %v1186, %v1187
    %v1189 = vand.u32 %v1188, 4294901760
    %1190 = vmatprep.subr.mxu0 %v1189
    %v1191 = vand.u32 %v428, 4294901760
    %v1192 = vsub.f32 %v428, %v1191
    %v1193 = vand.u32 %v1192, 4294901760
    %v1194 = vsub.f32 %v1192, %v1193
    %v1195 = vand.u32 %v1194, 4294901760
    %1196 = vmatpush1.msra.mxu0 %v1195
    %v1197 = vand.u32 %v424, 4294901760
    %v1198 = vsub.f32 %v424, %v1197
    %v1199 = vand.u32 %v1198, 4294901760
    %v1200 = vsub.f32 %v1198, %v1199
    %v1201 = vand.u32 %v1200, 4294901760
    %1202 = vmatprep.subr.mxu0 %v1201
    %v1203 = vand.u32 %v423, 4294901760
    %v1204 = vsub.f32 %v423, %v1203
    %v1205 = vand.u32 %v1204, 4294901760
    %v1206 = vsub.f32 %v1204, %v1205
    %v1207 = vand.u32 %v1206, 4294901760
    %1208 = vmatpush1.msra.mxu0 %v1207
    %1209 = vmatprep.subr.mxu0 0.0
    %1210 = vmatpush2.msra.mxu0 0.0
    %1211 = vmatprep.subr.mxu0 0.0
    %1212 = vmatpush2.msra.mxu0 0.0
    %1213 = vmatprep.subr.mxu0 0.0
    %1214 = vmatpush2.msra.mxu0 0.0
    %1215 = vmatprep.subr.mxu0 0.0
    %1216 = vmatpush2.msra.mxu0 0.0
    %1217 = vmatprep.subr.mxu0 0.0
    %1218 = vmatpush2.msra.mxu0 0.0
    %1219 = vmatprep.subr.mxu0 0.0
    %1220 = vmatpush2.msra.mxu0 0.0
    %1221 = vmatprep.subr.mxu0 0.0
    %1222 = vmatpush2.msra.mxu0 0.0
    %1223 = vmatprep.subr.mxu0 0.0
    %1224 = vmatpush2.msra.mxu0 0.0
    %1225 = vmatprep.subr.mxu0 0.0
    %1226 = vmatpush2.msra.mxu0 0.0
    %1227 = vmatprep.subr.mxu0 0.0
    %1228 = vmatpush2.msra.mxu0 0.0
    %1229 = vmatprep.subr.mxu0 0.0
    %1230 = vmatpush2.msra.mxu0 0.0
    %1231 = vmatprep.subr.mxu0 0.0
    %1232 = vmatpush2.msra.mxu0 0.0
    %1233 = vmatprep.subr.mxu0 0.0
    %1234 = vmatpush2.msra.mxu0 0.0
    %1235 = vmatprep.subr.mxu0 0.0
    %1236 = vmatpush2.msra.mxu0 0.0
    %1237 = vmatprep.subr.mxu0 0.0
    %1238 = vmatpush2.msra.mxu0 0.0
    %1239 = vmatprep.subr.mxu0 0.0
    %1240 = vmatpush2.msra.mxu0 0.0
    %1241 = vmatprep.mubr.f32.mxu0 0.0
    %v1242 = vand.u32 %v454, 4294901760
    %1243 = vmatmul.mubr.f32.gmra.mxu0 %v1242
    %v1244 = vpop.f32.mrf.mxu0
    %v1245 = vadd.f32 %v1123, %v1244
    %v1246 = vpop.f32.mrf.mxu0
    %v1247 = vadd.f32 %v1125, %v1246
    %1248 = vdwg.mxu0
    %1249 = vmatprep.subr.mxu0 0.0
    %1250 = vmatpush1.msra.mxu0 0.0
    %1251 = vmatprep.subr.mxu0 0.0
    %1252 = vmatpush1.msra.mxu0 0.0
    %1253 = vmatprep.subr.mxu0 0.0
    %1254 = vmatpush1.msra.mxu0 0.0
    %1255 = vmatprep.subr.mxu0 0.0
    %1256 = vmatpush1.msra.mxu0 0.0
    %1257 = vmatprep.subr.mxu0 0.0
    %1258 = vmatpush1.msra.mxu0 0.0
    %1259 = vmatprep.subr.mxu0 0.0
    %1260 = vmatpush1.msra.mxu0 0.0
    %1261 = vmatprep.subr.mxu0 0.0
    %1262 = vmatpush1.msra.mxu0 0.0
    %1263 = vmatprep.subr.mxu0 0.0
    %1264 = vmatpush1.msra.mxu0 0.0
    %1265 = vmatprep.subr.mxu0 0.0
    %1266 = vmatpush1.msra.mxu0 0.0
    %1267 = vmatprep.subr.mxu0 0.0
    %1268 = vmatpush1.msra.mxu0 0.0
    %1269 = vmatprep.subr.mxu0 0.0
    %1270 = vmatpush1.msra.mxu0 0.0
    %v1271 = vand.u32 %v467, 4294901760
    %v1272 = vsub.f32 %v467, %v1271
    %1273 = vmatprep.subr.mxu0 %v1272
    %v1274 = vand.u32 %v464, 4294901760
    %v1275 = vsub.f32 %v464, %v1274
    %1276 = vmatpush1.msra.mxu0 %v1275
    %v1277 = vand.u32 %v439, 4294901760
    %v1278 = vsub.f32 %v439, %v1277
    %1279 = vmatprep.subr.mxu0 %v1278
    %v1280 = vand.u32 %v438, 4294901760
    %v1281 = vsub.f32 %v438, %v1280
    %1282 = vmatpush1.msra.mxu0 %v1281
    %v1283 = vand.u32 %v434, 4294901760
    %v1284 = vsub.f32 %v434, %v1283
    %1285 = vmatprep.subr.mxu0 %v1284
    %v1286 = vand.u32 %v433, 4294901760
    %v1287 = vsub.f32 %v433, %v1286
    %1288 = vmatpush1.msra.mxu0 %v1287
    %v1289 = vand.u32 %v429, 4294901760
    %v1290 = vsub.f32 %v429, %v1289
    %1291 = vmatprep.subr.mxu0 %v1290
    %v1292 = vand.u32 %v428, 4294901760
    %v1293 = vsub.f32 %v428, %v1292
    %1294 = vmatpush1.msra.mxu0 %v1293
    %v1295 = vand.u32 %v424, 4294901760
    %v1296 = vsub.f32 %v424, %v1295
    %1297 = vmatprep.subr.mxu0 %v1296
    %v1298 = vand.u32 %v423, 4294901760
    %v1299 = vsub.f32 %v423, %v1298
    %1300 = vmatpush1.msra.mxu0 %v1299
    %1301 = vmatprep.subr.mxu0 0.0
    %1302 = vmatpush2.msra.mxu0 0.0
    %1303 = vmatprep.subr.mxu0 0.0
    %1304 = vmatpush2.msra.mxu0 0.0
    %1305 = vmatprep.subr.mxu0 0.0
    %1306 = vmatpush2.msra.mxu0 0.0
    %1307 = vmatprep.subr.mxu0 0.0
    %1308 = vmatpush2.msra.mxu0 0.0
    %1309 = vmatprep.subr.mxu0 0.0
    %1310 = vmatpush2.msra.mxu0 0.0
    %1311 = vmatprep.subr.mxu0 0.0
    %1312 = vmatpush2.msra.mxu0 0.0
    %1313 = vmatprep.subr.mxu0 0.0
    %1314 = vmatpush2.msra.mxu0 0.0
    %1315 = vmatprep.subr.mxu0 0.0
    %1316 = vmatpush2.msra.mxu0 0.0
    %1317 = vmatprep.subr.mxu0 0.0
    %1318 = vmatpush2.msra.mxu0 0.0
    %1319 = vmatprep.subr.mxu0 0.0
    %1320 = vmatpush2.msra.mxu0 0.0
    %1321 = vmatprep.subr.mxu0 0.0
    %1322 = vmatpush2.msra.mxu0 0.0
    %1323 = vmatprep.subr.mxu0 0.0
    %1324 = vmatpush2.msra.mxu0 0.0
    %1325 = vmatprep.subr.mxu0 0.0
    %1326 = vmatpush2.msra.mxu0 0.0
    %1327 = vmatprep.subr.mxu0 0.0
    %1328 = vmatpush2.msra.mxu0 0.0
    %1329 = vmatprep.subr.mxu0 0.0
    %1330 = vmatpush2.msra.mxu0 0.0
    %1331 = vmatprep.subr.mxu0 0.0
    %1332 = vmatpush2.msra.mxu0 0.0
    %1333 = vmatprep.mubr.f32.mxu0 0.0
    %v1334 = vand.u32 %v454, 4294901760
    %v1335 = vsub.f32 %v454, %v1334
    %1336 = vmatmul.mubr.f32.gmra.mxu0 %v1335
    %v1337 = vpop.f32.mrf.mxu0
    %v1338 = vadd.f32 %v1245, %v1337
    %v1339 = vpop.f32.mrf.mxu0
    %v1340 = vadd.f32 %v1247, %v1339
    %1341 = vdwg.mxu0
    %1342 = vmatprep.subr.mxu0 0.0
    %1343 = vmatpush1.msra.mxu0 0.0
    %1344 = vmatprep.subr.mxu0 0.0
    %1345 = vmatpush1.msra.mxu0 0.0
    %1346 = vmatprep.subr.mxu0 0.0
    %1347 = vmatpush1.msra.mxu0 0.0
    %1348 = vmatprep.subr.mxu0 0.0
    %1349 = vmatpush1.msra.mxu0 0.0
    %1350 = vmatprep.subr.mxu0 0.0
    %1351 = vmatpush1.msra.mxu0 0.0
    %1352 = vmatprep.subr.mxu0 0.0
    %1353 = vmatpush1.msra.mxu0 0.0
    %1354 = vmatprep.subr.mxu0 0.0
    %1355 = vmatpush1.msra.mxu0 0.0
    %1356 = vmatprep.subr.mxu0 0.0
    %1357 = vmatpush1.msra.mxu0 0.0
    %1358 = vmatprep.subr.mxu0 0.0
    %1359 = vmatpush1.msra.mxu0 0.0
    %1360 = vmatprep.subr.mxu0 0.0
    %1361 = vmatpush1.msra.mxu0 0.0
    %1362 = vmatprep.subr.mxu0 0.0
    %1363 = vmatpush1.msra.mxu0 0.0
    %v1364 = vand.u32 %v467, 4294901760
    %1365 = vmatprep.subr.mxu0 %v1364
    %v1366 = vand.u32 %v464, 4294901760
    %1367 = vmatpush1.msra.mxu0 %v1366
    %v1368 = vand.u32 %v439, 4294901760
    %1369 = vmatprep.subr.mxu0 %v1368
    %v1370 = vand.u32 %v438, 4294901760
    %1371 = vmatpush1.msra.mxu0 %v1370
    %v1372 = vand.u32 %v434, 4294901760
    %1373 = vmatprep.subr.mxu0 %v1372
    %v1374 = vand.u32 %v433, 4294901760
    %1375 = vmatpush1.msra.mxu0 %v1374
    %v1376 = vand.u32 %v429, 4294901760
    %1377 = vmatprep.subr.mxu0 %v1376
    %v1378 = vand.u32 %v428, 4294901760
    %1379 = vmatpush1.msra.mxu0 %v1378
    %v1380 = vand.u32 %v424, 4294901760
    %1381 = vmatprep.subr.mxu0 %v1380
    %v1382 = vand.u32 %v423, 4294901760
    %1383 = vmatpush1.msra.mxu0 %v1382
    %1384 = vmatprep.subr.mxu0 0.0
    %1385 = vmatpush2.msra.mxu0 0.0
    %1386 = vmatprep.subr.mxu0 0.0
    %1387 = vmatpush2.msra.mxu0 0.0
    %1388 = vmatprep.subr.mxu0 0.0
    %1389 = vmatpush2.msra.mxu0 0.0
    %1390 = vmatprep.subr.mxu0 0.0
    %1391 = vmatpush2.msra.mxu0 0.0
    %1392 = vmatprep.subr.mxu0 0.0
    %1393 = vmatpush2.msra.mxu0 0.0
    %1394 = vmatprep.subr.mxu0 0.0
    %1395 = vmatpush2.msra.mxu0 0.0
    %1396 = vmatprep.subr.mxu0 0.0
    %1397 = vmatpush2.msra.mxu0 0.0
    %1398 = vmatprep.subr.mxu0 0.0
    %1399 = vmatpush2.msra.mxu0 0.0
    %1400 = vmatprep.subr.mxu0 0.0
    %1401 = vmatpush2.msra.mxu0 0.0
    %1402 = vmatprep.subr.mxu0 0.0
    %1403 = vmatpush2.msra.mxu0 0.0
    %1404 = vmatprep.subr.mxu0 0.0
    %1405 = vmatpush2.msra.mxu0 0.0
    %1406 = vmatprep.subr.mxu0 0.0
    %1407 = vmatpush2.msra.mxu0 0.0
    %1408 = vmatprep.subr.mxu0 0.0
    %1409 = vmatpush2.msra.mxu0 0.0
    %1410 = vmatprep.subr.mxu0 0.0
    %1411 = vmatpush2.msra.mxu0 0.0
    %1412 = vmatprep.subr.mxu0 0.0
    %1413 = vmatpush2.msra.mxu0 0.0
    %1414 = vmatprep.subr.mxu0 0.0
    %1415 = vmatpush2.msra.mxu0 0.0
    %1416 = vmatprep.mubr.f32.mxu0 0.0
    %v1417 = vand.u32 %v454, 4294901760
    %v1418 = vsub.f32 %v454, %v1417
    %v1419 = vand.u32 %v1418, 4294901760
    %1420 = vmatmul.mubr.f32.gmra.mxu0 %v1419
    %v1421 = vpop.f32.mrf.mxu0
    %v1422 = vadd.f32 %v1338, %v1421
    %v1423 = vpop.f32.mrf.mxu0
    %v1424 = vadd.f32 %v1340, %v1423
    %1425 = vdwg.mxu0
    %1426 = vmatprep.subr.mxu0 0.0
    %1427 = vmatpush1.msra.mxu0 0.0
    %1428 = vmatprep.subr.mxu0 0.0
    %1429 = vmatpush1.msra.mxu0 0.0
    %1430 = vmatprep.subr.mxu0 0.0
    %1431 = vmatpush1.msra.mxu0 0.0
    %1432 = vmatprep.subr.mxu0 0.0
    %1433 = vmatpush1.msra.mxu0 0.0
    %1434 = vmatprep.subr.mxu0 0.0
    %1435 = vmatpush1.msra.mxu0 0.0
    %1436 = vmatprep.subr.mxu0 0.0
    %1437 = vmatpush1.msra.mxu0 0.0
    %1438 = vmatprep.subr.mxu0 0.0
    %1439 = vmatpush1.msra.mxu0 0.0
    %1440 = vmatprep.subr.mxu0 0.0
    %1441 = vmatpush1.msra.mxu0 0.0
    %1442 = vmatprep.subr.mxu0 0.0
    %1443 = vmatpush1.msra.mxu0 0.0
    %1444 = vmatprep.subr.mxu0 0.0
    %1445 = vmatpush1.msra.mxu0 0.0
    %1446 = vmatprep.subr.mxu0 0.0
    %1447 = vmatpush1.msra.mxu0 0.0
    %v1448 = vand.u32 %v467, 4294901760
    %v1449 = vsub.f32 %v467, %v1448
    %v1450 = vand.u32 %v1449, 4294901760
    %1451 = vmatprep.subr.mxu0 %v1450
    %v1452 = vand.u32 %v464, 4294901760
    %v1453 = vsub.f32 %v464, %v1452
    %v1454 = vand.u32 %v1453, 4294901760
    %1455 = vmatpush1.msra.mxu0 %v1454
    %v1456 = vand.u32 %v439, 4294901760
    %v1457 = vsub.f32 %v439, %v1456
    %v1458 = vand.u32 %v1457, 4294901760
    %1459 = vmatprep.subr.mxu0 %v1458
    %v1460 = vand.u32 %v438, 4294901760
    %v1461 = vsub.f32 %v438, %v1460
    %v1462 = vand.u32 %v1461, 4294901760
    %1463 = vmatpush1.msra.mxu0 %v1462
    %v1464 = vand.u32 %v434, 4294901760
    %v1465 = vsub.f32 %v434, %v1464
    %v1466 = vand.u32 %v1465, 4294901760
    %1467 = vmatprep.subr.mxu0 %v1466
    %v1468 = vand.u32 %v433, 4294901760
    %v1469 = vsub.f32 %v433, %v1468
    %v1470 = vand.u32 %v1469, 4294901760
    %1471 = vmatpush1.msra.mxu0 %v1470
    %v1472 = vand.u32 %v429, 4294901760
    %v1473 = vsub.f32 %v429, %v1472
    %v1474 = vand.u32 %v1473, 4294901760
    %1475 = vmatprep.subr.mxu0 %v1474
    %v1476 = vand.u32 %v428, 4294901760
    %v1477 = vsub.f32 %v428, %v1476
    %v1478 = vand.u32 %v1477, 4294901760
    %1479 = vmatpush1.msra.mxu0 %v1478
    %v1480 = vand.u32 %v424, 4294901760
    %v1481 = vsub.f32 %v424, %v1480
    %v1482 = vand.u32 %v1481, 4294901760
    %1483 = vmatprep.subr.mxu0 %v1482
    %v1484 = vand.u32 %v423, 4294901760
    %v1485 = vsub.f32 %v423, %v1484
    %v1486 = vand.u32 %v1485, 4294901760
    %1487 = vmatpush1.msra.mxu0 %v1486
    %1488 = vmatprep.subr.mxu0 0.0
    %1489 = vmatpush2.msra.mxu0 0.0
    %1490 = vmatprep.subr.mxu0 0.0
    %1491 = vmatpush2.msra.mxu0 0.0
    %1492 = vmatprep.subr.mxu0 0.0
    %1493 = vmatpush2.msra.mxu0 0.0
    %1494 = vmatprep.subr.mxu0 0.0
    %1495 = vmatpush2.msra.mxu0 0.0
    %1496 = vmatprep.subr.mxu0 0.0
    %1497 = vmatpush2.msra.mxu0 0.0
    %1498 = vmatprep.subr.mxu0 0.0
    %1499 = vmatpush2.msra.mxu0 0.0
    %1500 = vmatprep.subr.mxu0 0.0
    %1501 = vmatpush2.msra.mxu0 0.0
    %1502 = vmatprep.subr.mxu0 0.0
    %1503 = vmatpush2.msra.mxu0 0.0
    %1504 = vmatprep.subr.mxu0 0.0
    %1505 = vmatpush2.msra.mxu0 0.0
    %1506 = vmatprep.subr.mxu0 0.0
    %1507 = vmatpush2.msra.mxu0 0.0
    %1508 = vmatprep.subr.mxu0 0.0
    %1509 = vmatpush2.msra.mxu0 0.0
    %1510 = vmatprep.subr.mxu0 0.0
    %1511 = vmatpush2.msra.mxu0 0.0
    %1512 = vmatprep.subr.mxu0 0.0
    %1513 = vmatpush2.msra.mxu0 0.0
    %1514 = vmatprep.subr.mxu0 0.0
    %1515 = vmatpush2.msra.mxu0 0.0
    %1516 = vmatprep.subr.mxu0 0.0
    %1517 = vmatpush2.msra.mxu0 0.0
    %1518 = vmatprep.subr.mxu0 0.0
    %1519 = vmatpush2.msra.mxu0 0.0
    %1520 = vmatprep.mubr.f32.mxu0 0.0
    %v1521 = vand.u32 %v454, 4294901760
    %1522 = vmatmul.mubr.f32.gmra.mxu0 %v1521
    %v1523 = vpop.f32.mrf.mxu0
    %v1524 = vadd.f32 %v1422, %v1523
    %v1525 = vpop.f32.mrf.mxu0
    %v1526 = vadd.f32 %v1424, %v1525
    %1527 = vdwg.mxu0
    %1528 = vmatprep.subr.mxu0 0.0
    %1529 = vmatpush1.msra.mxu0 0.0
    %1530 = vmatprep.subr.mxu0 0.0
    %1531 = vmatpush1.msra.mxu0 0.0
    %1532 = vmatprep.subr.mxu0 0.0
    %1533 = vmatpush1.msra.mxu0 0.0
    %1534 = vmatprep.subr.mxu0 0.0
    %1535 = vmatpush1.msra.mxu0 0.0
    %1536 = vmatprep.subr.mxu0 0.0
    %1537 = vmatpush1.msra.mxu0 0.0
    %1538 = vmatprep.subr.mxu0 0.0
    %1539 = vmatpush1.msra.mxu0 0.0
    %1540 = vmatprep.subr.mxu0 0.0
    %1541 = vmatpush1.msra.mxu0 0.0
    %1542 = vmatprep.subr.mxu0 0.0
    %1543 = vmatpush1.msra.mxu0 0.0
    %1544 = vmatprep.subr.mxu0 0.0
    %1545 = vmatpush1.msra.mxu0 0.0
    %1546 = vmatprep.subr.mxu0 0.0
    %1547 = vmatpush1.msra.mxu0 0.0
    %1548 = vmatprep.subr.mxu0 0.0
    %1549 = vmatpush1.msra.mxu0 0.0
    %v1550 = vand.u32 %v467, 4294901760
    %1551 = vmatprep.subr.mxu0 %v1550
    %v1552 = vand.u32 %v464, 4294901760
    %1553 = vmatpush1.msra.mxu0 %v1552
    %v1554 = vand.u32 %v439, 4294901760
    %1555 = vmatprep.subr.mxu0 %v1554
    %v1556 = vand.u32 %v438, 4294901760
    %1557 = vmatpush1.msra.mxu0 %v1556
    %v1558 = vand.u32 %v434, 4294901760
    %1559 = vmatprep.subr.mxu0 %v1558
    %v1560 = vand.u32 %v433, 4294901760
    %1561 = vmatpush1.msra.mxu0 %v1560
    %v1562 = vand.u32 %v429, 4294901760
    %1563 = vmatprep.subr.mxu0 %v1562
    %v1564 = vand.u32 %v428, 4294901760
    %1565 = vmatpush1.msra.mxu0 %v1564
    %v1566 = vand.u32 %v424, 4294901760
    %1567 = vmatprep.subr.mxu0 %v1566
    %v1568 = vand.u32 %v423, 4294901760
    %1569 = vmatpush1.msra.mxu0 %v1568
    %1570 = vmatprep.subr.mxu0 0.0
    %1571 = vmatpush2.msra.mxu0 0.0
    %1572 = vmatprep.subr.mxu0 0.0
    %1573 = vmatpush2.msra.mxu0 0.0
    %1574 = vmatprep.subr.mxu0 0.0
    %1575 = vmatpush2.msra.mxu0 0.0
    %1576 = vmatprep.subr.mxu0 0.0
    %1577 = vmatpush2.msra.mxu0 0.0
    %1578 = vmatprep.subr.mxu0 0.0
    %1579 = vmatpush2.msra.mxu0 0.0
    %1580 = vmatprep.subr.mxu0 0.0
    %1581 = vmatpush2.msra.mxu0 0.0
    %1582 = vmatprep.subr.mxu0 0.0
    %1583 = vmatpush2.msra.mxu0 0.0
    %1584 = vmatprep.subr.mxu0 0.0
    %1585 = vmatpush2.msra.mxu0 0.0
    %1586 = vmatprep.subr.mxu0 0.0
    %1587 = vmatpush2.msra.mxu0 0.0
    %1588 = vmatprep.subr.mxu0 0.0
    %1589 = vmatpush2.msra.mxu0 0.0
    %1590 = vmatprep.subr.mxu0 0.0
    %1591 = vmatpush2.msra.mxu0 0.0
    %1592 = vmatprep.subr.mxu0 0.0
    %1593 = vmatpush2.msra.mxu0 0.0
    %1594 = vmatprep.subr.mxu0 0.0
    %1595 = vmatpush2.msra.mxu0 0.0
    %1596 = vmatprep.subr.mxu0 0.0
    %1597 = vmatpush2.msra.mxu0 0.0
    %1598 = vmatprep.subr.mxu0 0.0
    %1599 = vmatpush2.msra.mxu0 0.0
    %1600 = vmatprep.subr.mxu0 0.0
    %1601 = vmatpush2.msra.mxu0 0.0
    %1602 = vmatprep.mubr.f32.mxu0 0.0
    %v1603 = vand.u32 %v454, 4294901760
    %1604 = vmatmul.mubr.f32.gmra.mxu0 %v1603
    %v1605 = vpop.f32.mrf.mxu0
    %v1606 = vadd.f32 %v1524, %v1605
    %v1607 = vpop.f32.mrf.mxu0
    %v1608 = vadd.f32 %v1526, %v1607
    %1609 = vdwg.mxu0
    %1610 = vmatprep.subr.mxu0 0.0
    %1611 = vmatpush1.msra.mxu0 0.0
    %1612 = vmatprep.subr.mxu0 0.0
    %1613 = vmatpush1.msra.mxu0 0.0
    %1614 = vmatprep.subr.mxu0 0.0
    %1615 = vmatpush1.msra.mxu0 0.0
    %1616 = vmatprep.subr.mxu0 0.0
    %1617 = vmatpush1.msra.mxu0 0.0
    %1618 = vmatprep.subr.mxu0 0.0
    %1619 = vmatpush1.msra.mxu0 0.0
    %1620 = vmatprep.subr.mxu0 0.0
    %1621 = vmatpush1.msra.mxu0 0.0
    %1622 = vmatprep.subr.mxu0 0.0
    %1623 = vmatpush1.msra.mxu0 0.0
    %1624 = vmatprep.subr.mxu0 0.0
    %1625 = vmatpush1.msra.mxu0 0.0
    %1626 = vmatprep.subr.mxu0 0.0
    %1627 = vmatpush1.msra.mxu0 0.0
    %1628 = vmatprep.subr.mxu0 0.0
    %1629 = vmatpush1.msra.mxu0 0.0
    %1630 = vmatprep.subr.mxu0 0.0
    %1631 = vmatpush1.msra.mxu0 0.0
    %1632 = vmatprep.subr.mxu0 0.0
    %v1633 = vand.u32 %v470, 4294901760
    %1634 = vmatpush1.msra.mxu0 %v1633
    %1635 = vmatprep.subr.mxu0 0.0
    %v1636 = vand.u32 %v440, 4294901760
    %1637 = vmatpush1.msra.mxu0 %v1636
    %1638 = vmatprep.subr.mxu0 0.0
    %v1639 = vand.u32 %v435, 4294901760
    %1640 = vmatpush1.msra.mxu0 %v1639
    %1641 = vmatprep.subr.mxu0 0.0
    %v1642 = vand.u32 %v430, 4294901760
    %1643 = vmatpush1.msra.mxu0 %v1642
    %1644 = vmatprep.subr.mxu0 0.0
    %v1645 = vand.u32 %v425, 4294901760
    %1646 = vmatpush1.msra.mxu0 %v1645
    %1647 = vmatprep.subr.mxu0 0.0
    %1648 = vmatpush2.msra.mxu0 0.0
    %1649 = vmatprep.subr.mxu0 0.0
    %1650 = vmatpush2.msra.mxu0 0.0
    %1651 = vmatprep.subr.mxu0 0.0
    %1652 = vmatpush2.msra.mxu0 0.0
    %1653 = vmatprep.subr.mxu0 0.0
    %1654 = vmatpush2.msra.mxu0 0.0
    %1655 = vmatprep.subr.mxu0 0.0
    %1656 = vmatpush2.msra.mxu0 0.0
    %1657 = vmatprep.subr.mxu0 0.0
    %1658 = vmatpush2.msra.mxu0 0.0
    %1659 = vmatprep.subr.mxu0 0.0
    %1660 = vmatpush2.msra.mxu0 0.0
    %1661 = vmatprep.subr.mxu0 0.0
    %1662 = vmatpush2.msra.mxu0 0.0
    %1663 = vmatprep.subr.mxu0 0.0
    %1664 = vmatpush2.msra.mxu0 0.0
    %1665 = vmatprep.subr.mxu0 0.0
    %1666 = vmatpush2.msra.mxu0 0.0
    %1667 = vmatprep.subr.mxu0 0.0
    %1668 = vmatpush2.msra.mxu0 0.0
    %1669 = vmatprep.subr.mxu0 0.0
    %1670 = vmatpush2.msra.mxu0 0.0
    %1671 = vmatprep.subr.mxu0 0.0
    %1672 = vmatpush2.msra.mxu0 0.0
    %1673 = vmatprep.subr.mxu0 0.0
    %1674 = vmatpush2.msra.mxu0 0.0
    %1675 = vmatprep.subr.mxu0 0.0
    %1676 = vmatpush2.msra.mxu0 0.0
    %1677 = vmatprep.subr.mxu0 0.0
    %1678 = vmatpush2.msra.mxu0 0.0
    %1679 = vmatprep.mubr.f32.mxu0 0.0
    %v1680 = vand.u32 %v454, 4294901760
    %v1681 = vsub.f32 %v454, %v1680
    %v1682 = vand.u32 %v1681, 4294901760
    %v1683 = vsub.f32 %v1681, %v1682
    %v1684 = vand.u32 %v1683, 4294901760
    %1685 = vmatmul.mubr.f32.gmra.mxu0 %v1684
    %v1686 = vpop.f32.mrf.mxu0
    %v1687 = vadd.f32 %v450, %v1686
    %v1688 = vpop.f32.mrf.mxu0
    %1689 = vdwg.mxu0
    %1690 = vmatprep.subr.mxu0 0.0
    %1691 = vmatpush1.msra.mxu0 0.0
    %1692 = vmatprep.subr.mxu0 0.0
    %1693 = vmatpush1.msra.mxu0 0.0
    %1694 = vmatprep.subr.mxu0 0.0
    %1695 = vmatpush1.msra.mxu0 0.0
    %1696 = vmatprep.subr.mxu0 0.0
    %1697 = vmatpush1.msra.mxu0 0.0
    %1698 = vmatprep.subr.mxu0 0.0
    %1699 = vmatpush1.msra.mxu0 0.0
    %1700 = vmatprep.subr.mxu0 0.0
    %1701 = vmatpush1.msra.mxu0 0.0
    %1702 = vmatprep.subr.mxu0 0.0
    %1703 = vmatpush1.msra.mxu0 0.0
    %1704 = vmatprep.subr.mxu0 0.0
    %1705 = vmatpush1.msra.mxu0 0.0
    %1706 = vmatprep.subr.mxu0 0.0
    %1707 = vmatpush1.msra.mxu0 0.0
    %1708 = vmatprep.subr.mxu0 0.0
    %1709 = vmatpush1.msra.mxu0 0.0
    %1710 = vmatprep.subr.mxu0 0.0
    %1711 = vmatpush1.msra.mxu0 0.0
    %1712 = vmatprep.subr.mxu0 0.0
    %v1713 = vand.u32 %v470, 4294901760
    %v1714 = vsub.f32 %v470, %v1713
    %v1715 = vand.u32 %v1714, 4294901760
    %v1716 = vsub.f32 %v1714, %v1715
    %v1717 = vand.u32 %v1716, 4294901760
    %1718 = vmatpush1.msra.mxu0 %v1717
    %1719 = vmatprep.subr.mxu0 0.0
    %v1720 = vand.u32 %v440, 4294901760
    %v1721 = vsub.f32 %v440, %v1720
    %v1722 = vand.u32 %v1721, 4294901760
    %v1723 = vsub.f32 %v1721, %v1722
    %v1724 = vand.u32 %v1723, 4294901760
    %1725 = vmatpush1.msra.mxu0 %v1724
    %1726 = vmatprep.subr.mxu0 0.0
    %v1727 = vand.u32 %v435, 4294901760
    %v1728 = vsub.f32 %v435, %v1727
    %v1729 = vand.u32 %v1728, 4294901760
    %v1730 = vsub.f32 %v1728, %v1729
    %v1731 = vand.u32 %v1730, 4294901760
    %1732 = vmatpush1.msra.mxu0 %v1731
    %1733 = vmatprep.subr.mxu0 0.0
    %v1734 = vand.u32 %v430, 4294901760
    %v1735 = vsub.f32 %v430, %v1734
    %v1736 = vand.u32 %v1735, 4294901760
    %v1737 = vsub.f32 %v1735, %v1736
    %v1738 = vand.u32 %v1737, 4294901760
    %1739 = vmatpush1.msra.mxu0 %v1738
    %1740 = vmatprep.subr.mxu0 0.0
    %v1741 = vand.u32 %v425, 4294901760
    %v1742 = vsub.f32 %v425, %v1741
    %v1743 = vand.u32 %v1742, 4294901760
    %v1744 = vsub.f32 %v1742, %v1743
    %v1745 = vand.u32 %v1744, 4294901760
    %1746 = vmatpush1.msra.mxu0 %v1745
    %1747 = vmatprep.subr.mxu0 0.0
    %1748 = vmatpush2.msra.mxu0 0.0
    %1749 = vmatprep.subr.mxu0 0.0
    %1750 = vmatpush2.msra.mxu0 0.0
    %1751 = vmatprep.subr.mxu0 0.0
    %1752 = vmatpush2.msra.mxu0 0.0
    %1753 = vmatprep.subr.mxu0 0.0
    %1754 = vmatpush2.msra.mxu0 0.0
    %1755 = vmatprep.subr.mxu0 0.0
    %1756 = vmatpush2.msra.mxu0 0.0
    %1757 = vmatprep.subr.mxu0 0.0
    %1758 = vmatpush2.msra.mxu0 0.0
    %1759 = vmatprep.subr.mxu0 0.0
    %1760 = vmatpush2.msra.mxu0 0.0
    %1761 = vmatprep.subr.mxu0 0.0
    %1762 = vmatpush2.msra.mxu0 0.0
    %1763 = vmatprep.subr.mxu0 0.0
    %1764 = vmatpush2.msra.mxu0 0.0
    %1765 = vmatprep.subr.mxu0 0.0
    %1766 = vmatpush2.msra.mxu0 0.0
    %1767 = vmatprep.subr.mxu0 0.0
    %1768 = vmatpush2.msra.mxu0 0.0
    %1769 = vmatprep.subr.mxu0 0.0
    %1770 = vmatpush2.msra.mxu0 0.0
    %1771 = vmatprep.subr.mxu0 0.0
    %1772 = vmatpush2.msra.mxu0 0.0
    %1773 = vmatprep.subr.mxu0 0.0
    %1774 = vmatpush2.msra.mxu0 0.0
    %1775 = vmatprep.subr.mxu0 0.0
    %1776 = vmatpush2.msra.mxu0 0.0
    %1777 = vmatprep.subr.mxu0 0.0
    %1778 = vmatpush2.msra.mxu0 0.0
    %1779 = vmatprep.mubr.f32.mxu0 0.0
    %v1780 = vand.u32 %v454, 4294901760
    %1781 = vmatmul.mubr.f32.gmra.mxu0 %v1780
    %v1782 = vpop.f32.mrf.mxu0
    %v1783 = vadd.f32 %v1687, %v1782
    %v1784 = vpop.f32.mrf.mxu0
    %1785 = vdwg.mxu0
    %1786 = vmatprep.subr.mxu0 0.0
    %1787 = vmatpush1.msra.mxu0 0.0
    %1788 = vmatprep.subr.mxu0 0.0
    %1789 = vmatpush1.msra.mxu0 0.0
    %1790 = vmatprep.subr.mxu0 0.0
    %1791 = vmatpush1.msra.mxu0 0.0
    %1792 = vmatprep.subr.mxu0 0.0
    %1793 = vmatpush1.msra.mxu0 0.0
    %1794 = vmatprep.subr.mxu0 0.0
    %1795 = vmatpush1.msra.mxu0 0.0
    %1796 = vmatprep.subr.mxu0 0.0
    %1797 = vmatpush1.msra.mxu0 0.0
    %1798 = vmatprep.subr.mxu0 0.0
    %1799 = vmatpush1.msra.mxu0 0.0
    %1800 = vmatprep.subr.mxu0 0.0
    %1801 = vmatpush1.msra.mxu0 0.0
    %1802 = vmatprep.subr.mxu0 0.0
    %1803 = vmatpush1.msra.mxu0 0.0
    %1804 = vmatprep.subr.mxu0 0.0
    %1805 = vmatpush1.msra.mxu0 0.0
    %1806 = vmatprep.subr.mxu0 0.0
    %1807 = vmatpush1.msra.mxu0 0.0
    %1808 = vmatprep.subr.mxu0 0.0
    %v1809 = vand.u32 %v470, 4294901760
    %v1810 = vsub.f32 %v470, %v1809
    %1811 = vmatpush1.msra.mxu0 %v1810
    %1812 = vmatprep.subr.mxu0 0.0
    %v1813 = vand.u32 %v440, 4294901760
    %v1814 = vsub.f32 %v440, %v1813
    %1815 = vmatpush1.msra.mxu0 %v1814
    %1816 = vmatprep.subr.mxu0 0.0
    %v1817 = vand.u32 %v435, 4294901760
    %v1818 = vsub.f32 %v435, %v1817
    %1819 = vmatpush1.msra.mxu0 %v1818
    %1820 = vmatprep.subr.mxu0 0.0
    %v1821 = vand.u32 %v430, 4294901760
    %v1822 = vsub.f32 %v430, %v1821
    %1823 = vmatpush1.msra.mxu0 %v1822
    %1824 = vmatprep.subr.mxu0 0.0
    %v1825 = vand.u32 %v425, 4294901760
    %v1826 = vsub.f32 %v425, %v1825
    %1827 = vmatpush1.msra.mxu0 %v1826
    %1828 = vmatprep.subr.mxu0 0.0
    %1829 = vmatpush2.msra.mxu0 0.0
    %1830 = vmatprep.subr.mxu0 0.0
    %1831 = vmatpush2.msra.mxu0 0.0
    %1832 = vmatprep.subr.mxu0 0.0
    %1833 = vmatpush2.msra.mxu0 0.0
    %1834 = vmatprep.subr.mxu0 0.0
    %1835 = vmatpush2.msra.mxu0 0.0
    %1836 = vmatprep.subr.mxu0 0.0
    %1837 = vmatpush2.msra.mxu0 0.0
    %1838 = vmatprep.subr.mxu0 0.0
    %1839 = vmatpush2.msra.mxu0 0.0
    %1840 = vmatprep.subr.mxu0 0.0
    %1841 = vmatpush2.msra.mxu0 0.0
    %1842 = vmatprep.subr.mxu0 0.0
    %1843 = vmatpush2.msra.mxu0 0.0
    %1844 = vmatprep.subr.mxu0 0.0
    %1845 = vmatpush2.msra.mxu0 0.0
    %1846 = vmatprep.subr.mxu0 0.0
    %1847 = vmatpush2.msra.mxu0 0.0
    %1848 = vmatprep.subr.mxu0 0.0
    %1849 = vmatpush2.msra.mxu0 0.0
    %1850 = vmatprep.subr.mxu0 0.0
    %1851 = vmatpush2.msra.mxu0 0.0
    %1852 = vmatprep.subr.mxu0 0.0
    %1853 = vmatpush2.msra.mxu0 0.0
    %1854 = vmatprep.subr.mxu0 0.0
    %1855 = vmatpush2.msra.mxu0 0.0
    %1856 = vmatprep.subr.mxu0 0.0
    %1857 = vmatpush2.msra.mxu0 0.0
    %1858 = vmatprep.subr.mxu0 0.0
    %1859 = vmatpush2.msra.mxu0 0.0
    %1860 = vmatprep.mubr.f32.mxu0 0.0
    %v1861 = vand.u32 %v454, 4294901760
    %v1862 = vsub.f32 %v454, %v1861
    %1863 = vmatmul.mubr.f32.gmra.mxu0 %v1862
    %v1864 = vpop.f32.mrf.mxu0
    %v1865 = vadd.f32 %v1783, %v1864
    %v1866 = vpop.f32.mrf.mxu0
    %1867 = vdwg.mxu0
    %1868 = vmatprep.subr.mxu0 0.0
    %1869 = vmatpush1.msra.mxu0 0.0
    %1870 = vmatprep.subr.mxu0 0.0
    %1871 = vmatpush1.msra.mxu0 0.0
    %1872 = vmatprep.subr.mxu0 0.0
    %1873 = vmatpush1.msra.mxu0 0.0
    %1874 = vmatprep.subr.mxu0 0.0
    %1875 = vmatpush1.msra.mxu0 0.0
    %1876 = vmatprep.subr.mxu0 0.0
    %1877 = vmatpush1.msra.mxu0 0.0
    %1878 = vmatprep.subr.mxu0 0.0
    %1879 = vmatpush1.msra.mxu0 0.0
    %1880 = vmatprep.subr.mxu0 0.0
    %1881 = vmatpush1.msra.mxu0 0.0
    %1882 = vmatprep.subr.mxu0 0.0
    %1883 = vmatpush1.msra.mxu0 0.0
    %1884 = vmatprep.subr.mxu0 0.0
    %1885 = vmatpush1.msra.mxu0 0.0
    %1886 = vmatprep.subr.mxu0 0.0
    %1887 = vmatpush1.msra.mxu0 0.0
    %1888 = vmatprep.subr.mxu0 0.0
    %1889 = vmatpush1.msra.mxu0 0.0
    %1890 = vmatprep.subr.mxu0 0.0
    %v1891 = vand.u32 %v470, 4294901760
    %1892 = vmatpush1.msra.mxu0 %v1891
    %1893 = vmatprep.subr.mxu0 0.0
    %v1894 = vand.u32 %v440, 4294901760
    %1895 = vmatpush1.msra.mxu0 %v1894
    %1896 = vmatprep.subr.mxu0 0.0
    %v1897 = vand.u32 %v435, 4294901760
    %1898 = vmatpush1.msra.mxu0 %v1897
    %1899 = vmatprep.subr.mxu0 0.0
    %v1900 = vand.u32 %v430, 4294901760
    %1901 = vmatpush1.msra.mxu0 %v1900
    %1902 = vmatprep.subr.mxu0 0.0
    %v1903 = vand.u32 %v425, 4294901760
    %1904 = vmatpush1.msra.mxu0 %v1903
    %1905 = vmatprep.subr.mxu0 0.0
    %1906 = vmatpush2.msra.mxu0 0.0
    %1907 = vmatprep.subr.mxu0 0.0
    %1908 = vmatpush2.msra.mxu0 0.0
    %1909 = vmatprep.subr.mxu0 0.0
    %1910 = vmatpush2.msra.mxu0 0.0
    %1911 = vmatprep.subr.mxu0 0.0
    %1912 = vmatpush2.msra.mxu0 0.0
    %1913 = vmatprep.subr.mxu0 0.0
    %1914 = vmatpush2.msra.mxu0 0.0
    %1915 = vmatprep.subr.mxu0 0.0
    %1916 = vmatpush2.msra.mxu0 0.0
    %1917 = vmatprep.subr.mxu0 0.0
    %1918 = vmatpush2.msra.mxu0 0.0
    %1919 = vmatprep.subr.mxu0 0.0
    %1920 = vmatpush2.msra.mxu0 0.0
    %1921 = vmatprep.subr.mxu0 0.0
    %1922 = vmatpush2.msra.mxu0 0.0
    %1923 = vmatprep.subr.mxu0 0.0
    %1924 = vmatpush2.msra.mxu0 0.0
    %1925 = vmatprep.subr.mxu0 0.0
    %1926 = vmatpush2.msra.mxu0 0.0
    %1927 = vmatprep.subr.mxu0 0.0
    %1928 = vmatpush2.msra.mxu0 0.0
    %1929 = vmatprep.subr.mxu0 0.0
    %1930 = vmatpush2.msra.mxu0 0.0
    %1931 = vmatprep.subr.mxu0 0.0
    %1932 = vmatpush2.msra.mxu0 0.0
    %1933 = vmatprep.subr.mxu0 0.0
    %1934 = vmatpush2.msra.mxu0 0.0
    %1935 = vmatprep.subr.mxu0 0.0
    %1936 = vmatpush2.msra.mxu0 0.0
    %1937 = vmatprep.mubr.f32.mxu0 0.0
    %v1938 = vand.u32 %v454, 4294901760
    %v1939 = vsub.f32 %v454, %v1938
    %v1940 = vand.u32 %v1939, 4294901760
    %1941 = vmatmul.mubr.f32.gmra.mxu0 %v1940
    %v1942 = vpop.f32.mrf.mxu0
    %v1943 = vadd.f32 %v1865, %v1942
    %v1944 = vpop.f32.mrf.mxu0
    %1945 = vdwg.mxu0
    %1946 = vmatprep.subr.mxu0 0.0
    %1947 = vmatpush1.msra.mxu0 0.0
    %1948 = vmatprep.subr.mxu0 0.0
    %1949 = vmatpush1.msra.mxu0 0.0
    %1950 = vmatprep.subr.mxu0 0.0
    %1951 = vmatpush1.msra.mxu0 0.0
    %1952 = vmatprep.subr.mxu0 0.0
    %1953 = vmatpush1.msra.mxu0 0.0
    %1954 = vmatprep.subr.mxu0 0.0
    %1955 = vmatpush1.msra.mxu0 0.0
    %1956 = vmatprep.subr.mxu0 0.0
    %1957 = vmatpush1.msra.mxu0 0.0
    %1958 = vmatprep.subr.mxu0 0.0
    %1959 = vmatpush1.msra.mxu0 0.0
    %1960 = vmatprep.subr.mxu0 0.0
    %1961 = vmatpush1.msra.mxu0 0.0
    %1962 = vmatprep.subr.mxu0 0.0
    %1963 = vmatpush1.msra.mxu0 0.0
    %1964 = vmatprep.subr.mxu0 0.0
    %1965 = vmatpush1.msra.mxu0 0.0
    %1966 = vmatprep.subr.mxu0 0.0
    %1967 = vmatpush1.msra.mxu0 0.0
    %1968 = vmatprep.subr.mxu0 0.0
    %v1969 = vand.u32 %v470, 4294901760
    %v1970 = vsub.f32 %v470, %v1969
    %v1971 = vand.u32 %v1970, 4294901760
    %1972 = vmatpush1.msra.mxu0 %v1971
    %1973 = vmatprep.subr.mxu0 0.0
    %v1974 = vand.u32 %v440, 4294901760
    %v1975 = vsub.f32 %v440, %v1974
    %v1976 = vand.u32 %v1975, 4294901760
    %1977 = vmatpush1.msra.mxu0 %v1976
    %1978 = vmatprep.subr.mxu0 0.0
    %v1979 = vand.u32 %v435, 4294901760
    %v1980 = vsub.f32 %v435, %v1979
    %v1981 = vand.u32 %v1980, 4294901760
    %1982 = vmatpush1.msra.mxu0 %v1981
    %1983 = vmatprep.subr.mxu0 0.0
    %v1984 = vand.u32 %v430, 4294901760
    %v1985 = vsub.f32 %v430, %v1984
    %v1986 = vand.u32 %v1985, 4294901760
    %1987 = vmatpush1.msra.mxu0 %v1986
    %1988 = vmatprep.subr.mxu0 0.0
    %v1989 = vand.u32 %v425, 4294901760
    %v1990 = vsub.f32 %v425, %v1989
    %v1991 = vand.u32 %v1990, 4294901760
    %1992 = vmatpush1.msra.mxu0 %v1991
    %1993 = vmatprep.subr.mxu0 0.0
    %1994 = vmatpush2.msra.mxu0 0.0
    %1995 = vmatprep.subr.mxu0 0.0
    %1996 = vmatpush2.msra.mxu0 0.0
    %1997 = vmatprep.subr.mxu0 0.0
    %1998 = vmatpush2.msra.mxu0 0.0
    %1999 = vmatprep.subr.mxu0 0.0
    %2000 = vmatpush2.msra.mxu0 0.0
    %2001 = vmatprep.subr.mxu0 0.0
    %2002 = vmatpush2.msra.mxu0 0.0
    %2003 = vmatprep.subr.mxu0 0.0
    %2004 = vmatpush2.msra.mxu0 0.0
    %2005 = vmatprep.subr.mxu0 0.0
    %2006 = vmatpush2.msra.mxu0 0.0
    %2007 = vmatprep.subr.mxu0 0.0
    %2008 = vmatpush2.msra.mxu0 0.0
    %2009 = vmatprep.subr.mxu0 0.0
    %2010 = vmatpush2.msra.mxu0 0.0
    %2011 = vmatprep.subr.mxu0 0.0
    %2012 = vmatpush2.msra.mxu0 0.0
    %2013 = vmatprep.subr.mxu0 0.0
    %2014 = vmatpush2.msra.mxu0 0.0
    %2015 = vmatprep.subr.mxu0 0.0
    %2016 = vmatpush2.msra.mxu0 0.0
    %2017 = vmatprep.subr.mxu0 0.0
    %2018 = vmatpush2.msra.mxu0 0.0
    %2019 = vmatprep.subr.mxu0 0.0
    %2020 = vmatpush2.msra.mxu0 0.0
    %2021 = vmatprep.subr.mxu0 0.0
    %2022 = vmatpush2.msra.mxu0 0.0
    %2023 = vmatprep.subr.mxu0 0.0
    %2024 = vmatpush2.msra.mxu0 0.0
    %2025 = vmatprep.mubr.f32.mxu0 0.0
    %v2026 = vand.u32 %v454, 4294901760
    %2027 = vmatmul.mubr.f32.gmra.mxu0 %v2026
    %v2028 = vpop.f32.mrf.mxu0
    %v2029 = vadd.f32 %v1943, %v2028
    %v2030 = vpop.f32.mrf.mxu0
    %2031 = vdwg.mxu0
    %2032 = vmatprep.subr.mxu0 0.0
    %2033 = vmatpush1.msra.mxu0 0.0
    %2034 = vmatprep.subr.mxu0 0.0
    %2035 = vmatpush1.msra.mxu0 0.0
    %2036 = vmatprep.subr.mxu0 0.0
    %2037 = vmatpush1.msra.mxu0 0.0
    %2038 = vmatprep.subr.mxu0 0.0
    %2039 = vmatpush1.msra.mxu0 0.0
    %2040 = vmatprep.subr.mxu0 0.0
    %2041 = vmatpush1.msra.mxu0 0.0
    %2042 = vmatprep.subr.mxu0 0.0
    %2043 = vmatpush1.msra.mxu0 0.0
    %2044 = vmatprep.subr.mxu0 0.0
    %2045 = vmatpush1.msra.mxu0 0.0
    %2046 = vmatprep.subr.mxu0 0.0
    %2047 = vmatpush1.msra.mxu0 0.0
    %2048 = vmatprep.subr.mxu0 0.0
    %2049 = vmatpush1.msra.mxu0 0.0
    %2050 = vmatprep.subr.mxu0 0.0
    %2051 = vmatpush1.msra.mxu0 0.0
    %2052 = vmatprep.subr.mxu0 0.0
    %2053 = vmatpush1.msra.mxu0 0.0
    %2054 = vmatprep.subr.mxu0 0.0
    %v2055 = vand.u32 %v470, 4294901760
    %2056 = vmatpush1.msra.mxu0 %v2055
    %2057 = vmatprep.subr.mxu0 0.0
    %v2058 = vand.u32 %v440, 4294901760
    %2059 = vmatpush1.msra.mxu0 %v2058
    %2060 = vmatprep.subr.mxu0 0.0
    %v2061 = vand.u32 %v435, 4294901760
    %2062 = vmatpush1.msra.mxu0 %v2061
    %2063 = vmatprep.subr.mxu0 0.0
    %v2064 = vand.u32 %v430, 4294901760
    %2065 = vmatpush1.msra.mxu0 %v2064
    %2066 = vmatprep.subr.mxu0 0.0
    %v2067 = vand.u32 %v425, 4294901760
    %2068 = vmatpush1.msra.mxu0 %v2067
    %2069 = vmatprep.subr.mxu0 0.0
    %2070 = vmatpush2.msra.mxu0 0.0
    %2071 = vmatprep.subr.mxu0 0.0
    %2072 = vmatpush2.msra.mxu0 0.0
    %2073 = vmatprep.subr.mxu0 0.0
    %2074 = vmatpush2.msra.mxu0 0.0
    %2075 = vmatprep.subr.mxu0 0.0
    %2076 = vmatpush2.msra.mxu0 0.0
    %2077 = vmatprep.subr.mxu0 0.0
    %2078 = vmatpush2.msra.mxu0 0.0
    %2079 = vmatprep.subr.mxu0 0.0
    %2080 = vmatpush2.msra.mxu0 0.0
    %2081 = vmatprep.subr.mxu0 0.0
    %2082 = vmatpush2.msra.mxu0 0.0
    %2083 = vmatprep.subr.mxu0 0.0
    %2084 = vmatpush2.msra.mxu0 0.0
    %2085 = vmatprep.subr.mxu0 0.0
    %2086 = vmatpush2.msra.mxu0 0.0
    %2087 = vmatprep.subr.mxu0 0.0
    %2088 = vmatpush2.msra.mxu0 0.0
    %2089 = vmatprep.subr.mxu0 0.0
    %2090 = vmatpush2.msra.mxu0 0.0
    %2091 = vmatprep.subr.mxu0 0.0
    %2092 = vmatpush2.msra.mxu0 0.0
    %2093 = vmatprep.subr.mxu0 0.0
    %2094 = vmatpush2.msra.mxu0 0.0
    %2095 = vmatprep.subr.mxu0 0.0
    %2096 = vmatpush2.msra.mxu0 0.0
    %2097 = vmatprep.subr.mxu0 0.0
    %2098 = vmatpush2.msra.mxu0 0.0
    %2099 = vmatprep.subr.mxu0 0.0
    %2100 = vmatpush2.msra.mxu0 0.0
    %2101 = vmatprep.mubr.f32.mxu0 0.0
    %v2102 = vand.u32 %v454, 4294901760
    %2103 = vmatmul.mubr.f32.gmra.mxu0 %v2102
    %v2104 = vpop.f32.mrf.mxu0
    %v2105 = vadd.f32 %v2029, %v2104
    %v2106 = vpop.f32.mrf.mxu0
    %2107 = vdwg.mxu0
    %v2108 = vmax.f32 %v1037, 0.0
    %v2109 = vmax.f32 %v1039, 0.0
    %v2110 = vmax.f32 %v1606, 0.0
    %v2111 = vmax.f32 %v1608, 0.0
    %v2112 = vmax.f32 %v2105, 0.0
    %2116 = vrot.lane.b32.xlu0 %v2108, 127
    %v2117 = vpop.permute.xlu0 %2116
    %2118 = vrot.lane.b32.xlu0 %v2109, 127
    %v2119 = vpop.permute.xlu0 %2118
    %2120 = vrot.lane.b32.xlu0 %v2110, 127
    %v2121 = vpop.permute.xlu0 %2120
    %v2122 = vsel %vm72, %v2117, %v2119
    %v2123 = vsel %vm72, %v2119, %v2121
    %v2127 = vmax.f32 %v2108, %v2122
    %v2128 = vmax.f32 %v2109, %v2123
    %v2129 = vmax.f32 %v2110, %v2121
    %2133 = vrot.lane.b32.xlu0 %v2127, 110
    %v2134 = vpop.permute.xlu0 %2133
    %2135 = vrot.lane.b32.xlu0 %v2128, 110
    %v2136 = vpop.permute.xlu0 %2135
    %2137 = vrot.lane.b32.xlu0 %v2129, 110
    %v2138 = vpop.permute.xlu0 %2137
    %v2139 = vsel %vm165, %v2134, %v2136
    %v2140 = vsel %vm165, %v2136, %v2138
    %v2144 = vmax.f32 %v2127, %v2139
    %v2145 = vmax.f32 %v2128, %v2140
    %v2146 = vmax.f32 %v2129, %v2138
    %2149 = vrot.lane.b32.xlu0 %v2111, 127
    %v2150 = vpop.permute.xlu0 %2149
    %2151 = vrot.lane.b32.xlu0 %v2112, 127
    %v2152 = vpop.permute.xlu0 %2151
    %v2153 = vsel %vm72, %v2121, %v2150
    %v2154 = vsel %vm72, %v2150, %v2152
    %v2158 = vmax.f32 %v2110, %v2153
    %v2159 = vmax.f32 %v2111, %v2154
    %v2160 = vmax.f32 %v2112, %v2152
    %2164 = vrot.lane.b32.xlu0 %v2158, 110
    %v2165 = vpop.permute.xlu0 %2164
    %2166 = vrot.lane.b32.xlu0 %v2159, 110
    %v2167 = vpop.permute.xlu0 %2166
    %2168 = vrot.lane.b32.xlu0 %v2160, 110
    %v2169 = vpop.permute.xlu0 %2168
    %v2170 = vsel %vm165, %v2165, %v2167
    %v2171 = vsel %vm165, %v2167, %v2169
    %v2175 = vmax.f32 %v2158, %v2170
    %v2176 = vmax.f32 %v2159, %v2171
    %v2177 = vmax.f32 %v2160, %v2169
    %2181 = vrot.lane.b32.xlu0 %v2175, 98
    %v2182 = vpop.permute.xlu0 %2181
    %2183 = vrot.lane.b32.xlu0 %v2176, 98
    %v2184 = vpop.permute.xlu0 %2183
    %2185 = vrot.lane.b32.xlu0 %v2177, 98
    %v2186 = vpop.permute.xlu0 %2185
    %vm2187 = vcmask 801792
    %v2188 = vsel %vm2187, %v2182, %v2184
    %v2189 = vsel %vm2187, %v2184, %v2186
    %v2192 = vld [vmem:[%s3] sm:$0xff]
    %v2193 = vld [vmem:[%s3 + $0x8] sm:$0xff]
    %v2194 = vld [vmem:[%s3 + $0x10] sm:$0xff]
    %v2195 = vld [vmem:[%s3 + $0x18] sm:$0xff]
    %v2196 = vld [vmem:[%s3 + $0x20] sm:$0xff]
    %v2197 = vld [vmem:[%s3 + $0x28] sm:$0xff]
    %v2198 = vld [vmem:[%s3 + $0x30] sm:$0xff]
    %v2199 = vld [vmem:[%s3 + $0x38] sm:$0xff]
    %v2200 = vld [vmem:[%s3 + $0x40] sm:$0xff]
    %v2201 = vld [vmem:[%s3 + $0x48] sm:$0xff]
    %v2202 = vld [vmem:[%s3 + $0x50] sm:$0xff]
    %v2203 = vld [vmem:[%s3 + $0x58] sm:$0xff]
    %v2204 = vld [vmem:[%s3 + $0x60] sm:$0xff]
    %v2205 = vld [vmem:[%s3 + $0x68] sm:$0xff]
    %v2206 = vld [vmem:[%s3 + $0x70] sm:$0xff]
    %v2207 = vld [vmem:[%s3 + $0x78] sm:$0xff]
    %v2208 = vld [vmem:[%s3 + $0x80] sm:$0xff]
    %v2209 = vld [vmem:[%s3 + $0x88] sm:$0xff]
    %v2210 = vld [vmem:[%s3 + $0x90] sm:$0xff]
    %v2211 = vld [vmem:[%s3 + $0x98] sm:$0xff]
    %v2212 = vld [vmem:[%s3 + $0xa0] sm:$0xff]
    %v2213 = vld [vmem:[%s3 + $0xa8] sm:$0xff]
    %v2214 = vld [vmem:[%s3 + $0xb0] sm:$0xff]
    %v2215 = vld [vmem:[%s3 + $0xb8] sm:$0xff]
    %v2216 = vld [vmem:[%s3 + $0xc0] sm:$0xff]
    %v2217 = vld [vmem:[%s3 + $0xc8] sm:$0xff]
    %v2218 = vld [vmem:[%s3 + $0xd0] sm:$0xff]
    %v2219 = vld [vmem:[%s3 + $0xd8] sm:$0xff]
    %v2220 = vld [vmem:[%s3 + $0xe0] sm:$0xff]
    %v2221 = vld [vmem:[%s3 + $0xe8] sm:$0xff]
    %v2222 = vld [vmem:[%s3 + $0xf0] sm:$0xff]
    %v2223 = vld [vmem:[%s3 + $0xf8] sm:$0xff]
    %v2224 = vld [vmem:[%s3 + $0x100] sm:$0xff]
    %v2225 = vld [vmem:[%s3 + $0x108] sm:$0x7]
    %v2227 = vsel %vm231, %v2146, 0
    %v2229 = vsel %vm231, %v2186, 0
    %vm2231 = vcmask 1042432
    %v2233 = vsel %vm2231, %v2225, 0
    %2235 = vmatprep.subr.mxu0 0.0
    %v2236 = vand.u32 %v2207, 4294901760
    %2237 = vmatpush1.msra.mxu0 %v2236
    %2238 = vmatprep.subr.mxu0 0.0
    %v2239 = vand.u32 %v2206, 4294901760
    %2240 = vmatpush1.msra.mxu0 %v2239
    %2241 = vmatprep.subr.mxu0 0.0
    %v2242 = vand.u32 %v2205, 4294901760
    %2243 = vmatpush1.msra.mxu0 %v2242
    %2244 = vmatprep.subr.mxu0 0.0
    %v2245 = vand.u32 %v2204, 4294901760
    %2246 = vmatpush1.msra.mxu0 %v2245
    %2247 = vmatprep.subr.mxu0 0.0
    %v2248 = vand.u32 %v2203, 4294901760
    %2249 = vmatpush1.msra.mxu0 %v2248
    %2250 = vmatprep.subr.mxu0 0.0
    %v2251 = vand.u32 %v2202, 4294901760
    %2252 = vmatpush1.msra.mxu0 %v2251
    %2253 = vmatprep.subr.mxu0 0.0
    %v2254 = vand.u32 %v2201, 4294901760
    %2255 = vmatpush1.msra.mxu0 %v2254
    %2256 = vmatprep.subr.mxu0 0.0
    %v2257 = vand.u32 %v2200, 4294901760
    %2258 = vmatpush1.msra.mxu0 %v2257
    %2259 = vmatprep.subr.mxu0 0.0
    %v2260 = vand.u32 %v2199, 4294901760
    %2261 = vmatpush1.msra.mxu0 %v2260
    %2262 = vmatprep.subr.mxu0 0.0
    %v2263 = vand.u32 %v2198, 4294901760
    %2264 = vmatpush1.msra.mxu0 %v2263
    %2265 = vmatprep.subr.mxu0 0.0
    %v2266 = vand.u32 %v2197, 4294901760
    %2267 = vmatpush1.msra.mxu0 %v2266
    %2268 = vmatprep.subr.mxu0 0.0
    %v2269 = vand.u32 %v2196, 4294901760
    %2270 = vmatpush1.msra.mxu0 %v2269
    %2271 = vmatprep.subr.mxu0 0.0
    %v2272 = vand.u32 %v2195, 4294901760
    %2273 = vmatpush1.msra.mxu0 %v2272
    %2274 = vmatprep.subr.mxu0 0.0
    %v2275 = vand.u32 %v2194, 4294901760
    %2276 = vmatpush1.msra.mxu0 %v2275
    %2277 = vmatprep.subr.mxu0 0.0
    %v2278 = vand.u32 %v2193, 4294901760
    %2279 = vmatpush1.msra.mxu0 %v2278
    %2280 = vmatprep.subr.mxu0 0.0
    %v2281 = vand.u32 %v2192, 4294901760
    %2282 = vmatpush1.msra.mxu0 %v2281
    %2283 = vmatprep.subr.mxu0 0.0
    %v2284 = vand.u32 %v2223, 4294901760
    %2285 = vmatpush2.msra.mxu0 %v2284
    %2286 = vmatprep.subr.mxu0 0.0
    %v2287 = vand.u32 %v2222, 4294901760
    %2288 = vmatpush2.msra.mxu0 %v2287
    %2289 = vmatprep.subr.mxu0 0.0
    %v2290 = vand.u32 %v2221, 4294901760
    %2291 = vmatpush2.msra.mxu0 %v2290
    %2292 = vmatprep.subr.mxu0 0.0
    %v2293 = vand.u32 %v2220, 4294901760
    %2294 = vmatpush2.msra.mxu0 %v2293
    %2295 = vmatprep.subr.mxu0 0.0
    %v2296 = vand.u32 %v2219, 4294901760
    %2297 = vmatpush2.msra.mxu0 %v2296
    %2298 = vmatprep.subr.mxu0 0.0
    %v2299 = vand.u32 %v2218, 4294901760
    %2300 = vmatpush2.msra.mxu0 %v2299
    %2301 = vmatprep.subr.mxu0 0.0
    %v2302 = vand.u32 %v2217, 4294901760
    %2303 = vmatpush2.msra.mxu0 %v2302
    %2304 = vmatprep.subr.mxu0 0.0
    %v2305 = vand.u32 %v2216, 4294901760
    %2306 = vmatpush2.msra.mxu0 %v2305
    %2307 = vmatprep.subr.mxu0 0.0
    %v2308 = vand.u32 %v2215, 4294901760
    %2309 = vmatpush2.msra.mxu0 %v2308
    %2310 = vmatprep.subr.mxu0 0.0
    %v2311 = vand.u32 %v2214, 4294901760
    %2312 = vmatpush2.msra.mxu0 %v2311
    %2313 = vmatprep.subr.mxu0 0.0
    %v2314 = vand.u32 %v2213, 4294901760
    %2315 = vmatpush2.msra.mxu0 %v2314
    %2316 = vmatprep.subr.mxu0 0.0
    %v2317 = vand.u32 %v2212, 4294901760
    %2318 = vmatpush2.msra.mxu0 %v2317
    %2319 = vmatprep.subr.mxu0 0.0
    %v2320 = vand.u32 %v2211, 4294901760
    %2321 = vmatpush2.msra.mxu0 %v2320
    %2322 = vmatprep.subr.mxu0 0.0
    %v2323 = vand.u32 %v2210, 4294901760
    %2324 = vmatpush2.msra.mxu0 %v2323
    %2325 = vmatprep.subr.mxu0 0.0
    %v2326 = vand.u32 %v2209, 4294901760
    %2327 = vmatpush2.msra.mxu0 %v2326
    %2328 = vmatprep.subr.mxu0 0.0
    %v2329 = vand.u32 %v2208, 4294901760
    %2330 = vmatpush2.msra.mxu0 %v2329
    %v2331 = vand.u32 %v2145, 4294901760
    %v2332 = vsub.f32 %v2145, %v2331
    %v2333 = vand.u32 %v2332, 4294901760
    %v2334 = vsub.f32 %v2332, %v2333
    %v2335 = vand.u32 %v2334, 4294901760
    %2336 = vmatprep.mubr.f32.mxu0 %v2335
    %v2337 = vand.u32 %v2144, 4294901760
    %v2338 = vsub.f32 %v2144, %v2337
    %v2339 = vand.u32 %v2338, 4294901760
    %v2340 = vsub.f32 %v2338, %v2339
    %v2341 = vand.u32 %v2340, 4294901760
    %2342 = vmatmul.mubr.f32.gmra.mxu0 %v2341
    %v2343 = vpop.f32.mrf.mxu0
    %v2344 = vadd.f32 0.0, %v2343
    %v2345 = vpop.f32.mrf.mxu0
    %v2346 = vand.u32 %v2189, 4294901760
    %v2347 = vsub.f32 %v2189, %v2346
    %v2348 = vand.u32 %v2347, 4294901760
    %v2349 = vsub.f32 %v2347, %v2348
    %v2350 = vand.u32 %v2349, 4294901760
    %2351 = vmatprep.mubr.f32.mxu0 %v2350
    %v2352 = vand.u32 %v2188, 4294901760
    %v2353 = vsub.f32 %v2188, %v2352
    %v2354 = vand.u32 %v2353, 4294901760
    %v2355 = vsub.f32 %v2353, %v2354
    %v2356 = vand.u32 %v2355, 4294901760
    %2357 = vmatmul.mubr.f32.gmra.mxu0 %v2356
    %v2358 = vpop.f32.mrf.mxu0
    %v2359 = vadd.f32 0.0, %v2358
    %v2360 = vpop.f32.mrf.mxu0
    %2361 = vdwg.mxu0
    %2362 = vmatprep.subr.mxu0 0.0
    %v2363 = vand.u32 %v2207, 4294901760
    %v2364 = vsub.f32 %v2207, %v2363
    %v2365 = vand.u32 %v2364, 4294901760
    %v2366 = vsub.f32 %v2364, %v2365
    %v2367 = vand.u32 %v2366, 4294901760
    %2368 = vmatpush1.msra.mxu0 %v2367
    %2369 = vmatprep.subr.mxu0 0.0
    %v2370 = vand.u32 %v2206, 4294901760
    %v2371 = vsub.f32 %v2206, %v2370
    %v2372 = vand.u32 %v2371, 4294901760
    %v2373 = vsub.f32 %v2371, %v2372
    %v2374 = vand.u32 %v2373, 4294901760
    %2375 = vmatpush1.msra.mxu0 %v2374
    %2376 = vmatprep.subr.mxu0 0.0
    %v2377 = vand.u32 %v2205, 4294901760
    %v2378 = vsub.f32 %v2205, %v2377
    %v2379 = vand.u32 %v2378, 4294901760
    %v2380 = vsub.f32 %v2378, %v2379
    %v2381 = vand.u32 %v2380, 4294901760
    %2382 = vmatpush1.msra.mxu0 %v2381
    %2383 = vmatprep.subr.mxu0 0.0
    %v2384 = vand.u32 %v2204, 4294901760
    %v2385 = vsub.f32 %v2204, %v2384
    %v2386 = vand.u32 %v2385, 4294901760
    %v2387 = vsub.f32 %v2385, %v2386
    %v2388 = vand.u32 %v2387, 4294901760
    %2389 = vmatpush1.msra.mxu0 %v2388
    %2390 = vmatprep.subr.mxu0 0.0
    %v2391 = vand.u32 %v2203, 4294901760
    %v2392 = vsub.f32 %v2203, %v2391
    %v2393 = vand.u32 %v2392, 4294901760
    %v2394 = vsub.f32 %v2392, %v2393
    %v2395 = vand.u32 %v2394, 4294901760
    %2396 = vmatpush1.msra.mxu0 %v2395
    %2397 = vmatprep.subr.mxu0 0.0
    %v2398 = vand.u32 %v2202, 4294901760
    %v2399 = vsub.f32 %v2202, %v2398
    %v2400 = vand.u32 %v2399, 4294901760
    %v2401 = vsub.f32 %v2399, %v2400
    %v2402 = vand.u32 %v2401, 4294901760
    %2403 = vmatpush1.msra.mxu0 %v2402
    %2404 = vmatprep.subr.mxu0 0.0
    %v2405 = vand.u32 %v2201, 4294901760
    %v2406 = vsub.f32 %v2201, %v2405
    %v2407 = vand.u32 %v2406, 4294901760
    %v2408 = vsub.f32 %v2406, %v2407
    %v2409 = vand.u32 %v2408, 4294901760
    %2410 = vmatpush1.msra.mxu0 %v2409
    %2411 = vmatprep.subr.mxu0 0.0
    %v2412 = vand.u32 %v2200, 4294901760
    %v2413 = vsub.f32 %v2200, %v2412
    %v2414 = vand.u32 %v2413, 4294901760
    %v2415 = vsub.f32 %v2413, %v2414
    %v2416 = vand.u32 %v2415, 4294901760
    %2417 = vmatpush1.msra.mxu0 %v2416
    %2418 = vmatprep.subr.mxu0 0.0
    %v2419 = vand.u32 %v2199, 4294901760
    %v2420 = vsub.f32 %v2199, %v2419
    %v2421 = vand.u32 %v2420, 4294901760
    %v2422 = vsub.f32 %v2420, %v2421
    %v2423 = vand.u32 %v2422, 4294901760
    %2424 = vmatpush1.msra.mxu0 %v2423
    %2425 = vmatprep.subr.mxu0 0.0
    %v2426 = vand.u32 %v2198, 4294901760
    %v2427 = vsub.f32 %v2198, %v2426
    %v2428 = vand.u32 %v2427, 4294901760
    %v2429 = vsub.f32 %v2427, %v2428
    %v2430 = vand.u32 %v2429, 4294901760
    %2431 = vmatpush1.msra.mxu0 %v2430
    %2432 = vmatprep.subr.mxu0 0.0
    %v2433 = vand.u32 %v2197, 4294901760
    %v2434 = vsub.f32 %v2197, %v2433
    %v2435 = vand.u32 %v2434, 4294901760
    %v2436 = vsub.f32 %v2434, %v2435
    %v2437 = vand.u32 %v2436, 4294901760
    %2438 = vmatpush1.msra.mxu0 %v2437
    %2439 = vmatprep.subr.mxu0 0.0
    %v2440 = vand.u32 %v2196, 4294901760
    %v2441 = vsub.f32 %v2196, %v2440
    %v2442 = vand.u32 %v2441, 4294901760
    %v2443 = vsub.f32 %v2441, %v2442
    %v2444 = vand.u32 %v2443, 4294901760
    %2445 = vmatpush1.msra.mxu0 %v2444
    %2446 = vmatprep.subr.mxu0 0.0
    %v2447 = vand.u32 %v2195, 4294901760
    %v2448 = vsub.f32 %v2195, %v2447
    %v2449 = vand.u32 %v2448, 4294901760
    %v2450 = vsub.f32 %v2448, %v2449
    %v2451 = vand.u32 %v2450, 4294901760
    %2452 = vmatpush1.msra.mxu0 %v2451
    %2453 = vmatprep.subr.mxu0 0.0
    %v2454 = vand.u32 %v2194, 4294901760
    %v2455 = vsub.f32 %v2194, %v2454
    %v2456 = vand.u32 %v2455, 4294901760
    %v2457 = vsub.f32 %v2455, %v2456
    %v2458 = vand.u32 %v2457, 4294901760
    %2459 = vmatpush1.msra.mxu0 %v2458
    %2460 = vmatprep.subr.mxu0 0.0
    %v2461 = vand.u32 %v2193, 4294901760
    %v2462 = vsub.f32 %v2193, %v2461
    %v2463 = vand.u32 %v2462, 4294901760
    %v2464 = vsub.f32 %v2462, %v2463
    %v2465 = vand.u32 %v2464, 4294901760
    %2466 = vmatpush1.msra.mxu0 %v2465
    %2467 = vmatprep.subr.mxu0 0.0
    %v2468 = vand.u32 %v2192, 4294901760
    %v2469 = vsub.f32 %v2192, %v2468
    %v2470 = vand.u32 %v2469, 4294901760
    %v2471 = vsub.f32 %v2469, %v2470
    %v2472 = vand.u32 %v2471, 4294901760
    %2473 = vmatpush1.msra.mxu0 %v2472
    %2474 = vmatprep.subr.mxu0 0.0
    %v2475 = vand.u32 %v2223, 4294901760
    %v2476 = vsub.f32 %v2223, %v2475
    %v2477 = vand.u32 %v2476, 4294901760
    %v2478 = vsub.f32 %v2476, %v2477
    %v2479 = vand.u32 %v2478, 4294901760
    %2480 = vmatpush2.msra.mxu0 %v2479
    %2481 = vmatprep.subr.mxu0 0.0
    %v2482 = vand.u32 %v2222, 4294901760
    %v2483 = vsub.f32 %v2222, %v2482
    %v2484 = vand.u32 %v2483, 4294901760
    %v2485 = vsub.f32 %v2483, %v2484
    %v2486 = vand.u32 %v2485, 4294901760
    %2487 = vmatpush2.msra.mxu0 %v2486
    %2488 = vmatprep.subr.mxu0 0.0
    %v2489 = vand.u32 %v2221, 4294901760
    %v2490 = vsub.f32 %v2221, %v2489
    %v2491 = vand.u32 %v2490, 4294901760
    %v2492 = vsub.f32 %v2490, %v2491
    %v2493 = vand.u32 %v2492, 4294901760
    %2494 = vmatpush2.msra.mxu0 %v2493
    %2495 = vmatprep.subr.mxu0 0.0
    %v2496 = vand.u32 %v2220, 4294901760
    %v2497 = vsub.f32 %v2220, %v2496
    %v2498 = vand.u32 %v2497, 4294901760
    %v2499 = vsub.f32 %v2497, %v2498
    %v2500 = vand.u32 %v2499, 4294901760
    %2501 = vmatpush2.msra.mxu0 %v2500
    %2502 = vmatprep.subr.mxu0 0.0
    %v2503 = vand.u32 %v2219, 4294901760
    %v2504 = vsub.f32 %v2219, %v2503
    %v2505 = vand.u32 %v2504, 4294901760
    %v2506 = vsub.f32 %v2504, %v2505
    %v2507 = vand.u32 %v2506, 4294901760
    %2508 = vmatpush2.msra.mxu0 %v2507
    %2509 = vmatprep.subr.mxu0 0.0
    %v2510 = vand.u32 %v2218, 4294901760
    %v2511 = vsub.f32 %v2218, %v2510
    %v2512 = vand.u32 %v2511, 4294901760
    %v2513 = vsub.f32 %v2511, %v2512
    %v2514 = vand.u32 %v2513, 4294901760
    %2515 = vmatpush2.msra.mxu0 %v2514
    %2516 = vmatprep.subr.mxu0 0.0
    %v2517 = vand.u32 %v2217, 4294901760
    %v2518 = vsub.f32 %v2217, %v2517
    %v2519 = vand.u32 %v2518, 4294901760
    %v2520 = vsub.f32 %v2518, %v2519
    %v2521 = vand.u32 %v2520, 4294901760
    %2522 = vmatpush2.msra.mxu0 %v2521
    %2523 = vmatprep.subr.mxu0 0.0
    %v2524 = vand.u32 %v2216, 4294901760
    %v2525 = vsub.f32 %v2216, %v2524
    %v2526 = vand.u32 %v2525, 4294901760
    %v2527 = vsub.f32 %v2525, %v2526
    %v2528 = vand.u32 %v2527, 4294901760
    %2529 = vmatpush2.msra.mxu0 %v2528
    %2530 = vmatprep.subr.mxu0 0.0
    %v2531 = vand.u32 %v2215, 4294901760
    %v2532 = vsub.f32 %v2215, %v2531
    %v2533 = vand.u32 %v2532, 4294901760
    %v2534 = vsub.f32 %v2532, %v2533
    %v2535 = vand.u32 %v2534, 4294901760
    %2536 = vmatpush2.msra.mxu0 %v2535
    %2537 = vmatprep.subr.mxu0 0.0
    %v2538 = vand.u32 %v2214, 4294901760
    %v2539 = vsub.f32 %v2214, %v2538
    %v2540 = vand.u32 %v2539, 4294901760
    %v2541 = vsub.f32 %v2539, %v2540
    %v2542 = vand.u32 %v2541, 4294901760
    %2543 = vmatpush2.msra.mxu0 %v2542
    %2544 = vmatprep.subr.mxu0 0.0
    %v2545 = vand.u32 %v2213, 4294901760
    %v2546 = vsub.f32 %v2213, %v2545
    %v2547 = vand.u32 %v2546, 4294901760
    %v2548 = vsub.f32 %v2546, %v2547
    %v2549 = vand.u32 %v2548, 4294901760
    %2550 = vmatpush2.msra.mxu0 %v2549
    %2551 = vmatprep.subr.mxu0 0.0
    %v2552 = vand.u32 %v2212, 4294901760
    %v2553 = vsub.f32 %v2212, %v2552
    %v2554 = vand.u32 %v2553, 4294901760
    %v2555 = vsub.f32 %v2553, %v2554
    %v2556 = vand.u32 %v2555, 4294901760
    %2557 = vmatpush2.msra.mxu0 %v2556
    %2558 = vmatprep.subr.mxu0 0.0
    %v2559 = vand.u32 %v2211, 4294901760
    %v2560 = vsub.f32 %v2211, %v2559
    %v2561 = vand.u32 %v2560, 4294901760
    %v2562 = vsub.f32 %v2560, %v2561
    %v2563 = vand.u32 %v2562, 4294901760
    %2564 = vmatpush2.msra.mxu0 %v2563
    %2565 = vmatprep.subr.mxu0 0.0
    %v2566 = vand.u32 %v2210, 4294901760
    %v2567 = vsub.f32 %v2210, %v2566
    %v2568 = vand.u32 %v2567, 4294901760
    %v2569 = vsub.f32 %v2567, %v2568
    %v2570 = vand.u32 %v2569, 4294901760
    %2571 = vmatpush2.msra.mxu0 %v2570
    %2572 = vmatprep.subr.mxu0 0.0
    %v2573 = vand.u32 %v2209, 4294901760
    %v2574 = vsub.f32 %v2209, %v2573
    %v2575 = vand.u32 %v2574, 4294901760
    %v2576 = vsub.f32 %v2574, %v2575
    %v2577 = vand.u32 %v2576, 4294901760
    %2578 = vmatpush2.msra.mxu0 %v2577
    %2579 = vmatprep.subr.mxu0 0.0
    %v2580 = vand.u32 %v2208, 4294901760
    %v2581 = vsub.f32 %v2208, %v2580
    %v2582 = vand.u32 %v2581, 4294901760
    %v2583 = vsub.f32 %v2581, %v2582
    %v2584 = vand.u32 %v2583, 4294901760
    %2585 = vmatpush2.msra.mxu0 %v2584
    %v2586 = vand.u32 %v2145, 4294901760
    %2587 = vmatprep.mubr.f32.mxu0 %v2586
    %v2588 = vand.u32 %v2144, 4294901760
    %2589 = vmatmul.mubr.f32.gmra.mxu0 %v2588
    %v2590 = vpop.f32.mrf.mxu0
    %v2591 = vadd.f32 %v2344, %v2590
    %v2592 = vpop.f32.mrf.mxu0
    %v2593 = vand.u32 %v2189, 4294901760
    %2594 = vmatprep.mubr.f32.mxu0 %v2593
    %v2595 = vand.u32 %v2188, 4294901760
    %2596 = vmatmul.mubr.f32.gmra.mxu0 %v2595
    %v2597 = vpop.f32.mrf.mxu0
    %v2598 = vadd.f32 %v2359, %v2597
    %v2599 = vpop.f32.mrf.mxu0
    %2600 = vdwg.mxu0
    %2601 = vmatprep.subr.mxu0 0.0
    %v2602 = vand.u32 %v2207, 4294901760
    %v2603 = vsub.f32 %v2207, %v2602
    %2604 = vmatpush1.msra.mxu0 %v2603
    %2605 = vmatprep.subr.mxu0 0.0
    %v2606 = vand.u32 %v2206, 4294901760
    %v2607 = vsub.f32 %v2206, %v2606
    %2608 = vmatpush1.msra.mxu0 %v2607
    %2609 = vmatprep.subr.mxu0 0.0
    %v2610 = vand.u32 %v2205, 4294901760
    %v2611 = vsub.f32 %v2205, %v2610
    %2612 = vmatpush1.msra.mxu0 %v2611
    %2613 = vmatprep.subr.mxu0 0.0
    %v2614 = vand.u32 %v2204, 4294901760
    %v2615 = vsub.f32 %v2204, %v2614
    %2616 = vmatpush1.msra.mxu0 %v2615
    %2617 = vmatprep.subr.mxu0 0.0
    %v2618 = vand.u32 %v2203, 4294901760
    %v2619 = vsub.f32 %v2203, %v2618
    %2620 = vmatpush1.msra.mxu0 %v2619
    %2621 = vmatprep.subr.mxu0 0.0
    %v2622 = vand.u32 %v2202, 4294901760
    %v2623 = vsub.f32 %v2202, %v2622
    %2624 = vmatpush1.msra.mxu0 %v2623
    %2625 = vmatprep.subr.mxu0 0.0
    %v2626 = vand.u32 %v2201, 4294901760
    %v2627 = vsub.f32 %v2201, %v2626
    %2628 = vmatpush1.msra.mxu0 %v2627
    %2629 = vmatprep.subr.mxu0 0.0
    %v2630 = vand.u32 %v2200, 4294901760
    %v2631 = vsub.f32 %v2200, %v2630
    %2632 = vmatpush1.msra.mxu0 %v2631
    %2633 = vmatprep.subr.mxu0 0.0
    %v2634 = vand.u32 %v2199, 4294901760
    %v2635 = vsub.f32 %v2199, %v2634
    %2636 = vmatpush1.msra.mxu0 %v2635
    %2637 = vmatprep.subr.mxu0 0.0
    %v2638 = vand.u32 %v2198, 4294901760
    %v2639 = vsub.f32 %v2198, %v2638
    %2640 = vmatpush1.msra.mxu0 %v2639
    %2641 = vmatprep.subr.mxu0 0.0
    %v2642 = vand.u32 %v2197, 4294901760
    %v2643 = vsub.f32 %v2197, %v2642
    %2644 = vmatpush1.msra.mxu0 %v2643
    %2645 = vmatprep.subr.mxu0 0.0
    %v2646 = vand.u32 %v2196, 4294901760
    %v2647 = vsub.f32 %v2196, %v2646
    %2648 = vmatpush1.msra.mxu0 %v2647
    %2649 = vmatprep.subr.mxu0 0.0
    %v2650 = vand.u32 %v2195, 4294901760
    %v2651 = vsub.f32 %v2195, %v2650
    %2652 = vmatpush1.msra.mxu0 %v2651
    %2653 = vmatprep.subr.mxu0 0.0
    %v2654 = vand.u32 %v2194, 4294901760
    %v2655 = vsub.f32 %v2194, %v2654
    %2656 = vmatpush1.msra.mxu0 %v2655
    %2657 = vmatprep.subr.mxu0 0.0
    %v2658 = vand.u32 %v2193, 4294901760
    %v2659 = vsub.f32 %v2193, %v2658
    %2660 = vmatpush1.msra.mxu0 %v2659
    %2661 = vmatprep.subr.mxu0 0.0
    %v2662 = vand.u32 %v2192, 4294901760
    %v2663 = vsub.f32 %v2192, %v2662
    %2664 = vmatpush1.msra.mxu0 %v2663
    %2665 = vmatprep.subr.mxu0 0.0
    %v2666 = vand.u32 %v2223, 4294901760
    %v2667 = vsub.f32 %v2223, %v2666
    %2668 = vmatpush2.msra.mxu0 %v2667
    %2669 = vmatprep.subr.mxu0 0.0
    %v2670 = vand.u32 %v2222, 4294901760
    %v2671 = vsub.f32 %v2222, %v2670
    %2672 = vmatpush2.msra.mxu0 %v2671
    %2673 = vmatprep.subr.mxu0 0.0
    %v2674 = vand.u32 %v2221, 4294901760
    %v2675 = vsub.f32 %v2221, %v2674
    %2676 = vmatpush2.msra.mxu0 %v2675
    %2677 = vmatprep.subr.mxu0 0.0
    %v2678 = vand.u32 %v2220, 4294901760
    %v2679 = vsub.f32 %v2220, %v2678
    %2680 = vmatpush2.msra.mxu0 %v2679
    %2681 = vmatprep.subr.mxu0 0.0
    %v2682 = vand.u32 %v2219, 4294901760
    %v2683 = vsub.f32 %v2219, %v2682
    %2684 = vmatpush2.msra.mxu0 %v2683
    %2685 = vmatprep.subr.mxu0 0.0
    %v2686 = vand.u32 %v2218, 4294901760
    %v2687 = vsub.f32 %v2218, %v2686
    %2688 = vmatpush2.msra.mxu0 %v2687
    %2689 = vmatprep.subr.mxu0 0.0
    %v2690 = vand.u32 %v2217, 4294901760
    %v2691 = vsub.f32 %v2217, %v2690
    %2692 = vmatpush2.msra.mxu0 %v2691
    %2693 = vmatprep.subr.mxu0 0.0
    %v2694 = vand.u32 %v2216, 4294901760
    %v2695 = vsub.f32 %v2216, %v2694
    %2696 = vmatpush2.msra.mxu0 %v2695
    %2697 = vmatprep.subr.mxu0 0.0
    %v2698 = vand.u32 %v2215, 4294901760
    %v2699 = vsub.f32 %v2215, %v2698
    %2700 = vmatpush2.msra.mxu0 %v2699
    %2701 = vmatprep.subr.mxu0 0.0
    %v2702 = vand.u32 %v2214, 4294901760
    %v2703 = vsub.f32 %v2214, %v2702
    %2704 = vmatpush2.msra.mxu0 %v2703
    %2705 = vmatprep.subr.mxu0 0.0
    %v2706 = vand.u32 %v2213, 4294901760
    %v2707 = vsub.f32 %v2213, %v2706
    %2708 = vmatpush2.msra.mxu0 %v2707
    %2709 = vmatprep.subr.mxu0 0.0
    %v2710 = vand.u32 %v2212, 4294901760
    %v2711 = vsub.f32 %v2212, %v2710
    %2712 = vmatpush2.msra.mxu0 %v2711
    %2713 = vmatprep.subr.mxu0 0.0
    %v2714 = vand.u32 %v2211, 4294901760
    %v2715 = vsub.f32 %v2211, %v2714
    %2716 = vmatpush2.msra.mxu0 %v2715
    %2717 = vmatprep.subr.mxu0 0.0
    %v2718 = vand.u32 %v2210, 4294901760
    %v2719 = vsub.f32 %v2210, %v2718
    %2720 = vmatpush2.msra.mxu0 %v2719
    %2721 = vmatprep.subr.mxu0 0.0
    %v2722 = vand.u32 %v2209, 4294901760
    %v2723 = vsub.f32 %v2209, %v2722
    %2724 = vmatpush2.msra.mxu0 %v2723
    %2725 = vmatprep.subr.mxu0 0.0
    %v2726 = vand.u32 %v2208, 4294901760
    %v2727 = vsub.f32 %v2208, %v2726
    %2728 = vmatpush2.msra.mxu0 %v2727
    %v2729 = vand.u32 %v2145, 4294901760
    %v2730 = vsub.f32 %v2145, %v2729
    %2731 = vmatprep.mubr.f32.mxu0 %v2730
    %v2732 = vand.u32 %v2144, 4294901760
    %v2733 = vsub.f32 %v2144, %v2732
    %2734 = vmatmul.mubr.f32.gmra.mxu0 %v2733
    %v2735 = vpop.f32.mrf.mxu0
    %v2736 = vadd.f32 %v2591, %v2735
    %v2737 = vpop.f32.mrf.mxu0
    %v2738 = vand.u32 %v2189, 4294901760
    %v2739 = vsub.f32 %v2189, %v2738
    %2740 = vmatprep.mubr.f32.mxu0 %v2739
    %v2741 = vand.u32 %v2188, 4294901760
    %v2742 = vsub.f32 %v2188, %v2741
    %2743 = vmatmul.mubr.f32.gmra.mxu0 %v2742
    %v2744 = vpop.f32.mrf.mxu0
    %v2745 = vadd.f32 %v2598, %v2744
    %v2746 = vpop.f32.mrf.mxu0
    %2747 = vdwg.mxu0
    %2748 = vmatprep.subr.mxu0 0.0
    %v2749 = vand.u32 %v2207, 4294901760
    %2750 = vmatpush1.msra.mxu0 %v2749
    %2751 = vmatprep.subr.mxu0 0.0
    %v2752 = vand.u32 %v2206, 4294901760
    %2753 = vmatpush1.msra.mxu0 %v2752
    %2754 = vmatprep.subr.mxu0 0.0
    %v2755 = vand.u32 %v2205, 4294901760
    %2756 = vmatpush1.msra.mxu0 %v2755
    %2757 = vmatprep.subr.mxu0 0.0
    %v2758 = vand.u32 %v2204, 4294901760
    %2759 = vmatpush1.msra.mxu0 %v2758
    %2760 = vmatprep.subr.mxu0 0.0
    %v2761 = vand.u32 %v2203, 4294901760
    %2762 = vmatpush1.msra.mxu0 %v2761
    %2763 = vmatprep.subr.mxu0 0.0
    %v2764 = vand.u32 %v2202, 4294901760
    %2765 = vmatpush1.msra.mxu0 %v2764
    %2766 = vmatprep.subr.mxu0 0.0
    %v2767 = vand.u32 %v2201, 4294901760
    %2768 = vmatpush1.msra.mxu0 %v2767
    %2769 = vmatprep.subr.mxu0 0.0
    %v2770 = vand.u32 %v2200, 4294901760
    %2771 = vmatpush1.msra.mxu0 %v2770
    %2772 = vmatprep.subr.mxu0 0.0
    %v2773 = vand.u32 %v2199, 4294901760
    %2774 = vmatpush1.msra.mxu0 %v2773
    %2775 = vmatprep.subr.mxu0 0.0
    %v2776 = vand.u32 %v2198, 4294901760
    %2777 = vmatpush1.msra.mxu0 %v2776
    %2778 = vmatprep.subr.mxu0 0.0
    %v2779 = vand.u32 %v2197, 4294901760
    %2780 = vmatpush1.msra.mxu0 %v2779
    %2781 = vmatprep.subr.mxu0 0.0
    %v2782 = vand.u32 %v2196, 4294901760
    %2783 = vmatpush1.msra.mxu0 %v2782
    %2784 = vmatprep.subr.mxu0 0.0
    %v2785 = vand.u32 %v2195, 4294901760
    %2786 = vmatpush1.msra.mxu0 %v2785
    %2787 = vmatprep.subr.mxu0 0.0
    %v2788 = vand.u32 %v2194, 4294901760
    %2789 = vmatpush1.msra.mxu0 %v2788
    %2790 = vmatprep.subr.mxu0 0.0
    %v2791 = vand.u32 %v2193, 4294901760
    %2792 = vmatpush1.msra.mxu0 %v2791
    %2793 = vmatprep.subr.mxu0 0.0
    %v2794 = vand.u32 %v2192, 4294901760
    %2795 = vmatpush1.msra.mxu0 %v2794
    %2796 = vmatprep.subr.mxu0 0.0
    %v2797 = vand.u32 %v2223, 4294901760
    %2798 = vmatpush2.msra.mxu0 %v2797
    %2799 = vmatprep.subr.mxu0 0.0
    %v2800 = vand.u32 %v2222, 4294901760
    %2801 = vmatpush2.msra.mxu0 %v2800
    %2802 = vmatprep.subr.mxu0 0.0
    %v2803 = vand.u32 %v2221, 4294901760
    %2804 = vmatpush2.msra.mxu0 %v2803
    %2805 = vmatprep.subr.mxu0 0.0
    %v2806 = vand.u32 %v2220, 4294901760
    %2807 = vmatpush2.msra.mxu0 %v2806
    %2808 = vmatprep.subr.mxu0 0.0
    %v2809 = vand.u32 %v2219, 4294901760
    %2810 = vmatpush2.msra.mxu0 %v2809
    %2811 = vmatprep.subr.mxu0 0.0
    %v2812 = vand.u32 %v2218, 4294901760
    %2813 = vmatpush2.msra.mxu0 %v2812
    %2814 = vmatprep.subr.mxu0 0.0
    %v2815 = vand.u32 %v2217, 4294901760
    %2816 = vmatpush2.msra.mxu0 %v2815
    %2817 = vmatprep.subr.mxu0 0.0
    %v2818 = vand.u32 %v2216, 4294901760
    %2819 = vmatpush2.msra.mxu0 %v2818
    %2820 = vmatprep.subr.mxu0 0.0
    %v2821 = vand.u32 %v2215, 4294901760
    %2822 = vmatpush2.msra.mxu0 %v2821
    %2823 = vmatprep.subr.mxu0 0.0
    %v2824 = vand.u32 %v2214, 4294901760
    %2825 = vmatpush2.msra.mxu0 %v2824
    %2826 = vmatprep.subr.mxu0 0.0
    %v2827 = vand.u32 %v2213, 4294901760
    %2828 = vmatpush2.msra.mxu0 %v2827
    %2829 = vmatprep.subr.mxu0 0.0
    %v2830 = vand.u32 %v2212, 4294901760
    %2831 = vmatpush2.msra.mxu0 %v2830
    %2832 = vmatprep.subr.mxu0 0.0
    %v2833 = vand.u32 %v2211, 4294901760
    %2834 = vmatpush2.msra.mxu0 %v2833
    %2835 = vmatprep.subr.mxu0 0.0
    %v2836 = vand.u32 %v2210, 4294901760
    %2837 = vmatpush2.msra.mxu0 %v2836
    %2838 = vmatprep.subr.mxu0 0.0
    %v2839 = vand.u32 %v2209, 4294901760
    %2840 = vmatpush2.msra.mxu0 %v2839
    %2841 = vmatprep.subr.mxu0 0.0
    %v2842 = vand.u32 %v2208, 4294901760
    %2843 = vmatpush2.msra.mxu0 %v2842
    %v2844 = vand.u32 %v2145, 4294901760
    %v2845 = vsub.f32 %v2145, %v2844
    %v2846 = vand.u32 %v2845, 4294901760
    %2847 = vmatprep.mubr.f32.mxu0 %v2846
    %v2848 = vand.u32 %v2144, 4294901760
    %v2849 = vsub.f32 %v2144, %v2848
    %v2850 = vand.u32 %v2849, 4294901760
    %2851 = vmatmul.mubr.f32.gmra.mxu0 %v2850
    %v2852 = vpop.f32.mrf.mxu0
    %v2853 = vadd.f32 %v2736, %v2852
    %v2854 = vpop.f32.mrf.mxu0
    %v2855 = vand.u32 %v2189, 4294901760
    %v2856 = vsub.f32 %v2189, %v2855
    %v2857 = vand.u32 %v2856, 4294901760
    %2858 = vmatprep.mubr.f32.mxu0 %v2857
    %v2859 = vand.u32 %v2188, 4294901760
    %v2860 = vsub.f32 %v2188, %v2859
    %v2861 = vand.u32 %v2860, 4294901760
    %2862 = vmatmul.mubr.f32.gmra.mxu0 %v2861
    %v2863 = vpop.f32.mrf.mxu0
    %v2864 = vadd.f32 %v2745, %v2863
    %v2865 = vpop.f32.mrf.mxu0
    %2866 = vdwg.mxu0
    %2867 = vmatprep.subr.mxu0 0.0
    %v2868 = vand.u32 %v2207, 4294901760
    %v2869 = vsub.f32 %v2207, %v2868
    %v2870 = vand.u32 %v2869, 4294901760
    %2871 = vmatpush1.msra.mxu0 %v2870
    %2872 = vmatprep.subr.mxu0 0.0
    %v2873 = vand.u32 %v2206, 4294901760
    %v2874 = vsub.f32 %v2206, %v2873
    %v2875 = vand.u32 %v2874, 4294901760
    %2876 = vmatpush1.msra.mxu0 %v2875
    %2877 = vmatprep.subr.mxu0 0.0
    %v2878 = vand.u32 %v2205, 4294901760
    %v2879 = vsub.f32 %v2205, %v2878
    %v2880 = vand.u32 %v2879, 4294901760
    %2881 = vmatpush1.msra.mxu0 %v2880
    %2882 = vmatprep.subr.mxu0 0.0
    %v2883 = vand.u32 %v2204, 4294901760
    %v2884 = vsub.f32 %v2204, %v2883
    %v2885 = vand.u32 %v2884, 4294901760
    %2886 = vmatpush1.msra.mxu0 %v2885
    %2887 = vmatprep.subr.mxu0 0.0
    %v2888 = vand.u32 %v2203, 4294901760
    %v2889 = vsub.f32 %v2203, %v2888
    %v2890 = vand.u32 %v2889, 4294901760
    %2891 = vmatpush1.msra.mxu0 %v2890
    %2892 = vmatprep.subr.mxu0 0.0
    %v2893 = vand.u32 %v2202, 4294901760
    %v2894 = vsub.f32 %v2202, %v2893
    %v2895 = vand.u32 %v2894, 4294901760
    %2896 = vmatpush1.msra.mxu0 %v2895
    %2897 = vmatprep.subr.mxu0 0.0
    %v2898 = vand.u32 %v2201, 4294901760
    %v2899 = vsub.f32 %v2201, %v2898
    %v2900 = vand.u32 %v2899, 4294901760
    %2901 = vmatpush1.msra.mxu0 %v2900
    %2902 = vmatprep.subr.mxu0 0.0
    %v2903 = vand.u32 %v2200, 4294901760
    %v2904 = vsub.f32 %v2200, %v2903
    %v2905 = vand.u32 %v2904, 4294901760
    %2906 = vmatpush1.msra.mxu0 %v2905
    %2907 = vmatprep.subr.mxu0 0.0
    %v2908 = vand.u32 %v2199, 4294901760
    %v2909 = vsub.f32 %v2199, %v2908
    %v2910 = vand.u32 %v2909, 4294901760
    %2911 = vmatpush1.msra.mxu0 %v2910
    %2912 = vmatprep.subr.mxu0 0.0
    %v2913 = vand.u32 %v2198, 4294901760
    %v2914 = vsub.f32 %v2198, %v2913
    %v2915 = vand.u32 %v2914, 4294901760
    %2916 = vmatpush1.msra.mxu0 %v2915
    %2917 = vmatprep.subr.mxu0 0.0
    %v2918 = vand.u32 %v2197, 4294901760
    %v2919 = vsub.f32 %v2197, %v2918
    %v2920 = vand.u32 %v2919, 4294901760
    %2921 = vmatpush1.msra.mxu0 %v2920
    %2922 = vmatprep.subr.mxu0 0.0
    %v2923 = vand.u32 %v2196, 4294901760
    %v2924 = vsub.f32 %v2196, %v2923
    %v2925 = vand.u32 %v2924, 4294901760
    %2926 = vmatpush1.msra.mxu0 %v2925
    %2927 = vmatprep.subr.mxu0 0.0
    %v2928 = vand.u32 %v2195, 4294901760
    %v2929 = vsub.f32 %v2195, %v2928
    %v2930 = vand.u32 %v2929, 4294901760
    %2931 = vmatpush1.msra.mxu0 %v2930
    %2932 = vmatprep.subr.mxu0 0.0
    %v2933 = vand.u32 %v2194, 4294901760
    %v2934 = vsub.f32 %v2194, %v2933
    %v2935 = vand.u32 %v2934, 4294901760
    %2936 = vmatpush1.msra.mxu0 %v2935
    %2937 = vmatprep.subr.mxu0 0.0
    %v2938 = vand.u32 %v2193, 4294901760
    %v2939 = vsub.f32 %v2193, %v2938
    %v2940 = vand.u32 %v2939, 4294901760
    %2941 = vmatpush1.msra.mxu0 %v2940
    %2942 = vmatprep.subr.mxu0 0.0
    %v2943 = vand.u32 %v2192, 4294901760
    %v2944 = vsub.f32 %v2192, %v2943
    %v2945 = vand.u32 %v2944, 4294901760
    %2946 = vmatpush1.msra.mxu0 %v2945
    %2947 = vmatprep.subr.mxu0 0.0
    %v2948 = vand.u32 %v2223, 4294901760
    %v2949 = vsub.f32 %v2223, %v2948
    %v2950 = vand.u32 %v2949, 4294901760
    %2951 = vmatpush2.msra.mxu0 %v2950
    %2952 = vmatprep.subr.mxu0 0.0
    %v2953 = vand.u32 %v2222, 4294901760
    %v2954 = vsub.f32 %v2222, %v2953
    %v2955 = vand.u32 %v2954, 4294901760
    %2956 = vmatpush2.msra.mxu0 %v2955
    %2957 = vmatprep.subr.mxu0 0.0
    %v2958 = vand.u32 %v2221, 4294901760
    %v2959 = vsub.f32 %v2221, %v2958
    %v2960 = vand.u32 %v2959, 4294901760
    %2961 = vmatpush2.msra.mxu0 %v2960
    %2962 = vmatprep.subr.mxu0 0.0
    %v2963 = vand.u32 %v2220, 4294901760
    %v2964 = vsub.f32 %v2220, %v2963
    %v2965 = vand.u32 %v2964, 4294901760
    %2966 = vmatpush2.msra.mxu0 %v2965
    %2967 = vmatprep.subr.mxu0 0.0
    %v2968 = vand.u32 %v2219, 4294901760
    %v2969 = vsub.f32 %v2219, %v2968
    %v2970 = vand.u32 %v2969, 4294901760
    %2971 = vmatpush2.msra.mxu0 %v2970
    %2972 = vmatprep.subr.mxu0 0.0
    %v2973 = vand.u32 %v2218, 4294901760
    %v2974 = vsub.f32 %v2218, %v2973
    %v2975 = vand.u32 %v2974, 4294901760
    %2976 = vmatpush2.msra.mxu0 %v2975
    %2977 = vmatprep.subr.mxu0 0.0
    %v2978 = vand.u32 %v2217, 4294901760
    %v2979 = vsub.f32 %v2217, %v2978
    %v2980 = vand.u32 %v2979, 4294901760
    %2981 = vmatpush2.msra.mxu0 %v2980
    %2982 = vmatprep.subr.mxu0 0.0
    %v2983 = vand.u32 %v2216, 4294901760
    %v2984 = vsub.f32 %v2216, %v2983
    %v2985 = vand.u32 %v2984, 4294901760
    %2986 = vmatpush2.msra.mxu0 %v2985
    %2987 = vmatprep.subr.mxu0 0.0
    %v2988 = vand.u32 %v2215, 4294901760
    %v2989 = vsub.f32 %v2215, %v2988
    %v2990 = vand.u32 %v2989, 4294901760
    %2991 = vmatpush2.msra.mxu0 %v2990
    %2992 = vmatprep.subr.mxu0 0.0
    %v2993 = vand.u32 %v2214, 4294901760
    %v2994 = vsub.f32 %v2214, %v2993
    %v2995 = vand.u32 %v2994, 4294901760
    %2996 = vmatpush2.msra.mxu0 %v2995
    %2997 = vmatprep.subr.mxu0 0.0
    %v2998 = vand.u32 %v2213, 4294901760
    %v2999 = vsub.f32 %v2213, %v2998
    %v3000 = vand.u32 %v2999, 4294901760
    %3001 = vmatpush2.msra.mxu0 %v3000
    %3002 = vmatprep.subr.mxu0 0.0
    %v3003 = vand.u32 %v2212, 4294901760
    %v3004 = vsub.f32 %v2212, %v3003
    %v3005 = vand.u32 %v3004, 4294901760
    %3006 = vmatpush2.msra.mxu0 %v3005
    %3007 = vmatprep.subr.mxu0 0.0
    %v3008 = vand.u32 %v2211, 4294901760
    %v3009 = vsub.f32 %v2211, %v3008
    %v3010 = vand.u32 %v3009, 4294901760
    %3011 = vmatpush2.msra.mxu0 %v3010
    %3012 = vmatprep.subr.mxu0 0.0
    %v3013 = vand.u32 %v2210, 4294901760
    %v3014 = vsub.f32 %v2210, %v3013
    %v3015 = vand.u32 %v3014, 4294901760
    %3016 = vmatpush2.msra.mxu0 %v3015
    %3017 = vmatprep.subr.mxu0 0.0
    %v3018 = vand.u32 %v2209, 4294901760
    %v3019 = vsub.f32 %v2209, %v3018
    %v3020 = vand.u32 %v3019, 4294901760
    %3021 = vmatpush2.msra.mxu0 %v3020
    %3022 = vmatprep.subr.mxu0 0.0
    %v3023 = vand.u32 %v2208, 4294901760
    %v3024 = vsub.f32 %v2208, %v3023
    %v3025 = vand.u32 %v3024, 4294901760
    %3026 = vmatpush2.msra.mxu0 %v3025
    %v3027 = vand.u32 %v2145, 4294901760
    %3028 = vmatprep.mubr.f32.mxu0 %v3027
    %v3029 = vand.u32 %v2144, 4294901760
    %3030 = vmatmul.mubr.f32.gmra.mxu0 %v3029
    %v3031 = vpop.f32.mrf.mxu0
    %v3032 = vadd.f32 %v2853, %v3031
    %v3033 = vpop.f32.mrf.mxu0
    %v3034 = vand.u32 %v2189, 4294901760
    %3035 = vmatprep.mubr.f32.mxu0 %v3034
    %v3036 = vand.u32 %v2188, 4294901760
    %3037 = vmatmul.mubr.f32.gmra.mxu0 %v3036
    %v3038 = vpop.f32.mrf.mxu0
    %v3039 = vadd.f32 %v2864, %v3038
    %v3040 = vpop.f32.mrf.mxu0
    %3041 = vdwg.mxu0
    %3042 = vmatprep.subr.mxu0 0.0
    %v3043 = vand.u32 %v2207, 4294901760
    %3044 = vmatpush1.msra.mxu0 %v3043
    %3045 = vmatprep.subr.mxu0 0.0
    %v3046 = vand.u32 %v2206, 4294901760
    %3047 = vmatpush1.msra.mxu0 %v3046
    %3048 = vmatprep.subr.mxu0 0.0
    %v3049 = vand.u32 %v2205, 4294901760
    %3050 = vmatpush1.msra.mxu0 %v3049
    %3051 = vmatprep.subr.mxu0 0.0
    %v3052 = vand.u32 %v2204, 4294901760
    %3053 = vmatpush1.msra.mxu0 %v3052
    %3054 = vmatprep.subr.mxu0 0.0
    %v3055 = vand.u32 %v2203, 4294901760
    %3056 = vmatpush1.msra.mxu0 %v3055
    %3057 = vmatprep.subr.mxu0 0.0
    %v3058 = vand.u32 %v2202, 4294901760
    %3059 = vmatpush1.msra.mxu0 %v3058
    %3060 = vmatprep.subr.mxu0 0.0
    %v3061 = vand.u32 %v2201, 4294901760
    %3062 = vmatpush1.msra.mxu0 %v3061
    %3063 = vmatprep.subr.mxu0 0.0
    %v3064 = vand.u32 %v2200, 4294901760
    %3065 = vmatpush1.msra.mxu0 %v3064
    %3066 = vmatprep.subr.mxu0 0.0
    %v3067 = vand.u32 %v2199, 4294901760
    %3068 = vmatpush1.msra.mxu0 %v3067
    %3069 = vmatprep.subr.mxu0 0.0
    %v3070 = vand.u32 %v2198, 4294901760
    %3071 = vmatpush1.msra.mxu0 %v3070
    %3072 = vmatprep.subr.mxu0 0.0
    %v3073 = vand.u32 %v2197, 4294901760
    %3074 = vmatpush1.msra.mxu0 %v3073
    %3075 = vmatprep.subr.mxu0 0.0
    %v3076 = vand.u32 %v2196, 4294901760
    %3077 = vmatpush1.msra.mxu0 %v3076
    %3078 = vmatprep.subr.mxu0 0.0
    %v3079 = vand.u32 %v2195, 4294901760
    %3080 = vmatpush1.msra.mxu0 %v3079
    %3081 = vmatprep.subr.mxu0 0.0
    %v3082 = vand.u32 %v2194, 4294901760
    %3083 = vmatpush1.msra.mxu0 %v3082
    %3084 = vmatprep.subr.mxu0 0.0
    %v3085 = vand.u32 %v2193, 4294901760
    %3086 = vmatpush1.msra.mxu0 %v3085
    %3087 = vmatprep.subr.mxu0 0.0
    %v3088 = vand.u32 %v2192, 4294901760
    %3089 = vmatpush1.msra.mxu0 %v3088
    %3090 = vmatprep.subr.mxu0 0.0
    %v3091 = vand.u32 %v2223, 4294901760
    %3092 = vmatpush2.msra.mxu0 %v3091
    %3093 = vmatprep.subr.mxu0 0.0
    %v3094 = vand.u32 %v2222, 4294901760
    %3095 = vmatpush2.msra.mxu0 %v3094
    %3096 = vmatprep.subr.mxu0 0.0
    %v3097 = vand.u32 %v2221, 4294901760
    %3098 = vmatpush2.msra.mxu0 %v3097
    %3099 = vmatprep.subr.mxu0 0.0
    %v3100 = vand.u32 %v2220, 4294901760
    %3101 = vmatpush2.msra.mxu0 %v3100
    %3102 = vmatprep.subr.mxu0 0.0
    %v3103 = vand.u32 %v2219, 4294901760
    %3104 = vmatpush2.msra.mxu0 %v3103
    %3105 = vmatprep.subr.mxu0 0.0
    %v3106 = vand.u32 %v2218, 4294901760
    %3107 = vmatpush2.msra.mxu0 %v3106
    %3108 = vmatprep.subr.mxu0 0.0
    %v3109 = vand.u32 %v2217, 4294901760
    %3110 = vmatpush2.msra.mxu0 %v3109
    %3111 = vmatprep.subr.mxu0 0.0
    %v3112 = vand.u32 %v2216, 4294901760
    %3113 = vmatpush2.msra.mxu0 %v3112
    %3114 = vmatprep.subr.mxu0 0.0
    %v3115 = vand.u32 %v2215, 4294901760
    %3116 = vmatpush2.msra.mxu0 %v3115
    %3117 = vmatprep.subr.mxu0 0.0
    %v3118 = vand.u32 %v2214, 4294901760
    %3119 = vmatpush2.msra.mxu0 %v3118
    %3120 = vmatprep.subr.mxu0 0.0
    %v3121 = vand.u32 %v2213, 4294901760
    %3122 = vmatpush2.msra.mxu0 %v3121
    %3123 = vmatprep.subr.mxu0 0.0
    %v3124 = vand.u32 %v2212, 4294901760
    %3125 = vmatpush2.msra.mxu0 %v3124
    %3126 = vmatprep.subr.mxu0 0.0
    %v3127 = vand.u32 %v2211, 4294901760
    %3128 = vmatpush2.msra.mxu0 %v3127
    %3129 = vmatprep.subr.mxu0 0.0
    %v3130 = vand.u32 %v2210, 4294901760
    %3131 = vmatpush2.msra.mxu0 %v3130
    %3132 = vmatprep.subr.mxu0 0.0
    %v3133 = vand.u32 %v2209, 4294901760
    %3134 = vmatpush2.msra.mxu0 %v3133
    %3135 = vmatprep.subr.mxu0 0.0
    %v3136 = vand.u32 %v2208, 4294901760
    %3137 = vmatpush2.msra.mxu0 %v3136
    %v3138 = vand.u32 %v2145, 4294901760
    %3139 = vmatprep.mubr.f32.mxu0 %v3138
    %v3140 = vand.u32 %v2144, 4294901760
    %3141 = vmatmul.mubr.f32.gmra.mxu0 %v3140
    %v3142 = vpop.f32.mrf.mxu0
    %v3143 = vadd.f32 %v3032, %v3142
    %v3144 = vpop.f32.mrf.mxu0
    %v3145 = vand.u32 %v2189, 4294901760
    %3146 = vmatprep.mubr.f32.mxu0 %v3145
    %v3147 = vand.u32 %v2188, 4294901760
    %3148 = vmatmul.mubr.f32.gmra.mxu0 %v3147
    %v3149 = vpop.f32.mrf.mxu0
    %v3150 = vadd.f32 %v3039, %v3149
    %v3151 = vpop.f32.mrf.mxu0
    %3152 = vdwg.mxu0
    %3153 = vmatprep.subr.mxu0 0.0
    %3154 = vmatpush1.msra.mxu0 0.0
    %3155 = vmatprep.subr.mxu0 0.0
    %3156 = vmatpush1.msra.mxu0 0.0
    %3157 = vmatprep.subr.mxu0 0.0
    %3158 = vmatpush1.msra.mxu0 0.0
    %3159 = vmatprep.subr.mxu0 0.0
    %3160 = vmatpush1.msra.mxu0 0.0
    %3161 = vmatprep.subr.mxu0 0.0
    %3162 = vmatpush1.msra.mxu0 0.0
    %3163 = vmatprep.subr.mxu0 0.0
    %3164 = vmatpush1.msra.mxu0 0.0
    %3165 = vmatprep.subr.mxu0 0.0
    %3166 = vmatpush1.msra.mxu0 0.0
    %3167 = vmatprep.subr.mxu0 0.0
    %3168 = vmatpush1.msra.mxu0 0.0
    %3169 = vmatprep.subr.mxu0 0.0
    %3170 = vmatpush1.msra.mxu0 0.0
    %3171 = vmatprep.subr.mxu0 0.0
    %3172 = vmatpush1.msra.mxu0 0.0
    %3173 = vmatprep.subr.mxu0 0.0
    %3174 = vmatpush1.msra.mxu0 0.0
    %3175 = vmatprep.subr.mxu0 0.0
    %3176 = vmatpush1.msra.mxu0 0.0
    %3177 = vmatprep.subr.mxu0 0.0
    %3178 = vmatpush1.msra.mxu0 0.0
    %3179 = vmatprep.subr.mxu0 0.0
    %3180 = vmatpush1.msra.mxu0 0.0
    %3181 = vmatprep.subr.mxu0 0.0
    %v3182 = vand.u32 %v2233, 4294901760
    %3183 = vmatpush1.msra.mxu0 %v3182
    %3184 = vmatprep.subr.mxu0 0.0
    %v3185 = vand.u32 %v2224, 4294901760
    %3186 = vmatpush1.msra.mxu0 %v3185
    %3187 = vmatprep.subr.mxu0 0.0
    %3188 = vmatpush2.msra.mxu0 0.0
    %3189 = vmatprep.subr.mxu0 0.0
    %3190 = vmatpush2.msra.mxu0 0.0
    %3191 = vmatprep.subr.mxu0 0.0
    %3192 = vmatpush2.msra.mxu0 0.0
    %3193 = vmatprep.subr.mxu0 0.0
    %3194 = vmatpush2.msra.mxu0 0.0
    %3195 = vmatprep.subr.mxu0 0.0
    %3196 = vmatpush2.msra.mxu0 0.0
    %3197 = vmatprep.subr.mxu0 0.0
    %3198 = vmatpush2.msra.mxu0 0.0
    %3199 = vmatprep.subr.mxu0 0.0
    %3200 = vmatpush2.msra.mxu0 0.0
    %3201 = vmatprep.subr.mxu0 0.0
    %3202 = vmatpush2.msra.mxu0 0.0
    %3203 = vmatprep.subr.mxu0 0.0
    %3204 = vmatpush2.msra.mxu0 0.0
    %3205 = vmatprep.subr.mxu0 0.0
    %3206 = vmatpush2.msra.mxu0 0.0
    %3207 = vmatprep.subr.mxu0 0.0
    %3208 = vmatpush2.msra.mxu0 0.0
    %3209 = vmatprep.subr.mxu0 0.0
    %3210 = vmatpush2.msra.mxu0 0.0
    %3211 = vmatprep.subr.mxu0 0.0
    %3212 = vmatpush2.msra.mxu0 0.0
    %3213 = vmatprep.subr.mxu0 0.0
    %3214 = vmatpush2.msra.mxu0 0.0
    %3215 = vmatprep.subr.mxu0 0.0
    %3216 = vmatpush2.msra.mxu0 0.0
    %3217 = vmatprep.subr.mxu0 0.0
    %3218 = vmatpush2.msra.mxu0 0.0
    %3219 = vmatprep.mubr.f32.mxu0 0.0
    %v3220 = vand.u32 %v2227, 4294901760
    %v3221 = vsub.f32 %v2227, %v3220
    %v3222 = vand.u32 %v3221, 4294901760
    %v3223 = vsub.f32 %v3221, %v3222
    %v3224 = vand.u32 %v3223, 4294901760
    %3225 = vmatmul.mubr.f32.gmra.mxu0 %v3224
    %v3226 = vpop.f32.mrf.mxu0
    %v3227 = vadd.f32 %v3143, %v3226
    %v3228 = vpop.f32.mrf.mxu0
    %3229 = vmatprep.mubr.f32.mxu0 0.0
    %v3230 = vand.u32 %v2229, 4294901760
    %v3231 = vsub.f32 %v2229, %v3230
    %v3232 = vand.u32 %v3231, 4294901760
    %v3233 = vsub.f32 %v3231, %v3232
    %v3234 = vand.u32 %v3233, 4294901760
    %3235 = vmatmul.mubr.f32.gmra.mxu0 %v3234
    %v3236 = vpop.f32.mrf.mxu0
    %v3237 = vadd.f32 %v3150, %v3236
    %v3238 = vpop.f32.mrf.mxu0
    %3239 = vdwg.mxu0
    %3240 = vmatprep.subr.mxu0 0.0
    %3241 = vmatpush1.msra.mxu0 0.0
    %3242 = vmatprep.subr.mxu0 0.0
    %3243 = vmatpush1.msra.mxu0 0.0
    %3244 = vmatprep.subr.mxu0 0.0
    %3245 = vmatpush1.msra.mxu0 0.0
    %3246 = vmatprep.subr.mxu0 0.0
    %3247 = vmatpush1.msra.mxu0 0.0
    %3248 = vmatprep.subr.mxu0 0.0
    %3249 = vmatpush1.msra.mxu0 0.0
    %3250 = vmatprep.subr.mxu0 0.0
    %3251 = vmatpush1.msra.mxu0 0.0
    %3252 = vmatprep.subr.mxu0 0.0
    %3253 = vmatpush1.msra.mxu0 0.0
    %3254 = vmatprep.subr.mxu0 0.0
    %3255 = vmatpush1.msra.mxu0 0.0
    %3256 = vmatprep.subr.mxu0 0.0
    %3257 = vmatpush1.msra.mxu0 0.0
    %3258 = vmatprep.subr.mxu0 0.0
    %3259 = vmatpush1.msra.mxu0 0.0
    %3260 = vmatprep.subr.mxu0 0.0
    %3261 = vmatpush1.msra.mxu0 0.0
    %3262 = vmatprep.subr.mxu0 0.0
    %3263 = vmatpush1.msra.mxu0 0.0
    %3264 = vmatprep.subr.mxu0 0.0
    %3265 = vmatpush1.msra.mxu0 0.0
    %3266 = vmatprep.subr.mxu0 0.0
    %3267 = vmatpush1.msra.mxu0 0.0
    %3268 = vmatprep.subr.mxu0 0.0
    %v3269 = vand.u32 %v2233, 4294901760
    %v3270 = vsub.f32 %v2233, %v3269
    %v3271 = vand.u32 %v3270, 4294901760
    %v3272 = vsub.f32 %v3270, %v3271
    %v3273 = vand.u32 %v3272, 4294901760
    %3274 = vmatpush1.msra.mxu0 %v3273
    %3275 = vmatprep.subr.mxu0 0.0
    %v3276 = vand.u32 %v2224, 4294901760
    %v3277 = vsub.f32 %v2224, %v3276
    %v3278 = vand.u32 %v3277, 4294901760
    %v3279 = vsub.f32 %v3277, %v3278
    %v3280 = vand.u32 %v3279, 4294901760
    %3281 = vmatpush1.msra.mxu0 %v3280
    %3282 = vmatprep.subr.mxu0 0.0
    %3283 = vmatpush2.msra.mxu0 0.0
    %3284 = vmatprep.subr.mxu0 0.0
    %3285 = vmatpush2.msra.mxu0 0.0
    %3286 = vmatprep.subr.mxu0 0.0
    %3287 = vmatpush2.msra.mxu0 0.0
    %3288 = vmatprep.subr.mxu0 0.0
    %3289 = vmatpush2.msra.mxu0 0.0
    %3290 = vmatprep.subr.mxu0 0.0
    %3291 = vmatpush2.msra.mxu0 0.0
    %3292 = vmatprep.subr.mxu0 0.0
    %3293 = vmatpush2.msra.mxu0 0.0
    %3294 = vmatprep.subr.mxu0 0.0
    %3295 = vmatpush2.msra.mxu0 0.0
    %3296 = vmatprep.subr.mxu0 0.0
    %3297 = vmatpush2.msra.mxu0 0.0
    %3298 = vmatprep.subr.mxu0 0.0
    %3299 = vmatpush2.msra.mxu0 0.0
    %3300 = vmatprep.subr.mxu0 0.0
    %3301 = vmatpush2.msra.mxu0 0.0
    %3302 = vmatprep.subr.mxu0 0.0
    %3303 = vmatpush2.msra.mxu0 0.0
    %3304 = vmatprep.subr.mxu0 0.0
    %3305 = vmatpush2.msra.mxu0 0.0
    %3306 = vmatprep.subr.mxu0 0.0
    %3307 = vmatpush2.msra.mxu0 0.0
    %3308 = vmatprep.subr.mxu0 0.0
    %3309 = vmatpush2.msra.mxu0 0.0
    %3310 = vmatprep.subr.mxu0 0.0
    %3311 = vmatpush2.msra.mxu0 0.0
    %3312 = vmatprep.subr.mxu0 0.0
    %3313 = vmatpush2.msra.mxu0 0.0
    %3314 = vmatprep.mubr.f32.mxu0 0.0
    %v3315 = vand.u32 %v2227, 4294901760
    %3316 = vmatmul.mubr.f32.gmra.mxu0 %v3315
    %v3317 = vpop.f32.mrf.mxu0
    %v3318 = vadd.f32 %v3227, %v3317
    %v3319 = vpop.f32.mrf.mxu0
    %3320 = vmatprep.mubr.f32.mxu0 0.0
    %v3321 = vand.u32 %v2229, 4294901760
    %3322 = vmatmul.mubr.f32.gmra.mxu0 %v3321
    %v3323 = vpop.f32.mrf.mxu0
    %v3324 = vadd.f32 %v3237, %v3323
    %v3325 = vpop.f32.mrf.mxu0
    %3326 = vdwg.mxu0
    %3327 = vmatprep.subr.mxu0 0.0
    %3328 = vmatpush1.msra.mxu0 0.0
    %3329 = vmatprep.subr.mxu0 0.0
    %3330 = vmatpush1.msra.mxu0 0.0
    %3331 = vmatprep.subr.mxu0 0.0
    %3332 = vmatpush1.msra.mxu0 0.0
    %3333 = vmatprep.subr.mxu0 0.0
    %3334 = vmatpush1.msra.mxu0 0.0
    %3335 = vmatprep.subr.mxu0 0.0
    %3336 = vmatpush1.msra.mxu0 0.0
    %3337 = vmatprep.subr.mxu0 0.0
    %3338 = vmatpush1.msra.mxu0 0.0
    %3339 = vmatprep.subr.mxu0 0.0
    %3340 = vmatpush1.msra.mxu0 0.0
    %3341 = vmatprep.subr.mxu0 0.0
    %3342 = vmatpush1.msra.mxu0 0.0
    %3343 = vmatprep.subr.mxu0 0.0
    %3344 = vmatpush1.msra.mxu0 0.0
    %3345 = vmatprep.subr.mxu0 0.0
    %3346 = vmatpush1.msra.mxu0 0.0
    %3347 = vmatprep.subr.mxu0 0.0
    %3348 = vmatpush1.msra.mxu0 0.0
    %3349 = vmatprep.subr.mxu0 0.0
    %3350 = vmatpush1.msra.mxu0 0.0
    %3351 = vmatprep.subr.mxu0 0.0
    %3352 = vmatpush1.msra.mxu0 0.0
    %3353 = vmatprep.subr.mxu0 0.0
    %3354 = vmatpush1.msra.mxu0 0.0
    %3355 = vmatprep.subr.mxu0 0.0
    %v3356 = vand.u32 %v2233, 4294901760
    %v3357 = vsub.f32 %v2233, %v3356
    %3358 = vmatpush1.msra.mxu0 %v3357
    %3359 = vmatprep.subr.mxu0 0.0
    %v3360 = vand.u32 %v2224, 4294901760
    %v3361 = vsub.f32 %v2224, %v3360
    %3362 = vmatpush1.msra.mxu0 %v3361
    %3363 = vmatprep.subr.mxu0 0.0
    %3364 = vmatpush2.msra.mxu0 0.0
    %3365 = vmatprep.subr.mxu0 0.0
    %3366 = vmatpush2.msra.mxu0 0.0
    %3367 = vmatprep.subr.mxu0 0.0
    %3368 = vmatpush2.msra.mxu0 0.0
    %3369 = vmatprep.subr.mxu0 0.0
    %3370 = vmatpush2.msra.mxu0 0.0
    %3371 = vmatprep.subr.mxu0 0.0
    %3372 = vmatpush2.msra.mxu0 0.0
    %3373 = vmatprep.subr.mxu0 0.0
    %3374 = vmatpush2.msra.mxu0 0.0
    %3375 = vmatprep.subr.mxu0 0.0
    %3376 = vmatpush2.msra.mxu0 0.0
    %3377 = vmatprep.subr.mxu0 0.0
    %3378 = vmatpush2.msra.mxu0 0.0
    %3379 = vmatprep.subr.mxu0 0.0
    %3380 = vmatpush2.msra.mxu0 0.0
    %3381 = vmatprep.subr.mxu0 0.0
    %3382 = vmatpush2.msra.mxu0 0.0
    %3383 = vmatprep.subr.mxu0 0.0
    %3384 = vmatpush2.msra.mxu0 0.0
    %3385 = vmatprep.subr.mxu0 0.0
    %3386 = vmatpush2.msra.mxu0 0.0
    %3387 = vmatprep.subr.mxu0 0.0
    %3388 = vmatpush2.msra.mxu0 0.0
    %3389 = vmatprep.subr.mxu0 0.0
    %3390 = vmatpush2.msra.mxu0 0.0
    %3391 = vmatprep.subr.mxu0 0.0
    %3392 = vmatpush2.msra.mxu0 0.0
    %3393 = vmatprep.subr.mxu0 0.0
    %3394 = vmatpush2.msra.mxu0 0.0
    %3395 = vmatprep.mubr.f32.mxu0 0.0
    %v3396 = vand.u32 %v2227, 4294901760
    %v3397 = vsub.f32 %v2227, %v3396
    %3398 = vmatmul.mubr.f32.gmra.mxu0 %v3397
    %v3399 = vpop.f32.mrf.mxu0
    %v3400 = vadd.f32 %v3318, %v3399
    %v3401 = vpop.f32.mrf.mxu0
    %3402 = vmatprep.mubr.f32.mxu0 0.0
    %v3403 = vand.u32 %v2229, 4294901760
    %v3404 = vsub.f32 %v2229, %v3403
    %3405 = vmatmul.mubr.f32.gmra.mxu0 %v3404
    %v3406 = vpop.f32.mrf.mxu0
    %v3407 = vadd.f32 %v3324, %v3406
    %v3408 = vpop.f32.mrf.mxu0
    %3409 = vdwg.mxu0
    %3410 = vmatprep.subr.mxu0 0.0
    %3411 = vmatpush1.msra.mxu0 0.0
    %3412 = vmatprep.subr.mxu0 0.0
    %3413 = vmatpush1.msra.mxu0 0.0
    %3414 = vmatprep.subr.mxu0 0.0
    %3415 = vmatpush1.msra.mxu0 0.0
    %3416 = vmatprep.subr.mxu0 0.0
    %3417 = vmatpush1.msra.mxu0 0.0
    %3418 = vmatprep.subr.mxu0 0.0
    %3419 = vmatpush1.msra.mxu0 0.0
    %3420 = vmatprep.subr.mxu0 0.0
    %3421 = vmatpush1.msra.mxu0 0.0
    %3422 = vmatprep.subr.mxu0 0.0
    %3423 = vmatpush1.msra.mxu0 0.0
    %3424 = vmatprep.subr.mxu0 0.0
    %3425 = vmatpush1.msra.mxu0 0.0
    %3426 = vmatprep.subr.mxu0 0.0
    %3427 = vmatpush1.msra.mxu0 0.0
    %3428 = vmatprep.subr.mxu0 0.0
    %3429 = vmatpush1.msra.mxu0 0.0
    %3430 = vmatprep.subr.mxu0 0.0
    %3431 = vmatpush1.msra.mxu0 0.0
    %3432 = vmatprep.subr.mxu0 0.0
    %3433 = vmatpush1.msra.mxu0 0.0
    %3434 = vmatprep.subr.mxu0 0.0
    %3435 = vmatpush1.msra.mxu0 0.0
    %3436 = vmatprep.subr.mxu0 0.0
    %3437 = vmatpush1.msra.mxu0 0.0
    %3438 = vmatprep.subr.mxu0 0.0
    %v3439 = vand.u32 %v2233, 4294901760
    %3440 = vmatpush1.msra.mxu0 %v3439
    %3441 = vmatprep.subr.mxu0 0.0
    %v3442 = vand.u32 %v2224, 4294901760
    %3443 = vmatpush1.msra.mxu0 %v3442
    %3444 = vmatprep.subr.mxu0 0.0
    %3445 = vmatpush2.msra.mxu0 0.0
    %3446 = vmatprep.subr.mxu0 0.0
    %3447 = vmatpush2.msra.mxu0 0.0
    %3448 = vmatprep.subr.mxu0 0.0
    %3449 = vmatpush2.msra.mxu0 0.0
    %3450 = vmatprep.subr.mxu0 0.0
    %3451 = vmatpush2.msra.mxu0 0.0
    %3452 = vmatprep.subr.mxu0 0.0
    %3453 = vmatpush2.msra.mxu0 0.0
    %3454 = vmatprep.subr.mxu0 0.0
    %3455 = vmatpush2.msra.mxu0 0.0
    %3456 = vmatprep.subr.mxu0 0.0
    %3457 = vmatpush2.msra.mxu0 0.0
    %3458 = vmatprep.subr.mxu0 0.0
    %3459 = vmatpush2.msra.mxu0 0.0
    %3460 = vmatprep.subr.mxu0 0.0
    %3461 = vmatpush2.msra.mxu0 0.0
    %3462 = vmatprep.subr.mxu0 0.0
    %3463 = vmatpush2.msra.mxu0 0.0
    %3464 = vmatprep.subr.mxu0 0.0
    %3465 = vmatpush2.msra.mxu0 0.0
    %3466 = vmatprep.subr.mxu0 0.0
    %3467 = vmatpush2.msra.mxu0 0.0
    %3468 = vmatprep.subr.mxu0 0.0
    %3469 = vmatpush2.msra.mxu0 0.0
    %3470 = vmatprep.subr.mxu0 0.0
    %3471 = vmatpush2.msra.mxu0 0.0
    %3472 = vmatprep.subr.mxu0 0.0
    %3473 = vmatpush2.msra.mxu0 0.0
    %3474 = vmatprep.subr.mxu0 0.0
    %3475 = vmatpush2.msra.mxu0 0.0
    %3476 = vmatprep.mubr.f32.mxu0 0.0
    %v3477 = vand.u32 %v2227, 4294901760
    %v3478 = vsub.f32 %v2227, %v3477
    %v3479 = vand.u32 %v3478, 4294901760
    %3480 = vmatmul.mubr.f32.gmra.mxu0 %v3479
    %v3481 = vpop.f32.mrf.mxu0
    %v3482 = vadd.f32 %v3400, %v3481
    %v3483 = vpop.f32.mrf.mxu0
    %3484 = vmatprep.mubr.f32.mxu0 0.0
    %v3485 = vand.u32 %v2229, 4294901760
    %v3486 = vsub.f32 %v2229, %v3485
    %v3487 = vand.u32 %v3486, 4294901760
    %3488 = vmatmul.mubr.f32.gmra.mxu0 %v3487
    %v3489 = vpop.f32.mrf.mxu0
    %v3490 = vadd.f32 %v3407, %v3489
    %v3491 = vpop.f32.mrf.mxu0
    %3492 = vdwg.mxu0
    %3493 = vmatprep.subr.mxu0 0.0
    %3494 = vmatpush1.msra.mxu0 0.0
    %3495 = vmatprep.subr.mxu0 0.0
    %3496 = vmatpush1.msra.mxu0 0.0
    %3497 = vmatprep.subr.mxu0 0.0
    %3498 = vmatpush1.msra.mxu0 0.0
    %3499 = vmatprep.subr.mxu0 0.0
    %3500 = vmatpush1.msra.mxu0 0.0
    %3501 = vmatprep.subr.mxu0 0.0
    %3502 = vmatpush1.msra.mxu0 0.0
    %3503 = vmatprep.subr.mxu0 0.0
    %3504 = vmatpush1.msra.mxu0 0.0
    %3505 = vmatprep.subr.mxu0 0.0
    %3506 = vmatpush1.msra.mxu0 0.0
    %3507 = vmatprep.subr.mxu0 0.0
    %3508 = vmatpush1.msra.mxu0 0.0
    %3509 = vmatprep.subr.mxu0 0.0
    %3510 = vmatpush1.msra.mxu0 0.0
    %3511 = vmatprep.subr.mxu0 0.0
    %3512 = vmatpush1.msra.mxu0 0.0
    %3513 = vmatprep.subr.mxu0 0.0
    %3514 = vmatpush1.msra.mxu0 0.0
    %3515 = vmatprep.subr.mxu0 0.0
    %3516 = vmatpush1.msra.mxu0 0.0
    %3517 = vmatprep.subr.mxu0 0.0
    %3518 = vmatpush1.msra.mxu0 0.0
    %3519 = vmatprep.subr.mxu0 0.0
    %3520 = vmatpush1.msra.mxu0 0.0
    %3521 = vmatprep.subr.mxu0 0.0
    %v3522 = vand.u32 %v2233, 4294901760
    %v3523 = vsub.f32 %v2233, %v3522
    %v3524 = vand.u32 %v3523, 4294901760
    %3525 = vmatpush1.msra.mxu0 %v3524
    %3526 = vmatprep.subr.mxu0 0.0
    %v3527 = vand.u32 %v2224, 4294901760
    %v3528 = vsub.f32 %v2224, %v3527
    %v3529 = vand.u32 %v3528, 4294901760
    %3530 = vmatpush1.msra.mxu0 %v3529
    %3531 = vmatprep.subr.mxu0 0.0
    %3532 = vmatpush2.msra.mxu0 0.0
    %3533 = vmatprep.subr.mxu0 0.0
    %3534 = vmatpush2.msra.mxu0 0.0
    %3535 = vmatprep.subr.mxu0 0.0
    %3536 = vmatpush2.msra.mxu0 0.0
    %3537 = vmatprep.subr.mxu0 0.0
    %3538 = vmatpush2.msra.mxu0 0.0
    %3539 = vmatprep.subr.mxu0 0.0
    %3540 = vmatpush2.msra.mxu0 0.0
    %3541 = vmatprep.subr.mxu0 0.0
    %3542 = vmatpush2.msra.mxu0 0.0
    %3543 = vmatprep.subr.mxu0 0.0
    %3544 = vmatpush2.msra.mxu0 0.0
    %3545 = vmatprep.subr.mxu0 0.0
    %3546 = vmatpush2.msra.mxu0 0.0
    %3547 = vmatprep.subr.mxu0 0.0
    %3548 = vmatpush2.msra.mxu0 0.0
    %3549 = vmatprep.subr.mxu0 0.0
    %3550 = vmatpush2.msra.mxu0 0.0
    %3551 = vmatprep.subr.mxu0 0.0
    %3552 = vmatpush2.msra.mxu0 0.0
    %3553 = vmatprep.subr.mxu0 0.0
    %3554 = vmatpush2.msra.mxu0 0.0
    %3555 = vmatprep.subr.mxu0 0.0
    %3556 = vmatpush2.msra.mxu0 0.0
    %3557 = vmatprep.subr.mxu0 0.0
    %3558 = vmatpush2.msra.mxu0 0.0
    %3559 = vmatprep.subr.mxu0 0.0
    %3560 = vmatpush2.msra.mxu0 0.0
    %3561 = vmatprep.subr.mxu0 0.0
    %3562 = vmatpush2.msra.mxu0 0.0
    %3563 = vmatprep.mubr.f32.mxu0 0.0
    %v3564 = vand.u32 %v2227, 4294901760
    %3565 = vmatmul.mubr.f32.gmra.mxu0 %v3564
    %v3566 = vpop.f32.mrf.mxu0
    %v3567 = vadd.f32 %v3482, %v3566
    %v3568 = vpop.f32.mrf.mxu0
    %3569 = vmatprep.mubr.f32.mxu0 0.0
    %v3570 = vand.u32 %v2229, 4294901760
    %3571 = vmatmul.mubr.f32.gmra.mxu0 %v3570
    %v3572 = vpop.f32.mrf.mxu0
    %v3573 = vadd.f32 %v3490, %v3572
    %v3574 = vpop.f32.mrf.mxu0
    %3575 = vdwg.mxu0
    %3576 = vmatprep.subr.mxu0 0.0
    %3577 = vmatpush1.msra.mxu0 0.0
    %3578 = vmatprep.subr.mxu0 0.0
    %3579 = vmatpush1.msra.mxu0 0.0
    %3580 = vmatprep.subr.mxu0 0.0
    %3581 = vmatpush1.msra.mxu0 0.0
    %3582 = vmatprep.subr.mxu0 0.0
    %3583 = vmatpush1.msra.mxu0 0.0
    %3584 = vmatprep.subr.mxu0 0.0
    %3585 = vmatpush1.msra.mxu0 0.0
    %3586 = vmatprep.subr.mxu0 0.0
    %3587 = vmatpush1.msra.mxu0 0.0
    %3588 = vmatprep.subr.mxu0 0.0
    %3589 = vmatpush1.msra.mxu0 0.0
    %3590 = vmatprep.subr.mxu0 0.0
    %3591 = vmatpush1.msra.mxu0 0.0
    %3592 = vmatprep.subr.mxu0 0.0
    %3593 = vmatpush1.msra.mxu0 0.0
    %3594 = vmatprep.subr.mxu0 0.0
    %3595 = vmatpush1.msra.mxu0 0.0
    %3596 = vmatprep.subr.mxu0 0.0
    %3597 = vmatpush1.msra.mxu0 0.0
    %3598 = vmatprep.subr.mxu0 0.0
    %3599 = vmatpush1.msra.mxu0 0.0
    %3600 = vmatprep.subr.mxu0 0.0
    %3601 = vmatpush1.msra.mxu0 0.0
    %3602 = vmatprep.subr.mxu0 0.0
    %3603 = vmatpush1.msra.mxu0 0.0
    %3604 = vmatprep.subr.mxu0 0.0
    %v3605 = vand.u32 %v2233, 4294901760
    %3606 = vmatpush1.msra.mxu0 %v3605
    %3607 = vmatprep.subr.mxu0 0.0
    %v3608 = vand.u32 %v2224, 4294901760
    %3609 = vmatpush1.msra.mxu0 %v3608
    %3610 = vmatprep.subr.mxu0 0.0
    %3611 = vmatpush2.msra.mxu0 0.0
    %3612 = vmatprep.subr.mxu0 0.0
    %3613 = vmatpush2.msra.mxu0 0.0
    %3614 = vmatprep.subr.mxu0 0.0
    %3615 = vmatpush2.msra.mxu0 0.0
    %3616 = vmatprep.subr.mxu0 0.0
    %3617 = vmatpush2.msra.mxu0 0.0
    %3618 = vmatprep.subr.mxu0 0.0
    %3619 = vmatpush2.msra.mxu0 0.0
    %3620 = vmatprep.subr.mxu0 0.0
    %3621 = vmatpush2.msra.mxu0 0.0
    %3622 = vmatprep.subr.mxu0 0.0
    %3623 = vmatpush2.msra.mxu0 0.0
    %3624 = vmatprep.subr.mxu0 0.0
    %3625 = vmatpush2.msra.mxu0 0.0
    %3626 = vmatprep.subr.mxu0 0.0
    %3627 = vmatpush2.msra.mxu0 0.0
    %3628 = vmatprep.subr.mxu0 0.0
    %3629 = vmatpush2.msra.mxu0 0.0
    %3630 = vmatprep.subr.mxu0 0.0
    %3631 = vmatpush2.msra.mxu0 0.0
    %3632 = vmatprep.subr.mxu0 0.0
    %3633 = vmatpush2.msra.mxu0 0.0
    %3634 = vmatprep.subr.mxu0 0.0
    %3635 = vmatpush2.msra.mxu0 0.0
    %3636 = vmatprep.subr.mxu0 0.0
    %3637 = vmatpush2.msra.mxu0 0.0
    %3638 = vmatprep.subr.mxu0 0.0
    %3639 = vmatpush2.msra.mxu0 0.0
    %3640 = vmatprep.subr.mxu0 0.0
    %3641 = vmatpush2.msra.mxu0 0.0
    %3642 = vmatprep.mubr.f32.mxu0 0.0
    %v3643 = vand.u32 %v2227, 4294901760
    %3644 = vmatmul.mubr.f32.gmra.mxu0 %v3643
    %v3645 = vpop.f32.mrf.mxu0
    %v3646 = vadd.f32 %v3567, %v3645
    %v3647 = vpop.f32.mrf.mxu0
    %3648 = vmatprep.mubr.f32.mxu0 0.0
    %v3649 = vand.u32 %v2229, 4294901760
    %3650 = vmatmul.mubr.f32.gmra.mxu0 %v3649
    %v3651 = vpop.f32.mrf.mxu0
    %v3652 = vadd.f32 %v3573, %v3651
    %v3653 = vpop.f32.mrf.mxu0
    %3654 = vdwg.mxu0
    %v3655 = vlaneseq
    %v3656 = vshrl.u32 %v3655, 7
    %v3657 = vadd.s32 %v3656, 8
    %v3658 = vlaneseq
    %v3659 = vand.u32 %v3658, 127
    %vm3660 = vcmp.lt.s32.totalorder %v3656, 0
    %v3661 = vsub.s32 0, %v3656
    %v3662 = vsel %vm3660, %v3661, %v3656
    %v3663 = vshrl.u32 %v3662, 3
    %v3664 = vand.u32 %v3662, 7
    %v3665 = vsub.s32 0, %v3664
    %v3666 = vsel %vm3660, %v3665, %v3664
    %vm3667 = vcmp.lt.s32.totalorder %v3657, 0
    %v3668 = vsub.s32 0, %v3657
    %v3669 = vsel %vm3667, %v3668, %v3657
    %v3670 = vshrl.u32 %v3669, 3
    %v3671 = vand.u32 %v3669, 7
    %v3672 = vsub.s32 0, %v3671
    %v3673 = vsel %vm3667, %v3672, %v3671
    %vm3674 = vcmp.ne.s32.totalorder %v3666, 0
    %vm3675 = vcmp.ne.s32.totalorder %v3673, 0
    %vm3676 = vcmp.lt.s32.totalorder %v3666, 0
    %vm3677 = vcmp.lt.s32.totalorder %v3673, 0
    %vm3678 = vmand %vm3676, %vm3674
    %vm3679 = vmand %vm3677, %vm3675
    %v3680 = vadd.s32 %v3666, 8
    %v3681 = vadd.s32 %v3673, 8
    %v3682 = vsel %vm3678, %v3680, %v3666
    %v3683 = vsel %vm3679, %v3681, %v3673
    %v3684 = vmul.u32 %v3682, 10
    %v3685 = vmul.u32 %v3683, 10
    %v3686 = vsub.s32 %v3659, %v3684
    %v3687 = vsub.s32 %v3659, %v3685
    %vm3688 = vcmp.ge.s32.totalorder %v3686, 0
    %vm3689 = vcmp.ge.s32.totalorder %v3687, 0
    %vm3690 = vcmp.lt.s32.totalorder %v3686, 10
    %vm3691 = vcmp.lt.s32.totalorder %v3687, 10
    %vm3692 = vmand %vm3688, %vm3690
    %vm3693 = vmand %vm3689, %vm3691
    %v3694 = vsel %vm3692, %v3646, 0.0
    %v3695 = vsel %vm3693, %v3652, 0.0
    %v3696 = vmul.u32 %v3656, 8
    %vm3697 = vcmp.ge.s32.totalorder %v3659, %v3696
    %v3698 = vadd.s32 %v3656, 1
    %v3699 = vmul.u32 %v3698, 8
    %vm3700 = vcmp.lt.s32.totalorder %v3659, %v3699
    %vm3701 = vmand %vm3697, %vm3700
    %v3702 = vsel %vm3701, 1, 0
    %v3703 = vcvt.s32.f32 %v3702
    %vm3704 = vcmask 130048
    %v3706 = vsel %vm3704, %v3703, 0
    %3708 = vmatprep.subr.mxu0 0.0
    %3709 = vmatpush1.msra.mxu0 0.0
    %3710 = vmatprep.subr.mxu0 0.0
    %3711 = vmatpush1.msra.mxu0 0.0
    %3712 = vmatprep.subr.mxu0 0.0
    %3713 = vmatpush1.msra.mxu0 0.0
    %3714 = vmatprep.subr.mxu0 0.0
    %3715 = vmatpush1.msra.mxu0 0.0
    %3716 = vmatprep.subr.mxu0 0.0
    %3717 = vmatpush1.msra.mxu0 0.0
    %3718 = vmatprep.subr.mxu0 0.0
    %3719 = vmatpush1.msra.mxu0 0.0
    %3720 = vmatprep.subr.mxu0 0.0
    %3721 = vmatpush1.msra.mxu0 0.0
    %3722 = vmatprep.subr.mxu0 0.0
    %3723 = vmatpush1.msra.mxu0 0.0
    %3724 = vmatprep.subr.mxu0 0.0
    %3725 = vmatpush1.msra.mxu0 0.0
    %3726 = vmatprep.subr.mxu0 0.0
    %3727 = vmatpush1.msra.mxu0 0.0
    %3728 = vmatprep.subr.mxu0 0.0
    %3729 = vmatpush1.msra.mxu0 0.0
    %3730 = vmatprep.subr.mxu0 0.0
    %3731 = vmatpush1.msra.mxu0 0.0
    %3732 = vmatprep.subr.mxu0 0.0
    %3733 = vmatpush1.msra.mxu0 0.0
    %3734 = vmatprep.subr.mxu0 0.0
    %3735 = vmatpush1.msra.mxu0 0.0
    %3736 = vmatprep.subr.mxu0 0.0
    %v3737 = vand.u32 %v3695, 4294901760
    %3738 = vmatpush1.msra.mxu0 %v3737
    %3739 = vmatprep.subr.mxu0 0.0
    %v3740 = vand.u32 %v3694, 4294901760
    %3741 = vmatpush1.msra.mxu0 %v3740
    %3742 = vmatprep.subr.mxu0 0.0
    %3743 = vmatpush2.msra.mxu0 0.0
    %3744 = vmatprep.subr.mxu0 0.0
    %3745 = vmatpush2.msra.mxu0 0.0
    %3746 = vmatprep.subr.mxu0 0.0
    %3747 = vmatpush2.msra.mxu0 0.0
    %3748 = vmatprep.subr.mxu0 0.0
    %3749 = vmatpush2.msra.mxu0 0.0
    %3750 = vmatprep.subr.mxu0 0.0
    %3751 = vmatpush2.msra.mxu0 0.0
    %3752 = vmatprep.subr.mxu0 0.0
    %3753 = vmatpush2.msra.mxu0 0.0
    %3754 = vmatprep.subr.mxu0 0.0
    %3755 = vmatpush2.msra.mxu0 0.0
    %3756 = vmatprep.subr.mxu0 0.0
    %3757 = vmatpush2.msra.mxu0 0.0
    %3758 = vmatprep.subr.mxu0 0.0
    %3759 = vmatpush2.msra.mxu0 0.0
    %3760 = vmatprep.subr.mxu0 0.0
    %3761 = vmatpush2.msra.mxu0 0.0
    %3762 = vmatprep.subr.mxu0 0.0
    %3763 = vmatpush2.msra.mxu0 0.0
    %3764 = vmatprep.subr.mxu0 0.0
    %3765 = vmatpush2.msra.mxu0 0.0
    %3766 = vmatprep.subr.mxu0 0.0
    %3767 = vmatpush2.msra.mxu0 0.0
    %3768 = vmatprep.subr.mxu0 0.0
    %3769 = vmatpush2.msra.mxu0 0.0
    %3770 = vmatprep.subr.mxu0 0.0
    %3771 = vmatpush2.msra.mxu0 0.0
    %3772 = vmatprep.subr.mxu0 0.0
    %3773 = vmatpush2.msra.mxu0 0.0
    %3774 = vmatprep.mubr.f32.mxu0 0.0
    %v3775 = vand.u32 %v3706, 4294901760
    %v3776 = vsub.f32 %v3706, %v3775
    %v3777 = vand.u32 %v3776, 4294901760
    %v3778 = vsub.f32 %v3776, %v3777
    %v3779 = vand.u32 %v3778, 4294901760
    %3780 = vmatmul.mubr.f32.gmra.mxu0 %v3779
    %v3781 = vpop.f32.mrf.mxu0
    %v3782 = vadd.f32 0.0, %v3781
    %v3783 = vpop.f32.mrf.mxu0
    %3784 = vdwg.mxu0
    %3785 = vmatprep.subr.mxu0 0.0
    %3786 = vmatpush1.msra.mxu0 0.0
    %3787 = vmatprep.subr.mxu0 0.0
    %3788 = vmatpush1.msra.mxu0 0.0
    %3789 = vmatprep.subr.mxu0 0.0
    %3790 = vmatpush1.msra.mxu0 0.0
    %3791 = vmatprep.subr.mxu0 0.0
    %3792 = vmatpush1.msra.mxu0 0.0
    %3793 = vmatprep.subr.mxu0 0.0
    %3794 = vmatpush1.msra.mxu0 0.0
    %3795 = vmatprep.subr.mxu0 0.0
    %3796 = vmatpush1.msra.mxu0 0.0
    %3797 = vmatprep.subr.mxu0 0.0
    %3798 = vmatpush1.msra.mxu0 0.0
    %3799 = vmatprep.subr.mxu0 0.0
    %3800 = vmatpush1.msra.mxu0 0.0
    %3801 = vmatprep.subr.mxu0 0.0
    %3802 = vmatpush1.msra.mxu0 0.0
    %3803 = vmatprep.subr.mxu0 0.0
    %3804 = vmatpush1.msra.mxu0 0.0
    %3805 = vmatprep.subr.mxu0 0.0
    %3806 = vmatpush1.msra.mxu0 0.0
    %3807 = vmatprep.subr.mxu0 0.0
    %3808 = vmatpush1.msra.mxu0 0.0
    %3809 = vmatprep.subr.mxu0 0.0
    %3810 = vmatpush1.msra.mxu0 0.0
    %3811 = vmatprep.subr.mxu0 0.0
    %3812 = vmatpush1.msra.mxu0 0.0
    %3813 = vmatprep.subr.mxu0 0.0
    %v3814 = vand.u32 %v3695, 4294901760
    %v3815 = vsub.f32 %v3695, %v3814
    %v3816 = vand.u32 %v3815, 4294901760
    %v3817 = vsub.f32 %v3815, %v3816
    %v3818 = vand.u32 %v3817, 4294901760
    %3819 = vmatpush1.msra.mxu0 %v3818
    %3820 = vmatprep.subr.mxu0 0.0
    %v3821 = vand.u32 %v3694, 4294901760
    %v3822 = vsub.f32 %v3694, %v3821
    %v3823 = vand.u32 %v3822, 4294901760
    %v3824 = vsub.f32 %v3822, %v3823
    %v3825 = vand.u32 %v3824, 4294901760
    %3826 = vmatpush1.msra.mxu0 %v3825
    %3827 = vmatprep.subr.mxu0 0.0
    %3828 = vmatpush2.msra.mxu0 0.0
    %3829 = vmatprep.subr.mxu0 0.0
    %3830 = vmatpush2.msra.mxu0 0.0
    %3831 = vmatprep.subr.mxu0 0.0
    %3832 = vmatpush2.msra.mxu0 0.0
    %3833 = vmatprep.subr.mxu0 0.0
    %3834 = vmatpush2.msra.mxu0 0.0
    %3835 = vmatprep.subr.mxu0 0.0
    %3836 = vmatpush2.msra.mxu0 0.0
    %3837 = vmatprep.subr.mxu0 0.0
    %3838 = vmatpush2.msra.mxu0 0.0
    %3839 = vmatprep.subr.mxu0 0.0
    %3840 = vmatpush2.msra.mxu0 0.0
    %3841 = vmatprep.subr.mxu0 0.0
    %3842 = vmatpush2.msra.mxu0 0.0
    %3843 = vmatprep.subr.mxu0 0.0
    %3844 = vmatpush2.msra.mxu0 0.0
    %3845 = vmatprep.subr.mxu0 0.0
    %3846 = vmatpush2.msra.mxu0 0.0
    %3847 = vmatprep.subr.mxu0 0.0
    %3848 = vmatpush2.msra.mxu0 0.0
    %3849 = vmatprep.subr.mxu0 0.0
    %3850 = vmatpush2.msra.mxu0 0.0
    %3851 = vmatprep.subr.mxu0 0.0
    %3852 = vmatpush2.msra.mxu0 0.0
    %3853 = vmatprep.subr.mxu0 0.0
    %3854 = vmatpush2.msra.mxu0 0.0
    %3855 = vmatprep.subr.mxu0 0.0
    %3856 = vmatpush2.msra.mxu0 0.0
    %3857 = vmatprep.subr.mxu0 0.0
    %3858 = vmatpush2.msra.mxu0 0.0
    %3859 = vmatprep.mubr.f32.mxu0 0.0
    %v3860 = vand.u32 %v3706, 4294901760
    %3861 = vmatmul.mubr.f32.gmra.mxu0 %v3860
    %v3862 = vpop.f32.mrf.mxu0
    %v3863 = vadd.f32 %v3782, %v3862
    %v3864 = vpop.f32.mrf.mxu0
    %3865 = vdwg.mxu0
    %3866 = vmatprep.subr.mxu0 0.0
    %3867 = vmatpush1.msra.mxu0 0.0
    %3868 = vmatprep.subr.mxu0 0.0
    %3869 = vmatpush1.msra.mxu0 0.0
    %3870 = vmatprep.subr.mxu0 0.0
    %3871 = vmatpush1.msra.mxu0 0.0
    %3872 = vmatprep.subr.mxu0 0.0
    %3873 = vmatpush1.msra.mxu0 0.0
    %3874 = vmatprep.subr.mxu0 0.0
    %3875 = vmatpush1.msra.mxu0 0.0
    %3876 = vmatprep.subr.mxu0 0.0
    %3877 = vmatpush1.msra.mxu0 0.0
    %3878 = vmatprep.subr.mxu0 0.0
    %3879 = vmatpush1.msra.mxu0 0.0
    %3880 = vmatprep.subr.mxu0 0.0
    %3881 = vmatpush1.msra.mxu0 0.0
    %3882 = vmatprep.subr.mxu0 0.0
    %3883 = vmatpush1.msra.mxu0 0.0
    %3884 = vmatprep.subr.mxu0 0.0
    %3885 = vmatpush1.msra.mxu0 0.0
    %3886 = vmatprep.subr.mxu0 0.0
    %3887 = vmatpush1.msra.mxu0 0.0
    %3888 = vmatprep.subr.mxu0 0.0
    %3889 = vmatpush1.msra.mxu0 0.0
    %3890 = vmatprep.subr.mxu0 0.0
    %3891 = vmatpush1.msra.mxu0 0.0
    %3892 = vmatprep.subr.mxu0 0.0
    %3893 = vmatpush1.msra.mxu0 0.0
    %3894 = vmatprep.subr.mxu0 0.0
    %v3895 = vand.u32 %v3695, 4294901760
    %v3896 = vsub.f32 %v3695, %v3895
    %3897 = vmatpush1.msra.mxu0 %v3896
    %3898 = vmatprep.subr.mxu0 0.0
    %v3899 = vand.u32 %v3694, 4294901760
    %v3900 = vsub.f32 %v3694, %v3899
    %3901 = vmatpush1.msra.mxu0 %v3900
    %3902 = vmatprep.subr.mxu0 0.0
    %3903 = vmatpush2.msra.mxu0 0.0
    %3904 = vmatprep.subr.mxu0 0.0
    %3905 = vmatpush2.msra.mxu0 0.0
    %3906 = vmatprep.subr.mxu0 0.0
    %3907 = vmatpush2.msra.mxu0 0.0
    %3908 = vmatprep.subr.mxu0 0.0
    %3909 = vmatpush2.msra.mxu0 0.0
    %3910 = vmatprep.subr.mxu0 0.0
    %3911 = vmatpush2.msra.mxu0 0.0
    %3912 = vmatprep.subr.mxu0 0.0
    %3913 = vmatpush2.msra.mxu0 0.0
    %3914 = vmatprep.subr.mxu0 0.0
    %3915 = vmatpush2.msra.mxu0 0.0
    %3916 = vmatprep.subr.mxu0 0.0
    %3917 = vmatpush2.msra.mxu0 0.0
    %3918 = vmatprep.subr.mxu0 0.0
    %3919 = vmatpush2.msra.mxu0 0.0
    %3920 = vmatprep.subr.mxu0 0.0
    %3921 = vmatpush2.msra.mxu0 0.0
    %3922 = vmatprep.subr.mxu0 0.0
    %3923 = vmatpush2.msra.mxu0 0.0
    %3924 = vmatprep.subr.mxu0 0.0
    %3925 = vmatpush2.msra.mxu0 0.0
    %3926 = vmatprep.subr.mxu0 0.0
    %3927 = vmatpush2.msra.mxu0 0.0
    %3928 = vmatprep.subr.mxu0 0.0
    %3929 = vmatpush2.msra.mxu0 0.0
    %3930 = vmatprep.subr.mxu0 0.0
    %3931 = vmatpush2.msra.mxu0 0.0
    %3932 = vmatprep.subr.mxu0 0.0
    %3933 = vmatpush2.msra.mxu0 0.0
    %3934 = vmatprep.mubr.f32.mxu0 0.0
    %v3935 = vand.u32 %v3706, 4294901760
    %v3936 = vsub.f32 %v3706, %v3935
    %3937 = vmatmul.mubr.f32.gmra.mxu0 %v3936
    %v3938 = vpop.f32.mrf.mxu0
    %v3939 = vadd.f32 %v3863, %v3938
    %v3940 = vpop.f32.mrf.mxu0
    %3941 = vdwg.mxu0
    %3942 = vmatprep.subr.mxu0 0.0
    %3943 = vmatpush1.msra.mxu0 0.0
    %3944 = vmatprep.subr.mxu0 0.0
    %3945 = vmatpush1.msra.mxu0 0.0
    %3946 = vmatprep.subr.mxu0 0.0
    %3947 = vmatpush1.msra.mxu0 0.0
    %3948 = vmatprep.subr.mxu0 0.0
    %3949 = vmatpush1.msra.mxu0 0.0
    %3950 = vmatprep.subr.mxu0 0.0
    %3951 = vmatpush1.msra.mxu0 0.0
    %3952 = vmatprep.subr.mxu0 0.0
    %3953 = vmatpush1.msra.mxu0 0.0
    %3954 = vmatprep.subr.mxu0 0.0
    %3955 = vmatpush1.msra.mxu0 0.0
    %3956 = vmatprep.subr.mxu0 0.0
    %3957 = vmatpush1.msra.mxu0 0.0
    %3958 = vmatprep.subr.mxu0 0.0
    %3959 = vmatpush1.msra.mxu0 0.0
    %3960 = vmatprep.subr.mxu0 0.0
    %3961 = vmatpush1.msra.mxu0 0.0
    %3962 = vmatprep.subr.mxu0 0.0
    %3963 = vmatpush1.msra.mxu0 0.0
    %3964 = vmatprep.subr.mxu0 0.0
    %3965 = vmatpush1.msra.mxu0 0.0
    %3966 = vmatprep.subr.mxu0 0.0
    %3967 = vmatpush1.msra.mxu0 0.0
    %3968 = vmatprep.subr.mxu0 0.0
    %3969 = vmatpush1.msra.mxu0 0.0
    %3970 = vmatprep.subr.mxu0 0.0
    %v3971 = vand.u32 %v3695, 4294901760
    %3972 = vmatpush1.msra.mxu0 %v3971
    %3973 = vmatprep.subr.mxu0 0.0
    %v3974 = vand.u32 %v3694, 4294901760
    %3975 = vmatpush1.msra.mxu0 %v3974
    %3976 = vmatprep.subr.mxu0 0.0
    %3977 = vmatpush2.msra.mxu0 0.0
    %3978 = vmatprep.subr.mxu0 0.0
    %3979 = vmatpush2.msra.mxu0 0.0
    %3980 = vmatprep.subr.mxu0 0.0
    %3981 = vmatpush2.msra.mxu0 0.0
    %3982 = vmatprep.subr.mxu0 0.0
    %3983 = vmatpush2.msra.mxu0 0.0
    %3984 = vmatprep.subr.mxu0 0.0
    %3985 = vmatpush2.msra.mxu0 0.0
    %3986 = vmatprep.subr.mxu0 0.0
    %3987 = vmatpush2.msra.mxu0 0.0
    %3988 = vmatprep.subr.mxu0 0.0
    %3989 = vmatpush2.msra.mxu0 0.0
    %3990 = vmatprep.subr.mxu0 0.0
    %3991 = vmatpush2.msra.mxu0 0.0
    %3992 = vmatprep.subr.mxu0 0.0
    %3993 = vmatpush2.msra.mxu0 0.0
    %3994 = vmatprep.subr.mxu0 0.0
    %3995 = vmatpush2.msra.mxu0 0.0
    %3996 = vmatprep.subr.mxu0 0.0
    %3997 = vmatpush2.msra.mxu0 0.0
    %3998 = vmatprep.subr.mxu0 0.0
    %3999 = vmatpush2.msra.mxu0 0.0
    %4000 = vmatprep.subr.mxu0 0.0
    %4001 = vmatpush2.msra.mxu0 0.0
    %4002 = vmatprep.subr.mxu0 0.0
    %4003 = vmatpush2.msra.mxu0 0.0
    %4004 = vmatprep.subr.mxu0 0.0
    %4005 = vmatpush2.msra.mxu0 0.0
    %4006 = vmatprep.subr.mxu0 0.0
    %4007 = vmatpush2.msra.mxu0 0.0
    %4008 = vmatprep.mubr.f32.mxu0 0.0
    %v4009 = vand.u32 %v3706, 4294901760
    %v4010 = vsub.f32 %v3706, %v4009
    %v4011 = vand.u32 %v4010, 4294901760
    %4012 = vmatmul.mubr.f32.gmra.mxu0 %v4011
    %v4013 = vpop.f32.mrf.mxu0
    %v4014 = vadd.f32 %v3939, %v4013
    %v4015 = vpop.f32.mrf.mxu0
    %4016 = vdwg.mxu0
    %4017 = vmatprep.subr.mxu0 0.0
    %4018 = vmatpush1.msra.mxu0 0.0
    %4019 = vmatprep.subr.mxu0 0.0
    %4020 = vmatpush1.msra.mxu0 0.0
    %4021 = vmatprep.subr.mxu0 0.0
    %4022 = vmatpush1.msra.mxu0 0.0
    %4023 = vmatprep.subr.mxu0 0.0
    %4024 = vmatpush1.msra.mxu0 0.0
    %4025 = vmatprep.subr.mxu0 0.0
    %4026 = vmatpush1.msra.mxu0 0.0
    %4027 = vmatprep.subr.mxu0 0.0
    %4028 = vmatpush1.msra.mxu0 0.0
    %4029 = vmatprep.subr.mxu0 0.0
    %4030 = vmatpush1.msra.mxu0 0.0
    %4031 = vmatprep.subr.mxu0 0.0
    %4032 = vmatpush1.msra.mxu0 0.0
    %4033 = vmatprep.subr.mxu0 0.0
    %4034 = vmatpush1.msra.mxu0 0.0
    %4035 = vmatprep.subr.mxu0 0.0
    %4036 = vmatpush1.msra.mxu0 0.0
    %4037 = vmatprep.subr.mxu0 0.0
    %4038 = vmatpush1.msra.mxu0 0.0
    %4039 = vmatprep.subr.mxu0 0.0
    %4040 = vmatpush1.msra.mxu0 0.0
    %4041 = vmatprep.subr.mxu0 0.0
    %4042 = vmatpush1.msra.mxu0 0.0
    %4043 = vmatprep.subr.mxu0 0.0
    %4044 = vmatpush1.msra.mxu0 0.0
    %4045 = vmatprep.subr.mxu0 0.0
    %v4046 = vand.u32 %v3695, 4294901760
    %v4047 = vsub.f32 %v3695, %v4046
    %v4048 = vand.u32 %v4047, 4294901760
    %4049 = vmatpush1.msra.mxu0 %v4048
    %4050 = vmatprep.subr.mxu0 0.0
    %v4051 = vand.u32 %v3694, 4294901760
    %v4052 = vsub.f32 %v3694, %v4051
    %v4053 = vand.u32 %v4052, 4294901760
    %4054 = vmatpush1.msra.mxu0 %v4053
    %4055 = vmatprep.subr.mxu0 0.0
    %4056 = vmatpush2.msra.mxu0 0.0
    %4057 = vmatprep.subr.mxu0 0.0
    %4058 = vmatpush2.msra.mxu0 0.0
    %4059 = vmatprep.subr.mxu0 0.0
    %4060 = vmatpush2.msra.mxu0 0.0
    %4061 = vmatprep.subr.mxu0 0.0
    %4062 = vmatpush2.msra.mxu0 0.0
    %4063 = vmatprep.subr.mxu0 0.0
    %4064 = vmatpush2.msra.mxu0 0.0
    %4065 = vmatprep.subr.mxu0 0.0
    %4066 = vmatpush2.msra.mxu0 0.0
    %4067 = vmatprep.subr.mxu0 0.0
    %4068 = vmatpush2.msra.mxu0 0.0
    %4069 = vmatprep.subr.mxu0 0.0
    %4070 = vmatpush2.msra.mxu0 0.0
    %4071 = vmatprep.subr.mxu0 0.0
    %4072 = vmatpush2.msra.mxu0 0.0
    %4073 = vmatprep.subr.mxu0 0.0
    %4074 = vmatpush2.msra.mxu0 0.0
    %4075 = vmatprep.subr.mxu0 0.0
    %4076 = vmatpush2.msra.mxu0 0.0
    %4077 = vmatprep.subr.mxu0 0.0
    %4078 = vmatpush2.msra.mxu0 0.0
    %4079 = vmatprep.subr.mxu0 0.0
    %4080 = vmatpush2.msra.mxu0 0.0
    %4081 = vmatprep.subr.mxu0 0.0
    %4082 = vmatpush2.msra.mxu0 0.0
    %4083 = vmatprep.subr.mxu0 0.0
    %4084 = vmatpush2.msra.mxu0 0.0
    %4085 = vmatprep.subr.mxu0 0.0
    %4086 = vmatpush2.msra.mxu0 0.0
    %4087 = vmatprep.mubr.f32.mxu0 0.0
    %v4088 = vand.u32 %v3706, 4294901760
    %4089 = vmatmul.mubr.f32.gmra.mxu0 %v4088
    %v4090 = vpop.f32.mrf.mxu0
    %v4091 = vadd.f32 %v4014, %v4090
    %v4092 = vpop.f32.mrf.mxu0
    %4093 = vdwg.mxu0
    %4094 = vmatprep.subr.mxu0 0.0
    %4095 = vmatpush1.msra.mxu0 0.0
    %4096 = vmatprep.subr.mxu0 0.0
    %4097 = vmatpush1.msra.mxu0 0.0
    %4098 = vmatprep.subr.mxu0 0.0
    %4099 = vmatpush1.msra.mxu0 0.0
    %4100 = vmatprep.subr.mxu0 0.0
    %4101 = vmatpush1.msra.mxu0 0.0
    %4102 = vmatprep.subr.mxu0 0.0
    %4103 = vmatpush1.msra.mxu0 0.0
    %4104 = vmatprep.subr.mxu0 0.0
    %4105 = vmatpush1.msra.mxu0 0.0
    %4106 = vmatprep.subr.mxu0 0.0
    %4107 = vmatpush1.msra.mxu0 0.0
    %4108 = vmatprep.subr.mxu0 0.0
    %4109 = vmatpush1.msra.mxu0 0.0
    %4110 = vmatprep.subr.mxu0 0.0
    %4111 = vmatpush1.msra.mxu0 0.0
    %4112 = vmatprep.subr.mxu0 0.0
    %4113 = vmatpush1.msra.mxu0 0.0
    %4114 = vmatprep.subr.mxu0 0.0
    %4115 = vmatpush1.msra.mxu0 0.0
    %4116 = vmatprep.subr.mxu0 0.0
    %4117 = vmatpush1.msra.mxu0 0.0
    %4118 = vmatprep.subr.mxu0 0.0
    %4119 = vmatpush1.msra.mxu0 0.0
    %4120 = vmatprep.subr.mxu0 0.0
    %4121 = vmatpush1.msra.mxu0 0.0
    %4122 = vmatprep.subr.mxu0 0.0
    %v4123 = vand.u32 %v3695, 4294901760
    %4124 = vmatpush1.msra.mxu0 %v4123
    %4125 = vmatprep.subr.mxu0 0.0
    %v4126 = vand.u32 %v3694, 4294901760
    %4127 = vmatpush1.msra.mxu0 %v4126
    %4128 = vmatprep.subr.mxu0 0.0
    %4129 = vmatpush2.msra.mxu0 0.0
    %4130 = vmatprep.subr.mxu0 0.0
    %4131 = vmatpush2.msra.mxu0 0.0
    %4132 = vmatprep.subr.mxu0 0.0
    %4133 = vmatpush2.msra.mxu0 0.0
    %4134 = vmatprep.subr.mxu0 0.0
    %4135 = vmatpush2.msra.mxu0 0.0
    %4136 = vmatprep.subr.mxu0 0.0
    %4137 = vmatpush2.msra.mxu0 0.0
    %4138 = vmatprep.subr.mxu0 0.0
    %4139 = vmatpush2.msra.mxu0 0.0
    %4140 = vmatprep.subr.mxu0 0.0
    %4141 = vmatpush2.msra.mxu0 0.0
    %4142 = vmatprep.subr.mxu0 0.0
    %4143 = vmatpush2.msra.mxu0 0.0
    %4144 = vmatprep.subr.mxu0 0.0
    %4145 = vmatpush2.msra.mxu0 0.0
    %4146 = vmatprep.subr.mxu0 0.0
    %4147 = vmatpush2.msra.mxu0 0.0
    %4148 = vmatprep.subr.mxu0 0.0
    %4149 = vmatpush2.msra.mxu0 0.0
    %4150 = vmatprep.subr.mxu0 0.0
    %4151 = vmatpush2.msra.mxu0 0.0
    %4152 = vmatprep.subr.mxu0 0.0
    %4153 = vmatpush2.msra.mxu0 0.0
    %4154 = vmatprep.subr.mxu0 0.0
    %4155 = vmatpush2.msra.mxu0 0.0
    %4156 = vmatprep.subr.mxu0 0.0
    %4157 = vmatpush2.msra.mxu0 0.0
    %4158 = vmatprep.subr.mxu0 0.0
    %4159 = vmatpush2.msra.mxu0 0.0
    %4160 = vmatprep.mubr.f32.mxu0 0.0
    %v4161 = vand.u32 %v3706, 4294901760
    %4162 = vmatmul.mubr.f32.gmra.mxu0 %v4161
    %v4163 = vpop.f32.mrf.mxu0
    %v4164 = vadd.f32 %v4091, %v4163
    %v4165 = vpop.f32.mrf.mxu0
    %4166 = vdwg.mxu0
    %v4167 = vld [vmem:[%s4] sm:$0xff]
    %v4168 = vld [vmem:[%s4 + $0x8] sm:$0xff]
    %v4169 = vld [vmem:[%s4 + $0x10] sm:$0xff]
    %v4170 = vld [vmem:[%s4 + $0x18] sm:$0xff]
    %v4171 = vld [vmem:[%s4 + $0x20] sm:$0xff]
    %v4172 = vld [vmem:[%s4 + $0x28] sm:$0xff]
    %v4173 = vld [vmem:[%s4 + $0x30] sm:$0xff]
    %v4174 = vld [vmem:[%s4 + $0x38] sm:$0xff]
    %v4175 = vld [vmem:[%s4 + $0x40] sm:$0xff]
    %v4176 = vld [vmem:[%s4 + $0x48] sm:$0xff]
    %v4177 = vld [vmem:[%s5] sm:$0x1]
    %v4179 = vlaneseq
    %v4180 = vshrl.u32 %v4179, 7
    %v4181 = vsub.s32 0, %v4180
    %v4182 = vrot.slane %v4177, %v4181
    %vm4184 = vcmask 654336
    %v4186 = vsel %vm4184, %v4164, 0
    %4188 = vmatprep.subr.mxu0 0.0
    %4189 = vmatpush1.msra.mxu0 0.0
    %4190 = vmatprep.subr.mxu0 0.0
    %4191 = vmatpush1.msra.mxu0 0.0
    %4192 = vmatprep.subr.mxu0 0.0
    %4193 = vmatpush1.msra.mxu0 0.0
    %4194 = vmatprep.subr.mxu0 0.0
    %4195 = vmatpush1.msra.mxu0 0.0
    %4196 = vmatprep.subr.mxu0 0.0
    %4197 = vmatpush1.msra.mxu0 0.0
    %4198 = vmatprep.subr.mxu0 0.0
    %4199 = vmatpush1.msra.mxu0 0.0
    %4200 = vmatprep.subr.mxu0 0.0
    %v4201 = vand.u32 %v4176, 4294901760
    %4202 = vmatpush1.msra.mxu0 %v4201
    %4203 = vmatprep.subr.mxu0 0.0
    %v4204 = vand.u32 %v4175, 4294901760
    %4205 = vmatpush1.msra.mxu0 %v4204
    %4206 = vmatprep.subr.mxu0 0.0
    %v4207 = vand.u32 %v4174, 4294901760
    %4208 = vmatpush1.msra.mxu0 %v4207
    %4209 = vmatprep.subr.mxu0 0.0
    %v4210 = vand.u32 %v4173, 4294901760
    %4211 = vmatpush1.msra.mxu0 %v4210
    %4212 = vmatprep.subr.mxu0 0.0
    %v4213 = vand.u32 %v4172, 4294901760
    %4214 = vmatpush1.msra.mxu0 %v4213
    %4215 = vmatprep.subr.mxu0 0.0
    %v4216 = vand.u32 %v4171, 4294901760
    %4217 = vmatpush1.msra.mxu0 %v4216
    %4218 = vmatprep.subr.mxu0 0.0
    %v4219 = vand.u32 %v4170, 4294901760
    %4220 = vmatpush1.msra.mxu0 %v4219
    %4221 = vmatprep.subr.mxu0 0.0
    %v4222 = vand.u32 %v4169, 4294901760
    %4223 = vmatpush1.msra.mxu0 %v4222
    %4224 = vmatprep.subr.mxu0 0.0
    %v4225 = vand.u32 %v4168, 4294901760
    %4226 = vmatpush1.msra.mxu0 %v4225
    %4227 = vmatprep.subr.mxu0 0.0
    %v4228 = vand.u32 %v4167, 4294901760
    %4229 = vmatpush1.msra.mxu0 %v4228
    %4230 = vmatprep.subr.mxu0 0.0
    %4231 = vmatpush2.msra.mxu0 0.0
    %4232 = vmatprep.subr.mxu0 0.0
    %4233 = vmatpush2.msra.mxu0 0.0
    %4234 = vmatprep.subr.mxu0 0.0
    %4235 = vmatpush2.msra.mxu0 0.0
    %4236 = vmatprep.subr.mxu0 0.0
    %4237 = vmatpush2.msra.mxu0 0.0
    %4238 = vmatprep.subr.mxu0 0.0
    %4239 = vmatpush2.msra.mxu0 0.0
    %4240 = vmatprep.subr.mxu0 0.0
    %4241 = vmatpush2.msra.mxu0 0.0
    %4242 = vmatprep.subr.mxu0 0.0
    %4243 = vmatpush2.msra.mxu0 0.0
    %4244 = vmatprep.subr.mxu0 0.0
    %4245 = vmatpush2.msra.mxu0 0.0
    %4246 = vmatprep.subr.mxu0 0.0
    %4247 = vmatpush2.msra.mxu0 0.0
    %4248 = vmatprep.subr.mxu0 0.0
    %4249 = vmatpush2.msra.mxu0 0.0
    %4250 = vmatprep.subr.mxu0 0.0
    %4251 = vmatpush2.msra.mxu0 0.0
    %4252 = vmatprep.subr.mxu0 0.0
    %4253 = vmatpush2.msra.mxu0 0.0
    %4254 = vmatprep.subr.mxu0 0.0
    %4255 = vmatpush2.msra.mxu0 0.0
    %4256 = vmatprep.subr.mxu0 0.0
    %4257 = vmatpush2.msra.mxu0 0.0
    %4258 = vmatprep.subr.mxu0 0.0
    %4259 = vmatpush2.msra.mxu0 0.0
    %4260 = vmatprep.subr.mxu0 0.0
    %4261 = vmatpush2.msra.mxu0 0.0
    %4262 = vmatprep.mubr.f32.mxu0 0.0
    %v4263 = vand.u32 %v4186, 4294901760
    %v4264 = vsub.f32 %v4186, %v4263
    %v4265 = vand.u32 %v4264, 4294901760
    %v4266 = vsub.f32 %v4264, %v4265
    %v4267 = vand.u32 %v4266, 4294901760
    %4268 = vmatmul.mubr.f32.gmra.mxu0 %v4267
    %v4269 = vpop.f32.mrf.mxu0
    %v4270 = vadd.f32 %v4182, %v4269
    %v4271 = vpop.f32.mrf.mxu0
    %4272 = vdwg.mxu0
    %4273 = vmatprep.subr.mxu0 0.0
    %4274 = vmatpush1.msra.mxu0 0.0
    %4275 = vmatprep.subr.mxu0 0.0
    %4276 = vmatpush1.msra.mxu0 0.0
    %4277 = vmatprep.subr.mxu0 0.0
    %4278 = vmatpush1.msra.mxu0 0.0
    %4279 = vmatprep.subr.mxu0 0.0
    %4280 = vmatpush1.msra.mxu0 0.0
    %4281 = vmatprep.subr.mxu0 0.0
    %4282 = vmatpush1.msra.mxu0 0.0
    %4283 = vmatprep.subr.mxu0 0.0
    %4284 = vmatpush1.msra.mxu0 0.0
    %4285 = vmatprep.subr.mxu0 0.0
    %v4286 = vand.u32 %v4176, 4294901760
    %v4287 = vsub.f32 %v4176, %v4286
    %v4288 = vand.u32 %v4287, 4294901760
    %v4289 = vsub.f32 %v4287, %v4288
    %v4290 = vand.u32 %v4289, 4294901760
    %4291 = vmatpush1.msra.mxu0 %v4290
    %4292 = vmatprep.subr.mxu0 0.0
    %v4293 = vand.u32 %v4175, 4294901760
    %v4294 = vsub.f32 %v4175, %v4293
    %v4295 = vand.u32 %v4294, 4294901760
    %v4296 = vsub.f32 %v4294, %v4295
    %v4297 = vand.u32 %v4296, 4294901760
    %4298 = vmatpush1.msra.mxu0 %v4297
    %4299 = vmatprep.subr.mxu0 0.0
    %v4300 = vand.u32 %v4174, 4294901760
    %v4301 = vsub.f32 %v4174, %v4300
    %v4302 = vand.u32 %v4301, 4294901760
    %v4303 = vsub.f32 %v4301, %v4302
    %v4304 = vand.u32 %v4303, 4294901760
    %4305 = vmatpush1.msra.mxu0 %v4304
    %4306 = vmatprep.subr.mxu0 0.0
    %v4307 = vand.u32 %v4173, 4294901760
    %v4308 = vsub.f32 %v4173, %v4307
    %v4309 = vand.u32 %v4308, 4294901760
    %v4310 = vsub.f32 %v4308, %v4309
    %v4311 = vand.u32 %v4310, 4294901760
    %4312 = vmatpush1.msra.mxu0 %v4311
    %4313 = vmatprep.subr.mxu0 0.0
    %v4314 = vand.u32 %v4172, 4294901760
    %v4315 = vsub.f32 %v4172, %v4314
    %v4316 = vand.u32 %v4315, 4294901760
    %v4317 = vsub.f32 %v4315, %v4316
    %v4318 = vand.u32 %v4317, 4294901760
    %4319 = vmatpush1.msra.mxu0 %v4318
    %4320 = vmatprep.subr.mxu0 0.0
    %v4321 = vand.u32 %v4171, 4294901760
    %v4322 = vsub.f32 %v4171, %v4321
    %v4323 = vand.u32 %v4322, 4294901760
    %v4324 = vsub.f32 %v4322, %v4323
    %v4325 = vand.u32 %v4324, 4294901760
    %4326 = vmatpush1.msra.mxu0 %v4325
    %4327 = vmatprep.subr.mxu0 0.0
    %v4328 = vand.u32 %v4170, 4294901760
    %v4329 = vsub.f32 %v4170, %v4328
    %v4330 = vand.u32 %v4329, 4294901760
    %v4331 = vsub.f32 %v4329, %v4330
    %v4332 = vand.u32 %v4331, 4294901760
    %4333 = vmatpush1.msra.mxu0 %v4332
    %4334 = vmatprep.subr.mxu0 0.0
    %v4335 = vand.u32 %v4169, 4294901760
    %v4336 = vsub.f32 %v4169, %v4335
    %v4337 = vand.u32 %v4336, 4294901760
    %v4338 = vsub.f32 %v4336, %v4337
    %v4339 = vand.u32 %v4338, 4294901760
    %4340 = vmatpush1.msra.mxu0 %v4339
    %4341 = vmatprep.subr.mxu0 0.0
    %v4342 = vand.u32 %v4168, 4294901760
    %v4343 = vsub.f32 %v4168, %v4342
    %v4344 = vand.u32 %v4343, 4294901760
    %v4345 = vsub.f32 %v4343, %v4344
    %v4346 = vand.u32 %v4345, 4294901760
    %4347 = vmatpush1.msra.mxu0 %v4346
    %4348 = vmatprep.subr.mxu0 0.0
    %v4349 = vand.u32 %v4167, 4294901760
    %v4350 = vsub.f32 %v4167, %v4349
    %v4351 = vand.u32 %v4350, 4294901760
    %v4352 = vsub.f32 %v4350, %v4351
    %v4353 = vand.u32 %v4352, 4294901760
    %4354 = vmatpush1.msra.mxu0 %v4353
    %4355 = vmatprep.subr.mxu0 0.0
    %4356 = vmatpush2.msra.mxu0 0.0
    %4357 = vmatprep.subr.mxu0 0.0
    %4358 = vmatpush2.msra.mxu0 0.0
    %4359 = vmatprep.subr.mxu0 0.0
    %4360 = vmatpush2.msra.mxu0 0.0
    %4361 = vmatprep.subr.mxu0 0.0
    %4362 = vmatpush2.msra.mxu0 0.0
    %4363 = vmatprep.subr.mxu0 0.0
    %4364 = vmatpush2.msra.mxu0 0.0
    %4365 = vmatprep.subr.mxu0 0.0
    %4366 = vmatpush2.msra.mxu0 0.0
    %4367 = vmatprep.subr.mxu0 0.0
    %4368 = vmatpush2.msra.mxu0 0.0
    %4369 = vmatprep.subr.mxu0 0.0
    %4370 = vmatpush2.msra.mxu0 0.0
    %4371 = vmatprep.subr.mxu0 0.0
    %4372 = vmatpush2.msra.mxu0 0.0
    %4373 = vmatprep.subr.mxu0 0.0
    %4374 = vmatpush2.msra.mxu0 0.0
    %4375 = vmatprep.subr.mxu0 0.0
    %4376 = vmatpush2.msra.mxu0 0.0
    %4377 = vmatprep.subr.mxu0 0.0
    %4378 = vmatpush2.msra.mxu0 0.0
    %4379 = vmatprep.subr.mxu0 0.0
    %4380 = vmatpush2.msra.mxu0 0.0
    %4381 = vmatprep.subr.mxu0 0.0
    %4382 = vmatpush2.msra.mxu0 0.0
    %4383 = vmatprep.subr.mxu0 0.0
    %4384 = vmatpush2.msra.mxu0 0.0
    %4385 = vmatprep.subr.mxu0 0.0
    %4386 = vmatpush2.msra.mxu0 0.0
    %4387 = vmatprep.mubr.f32.mxu0 0.0
    %v4388 = vand.u32 %v4186, 4294901760
    %4389 = vmatmul.mubr.f32.gmra.mxu0 %v4388
    %v4390 = vpop.f32.mrf.mxu0
    %v4391 = vadd.f32 %v4270, %v4390
    %v4392 = vpop.f32.mrf.mxu0
    %4393 = vdwg.mxu0
    %4394 = vmatprep.subr.mxu0 0.0
    %4395 = vmatpush1.msra.mxu0 0.0
    %4396 = vmatprep.subr.mxu0 0.0
    %4397 = vmatpush1.msra.mxu0 0.0
    %4398 = vmatprep.subr.mxu0 0.0
    %4399 = vmatpush1.msra.mxu0 0.0
    %4400 = vmatprep.subr.mxu0 0.0
    %4401 = vmatpush1.msra.mxu0 0.0
    %4402 = vmatprep.subr.mxu0 0.0
    %4403 = vmatpush1.msra.mxu0 0.0
    %4404 = vmatprep.subr.mxu0 0.0
    %4405 = vmatpush1.msra.mxu0 0.0
    %4406 = vmatprep.subr.mxu0 0.0
    %v4407 = vand.u32 %v4176, 4294901760
    %v4408 = vsub.f32 %v4176, %v4407
    %4409 = vmatpush1.msra.mxu0 %v4408
    %4410 = vmatprep.subr.mxu0 0.0
    %v4411 = vand.u32 %v4175, 4294901760
    %v4412 = vsub.f32 %v4175, %v4411
    %4413 = vmatpush1.msra.mxu0 %v4412
    %4414 = vmatprep.subr.mxu0 0.0
    %v4415 = vand.u32 %v4174, 4294901760
    %v4416 = vsub.f32 %v4174, %v4415
    %4417 = vmatpush1.msra.mxu0 %v4416
    %4418 = vmatprep.subr.mxu0 0.0
    %v4419 = vand.u32 %v4173, 4294901760
    %v4420 = vsub.f32 %v4173, %v4419
    %4421 = vmatpush1.msra.mxu0 %v4420
    %4422 = vmatprep.subr.mxu0 0.0
    %v4423 = vand.u32 %v4172, 4294901760
    %v4424 = vsub.f32 %v4172, %v4423
    %4425 = vmatpush1.msra.mxu0 %v4424
    %4426 = vmatprep.subr.mxu0 0.0
    %v4427 = vand.u32 %v4171, 4294901760
    %v4428 = vsub.f32 %v4171, %v4427
    %4429 = vmatpush1.msra.mxu0 %v4428
    %4430 = vmatprep.subr.mxu0 0.0
    %v4431 = vand.u32 %v4170, 4294901760
    %v4432 = vsub.f32 %v4170, %v4431
    %4433 = vmatpush1.msra.mxu0 %v4432
    %4434 = vmatprep.subr.mxu0 0.0
    %v4435 = vand.u32 %v4169, 4294901760
    %v4436 = vsub.f32 %v4169, %v4435
    %4437 = vmatpush1.msra.mxu0 %v4436
    %4438 = vmatprep.subr.mxu0 0.0
    %v4439 = vand.u32 %v4168, 4294901760
    %v4440 = vsub.f32 %v4168, %v4439
    %4441 = vmatpush1.msra.mxu0 %v4440
    %4442 = vmatprep.subr.mxu0 0.0
    %v4443 = vand.u32 %v4167, 4294901760
    %v4444 = vsub.f32 %v4167, %v4443
    %4445 = vmatpush1.msra.mxu0 %v4444
    %4446 = vmatprep.subr.mxu0 0.0
    %4447 = vmatpush2.msra.mxu0 0.0
    %4448 = vmatprep.subr.mxu0 0.0
    %4449 = vmatpush2.msra.mxu0 0.0
    %4450 = vmatprep.subr.mxu0 0.0
    %4451 = vmatpush2.msra.mxu0 0.0
    %4452 = vmatprep.subr.mxu0 0.0
    %4453 = vmatpush2.msra.mxu0 0.0
    %4454 = vmatprep.subr.mxu0 0.0
    %4455 = vmatpush2.msra.mxu0 0.0
    %4456 = vmatprep.subr.mxu0 0.0
    %4457 = vmatpush2.msra.mxu0 0.0
    %4458 = vmatprep.subr.mxu0 0.0
    %4459 = vmatpush2.msra.mxu0 0.0
    %4460 = vmatprep.subr.mxu0 0.0
    %4461 = vmatpush2.msra.mxu0 0.0
    %4462 = vmatprep.subr.mxu0 0.0
    %4463 = vmatpush2.msra.mxu0 0.0
    %4464 = vmatprep.subr.mxu0 0.0
    %4465 = vmatpush2.msra.mxu0 0.0
    %4466 = vmatprep.subr.mxu0 0.0
    %4467 = vmatpush2.msra.mxu0 0.0
    %4468 = vmatprep.subr.mxu0 0.0
    %4469 = vmatpush2.msra.mxu0 0.0
    %4470 = vmatprep.subr.mxu0 0.0
    %4471 = vmatpush2.msra.mxu0 0.0
    %4472 = vmatprep.subr.mxu0 0.0
    %4473 = vmatpush2.msra.mxu0 0.0
    %4474 = vmatprep.subr.mxu0 0.0
    %4475 = vmatpush2.msra.mxu0 0.0
    %4476 = vmatprep.subr.mxu0 0.0
    %4477 = vmatpush2.msra.mxu0 0.0
    %4478 = vmatprep.mubr.f32.mxu0 0.0
    %v4479 = vand.u32 %v4186, 4294901760
    %v4480 = vsub.f32 %v4186, %v4479
    %4481 = vmatmul.mubr.f32.gmra.mxu0 %v4480
    %v4482 = vpop.f32.mrf.mxu0
    %v4483 = vadd.f32 %v4391, %v4482
    %v4484 = vpop.f32.mrf.mxu0
    %4485 = vdwg.mxu0
    %4486 = vmatprep.subr.mxu0 0.0
    %4487 = vmatpush1.msra.mxu0 0.0
    %4488 = vmatprep.subr.mxu0 0.0
    %4489 = vmatpush1.msra.mxu0 0.0
    %4490 = vmatprep.subr.mxu0 0.0
    %4491 = vmatpush1.msra.mxu0 0.0
    %4492 = vmatprep.subr.mxu0 0.0
    %4493 = vmatpush1.msra.mxu0 0.0
    %4494 = vmatprep.subr.mxu0 0.0
    %4495 = vmatpush1.msra.mxu0 0.0
    %4496 = vmatprep.subr.mxu0 0.0
    %4497 = vmatpush1.msra.mxu0 0.0
    %4498 = vmatprep.subr.mxu0 0.0
    %v4499 = vand.u32 %v4176, 4294901760
    %4500 = vmatpush1.msra.mxu0 %v4499
    %4501 = vmatprep.subr.mxu0 0.0
    %v4502 = vand.u32 %v4175, 4294901760
    %4503 = vmatpush1.msra.mxu0 %v4502
    %4504 = vmatprep.subr.mxu0 0.0
    %v4505 = vand.u32 %v4174, 4294901760
    %4506 = vmatpush1.msra.mxu0 %v4505
    %4507 = vmatprep.subr.mxu0 0.0
    %v4508 = vand.u32 %v4173, 4294901760
    %4509 = vmatpush1.msra.mxu0 %v4508
    %4510 = vmatprep.subr.mxu0 0.0
    %v4511 = vand.u32 %v4172, 4294901760
    %4512 = vmatpush1.msra.mxu0 %v4511
    %4513 = vmatprep.subr.mxu0 0.0
    %v4514 = vand.u32 %v4171, 4294901760
    %4515 = vmatpush1.msra.mxu0 %v4514
    %4516 = vmatprep.subr.mxu0 0.0
    %v4517 = vand.u32 %v4170, 4294901760
    %4518 = vmatpush1.msra.mxu0 %v4517
    %4519 = vmatprep.subr.mxu0 0.0
    %v4520 = vand.u32 %v4169, 4294901760
    %4521 = vmatpush1.msra.mxu0 %v4520
    %4522 = vmatprep.subr.mxu0 0.0
    %v4523 = vand.u32 %v4168, 4294901760
    %4524 = vmatpush1.msra.mxu0 %v4523
    %4525 = vmatprep.subr.mxu0 0.0
    %v4526 = vand.u32 %v4167, 4294901760
    %4527 = vmatpush1.msra.mxu0 %v4526
    %4528 = vmatprep.subr.mxu0 0.0
    %4529 = vmatpush2.msra.mxu0 0.0
    %4530 = vmatprep.subr.mxu0 0.0
    %4531 = vmatpush2.msra.mxu0 0.0
    %4532 = vmatprep.subr.mxu0 0.0
    %4533 = vmatpush2.msra.mxu0 0.0
    %4534 = vmatprep.subr.mxu0 0.0
    %4535 = vmatpush2.msra.mxu0 0.0
    %4536 = vmatprep.subr.mxu0 0.0
    %4537 = vmatpush2.msra.mxu0 0.0
    %4538 = vmatprep.subr.mxu0 0.0
    %4539 = vmatpush2.msra.mxu0 0.0
    %4540 = vmatprep.subr.mxu0 0.0
    %4541 = vmatpush2.msra.mxu0 0.0
    %4542 = vmatprep.subr.mxu0 0.0
    %4543 = vmatpush2.msra.mxu0 0.0
    %4544 = vmatprep.subr.mxu0 0.0
    %4545 = vmatpush2.msra.mxu0 0.0
    %4546 = vmatprep.subr.mxu0 0.0
    %4547 = vmatpush2.msra.mxu0 0.0
    %4548 = vmatprep.subr.mxu0 0.0
    %4549 = vmatpush2.msra.mxu0 0.0
    %4550 = vmatprep.subr.mxu0 0.0
    %4551 = vmatpush2.msra.mxu0 0.0
    %4552 = vmatprep.subr.mxu0 0.0
    %4553 = vmatpush2.msra.mxu0 0.0
    %4554 = vmatprep.subr.mxu0 0.0
    %4555 = vmatpush2.msra.mxu0 0.0
    %4556 = vmatprep.subr.mxu0 0.0
    %4557 = vmatpush2.msra.mxu0 0.0
    %4558 = vmatprep.subr.mxu0 0.0
    %4559 = vmatpush2.msra.mxu0 0.0
    %4560 = vmatprep.mubr.f32.mxu0 0.0
    %v4561 = vand.u32 %v4186, 4294901760
    %v4562 = vsub.f32 %v4186, %v4561
    %v4563 = vand.u32 %v4562, 4294901760
    %4564 = vmatmul.mubr.f32.gmra.mxu0 %v4563
    %v4565 = vpop.f32.mrf.mxu0
    %v4566 = vadd.f32 %v4483, %v4565
    %v4567 = vpop.f32.mrf.mxu0
    %4568 = vdwg.mxu0
    %4569 = vmatprep.subr.mxu0 0.0
    %4570 = vmatpush1.msra.mxu0 0.0
    %4571 = vmatprep.subr.mxu0 0.0
    %4572 = vmatpush1.msra.mxu0 0.0
    %4573 = vmatprep.subr.mxu0 0.0
    %4574 = vmatpush1.msra.mxu0 0.0
    %4575 = vmatprep.subr.mxu0 0.0
    %4576 = vmatpush1.msra.mxu0 0.0
    %4577 = vmatprep.subr.mxu0 0.0
    %4578 = vmatpush1.msra.mxu0 0.0
    %4579 = vmatprep.subr.mxu0 0.0
    %4580 = vmatpush1.msra.mxu0 0.0
    %4581 = vmatprep.subr.mxu0 0.0
    %v4582 = vand.u32 %v4176, 4294901760
    %v4583 = vsub.f32 %v4176, %v4582
    %v4584 = vand.u32 %v4583, 4294901760
    %4585 = vmatpush1.msra.mxu0 %v4584
    %4586 = vmatprep.subr.mxu0 0.0
    %v4587 = vand.u32 %v4175, 4294901760
    %v4588 = vsub.f32 %v4175, %v4587
    %v4589 = vand.u32 %v4588, 4294901760
    %4590 = vmatpush1.msra.mxu0 %v4589
    %4591 = vmatprep.subr.mxu0 0.0
    %v4592 = vand.u32 %v4174, 4294901760
    %v4593 = vsub.f32 %v4174, %v4592
    %v4594 = vand.u32 %v4593, 4294901760
    %4595 = vmatpush1.msra.mxu0 %v4594
    %4596 = vmatprep.subr.mxu0 0.0
    %v4597 = vand.u32 %v4173, 4294901760
    %v4598 = vsub.f32 %v4173, %v4597
    %v4599 = vand.u32 %v4598, 4294901760
    %4600 = vmatpush1.msra.mxu0 %v4599
    %4601 = vmatprep.subr.mxu0 0.0
    %v4602 = vand.u32 %v4172, 4294901760
    %v4603 = vsub.f32 %v4172, %v4602
    %v4604 = vand.u32 %v4603, 4294901760
    %4605 = vmatpush1.msra.mxu0 %v4604
    %4606 = vmatprep.subr.mxu0 0.0
    %v4607 = vand.u32 %v4171, 4294901760
    %v4608 = vsub.f32 %v4171, %v4607
    %v4609 = vand.u32 %v4608, 4294901760
    %4610 = vmatpush1.msra.mxu0 %v4609
    %4611 = vmatprep.subr.mxu0 0.0
    %v4612 = vand.u32 %v4170, 4294901760
    %v4613 = vsub.f32 %v4170, %v4612
    %v4614 = vand.u32 %v4613, 4294901760
    %4615 = vmatpush1.msra.mxu0 %v4614
    %4616 = vmatprep.subr.mxu0 0.0
    %v4617 = vand.u32 %v4169, 4294901760
    %v4618 = vsub.f32 %v4169, %v4617
    %v4619 = vand.u32 %v4618, 4294901760
    %4620 = vmatpush1.msra.mxu0 %v4619
    %4621 = vmatprep.subr.mxu0 0.0
    %v4622 = vand.u32 %v4168, 4294901760
    %v4623 = vsub.f32 %v4168, %v4622
    %v4624 = vand.u32 %v4623, 4294901760
    %4625 = vmatpush1.msra.mxu0 %v4624
    %4626 = vmatprep.subr.mxu0 0.0
    %v4627 = vand.u32 %v4167, 4294901760
    %v4628 = vsub.f32 %v4167, %v4627
    %v4629 = vand.u32 %v4628, 4294901760
    %4630 = vmatpush1.msra.mxu0 %v4629
    %4631 = vmatprep.subr.mxu0 0.0
    %4632 = vmatpush2.msra.mxu0 0.0
    %4633 = vmatprep.subr.mxu0 0.0
    %4634 = vmatpush2.msra.mxu0 0.0
    %4635 = vmatprep.subr.mxu0 0.0
    %4636 = vmatpush2.msra.mxu0 0.0
    %4637 = vmatprep.subr.mxu0 0.0
    %4638 = vmatpush2.msra.mxu0 0.0
    %4639 = vmatprep.subr.mxu0 0.0
    %4640 = vmatpush2.msra.mxu0 0.0
    %4641 = vmatprep.subr.mxu0 0.0
    %4642 = vmatpush2.msra.mxu0 0.0
    %4643 = vmatprep.subr.mxu0 0.0
    %4644 = vmatpush2.msra.mxu0 0.0
    %4645 = vmatprep.subr.mxu0 0.0
    %4646 = vmatpush2.msra.mxu0 0.0
    %4647 = vmatprep.subr.mxu0 0.0
    %4648 = vmatpush2.msra.mxu0 0.0
    %4649 = vmatprep.subr.mxu0 0.0
    %4650 = vmatpush2.msra.mxu0 0.0
    %4651 = vmatprep.subr.mxu0 0.0
    %4652 = vmatpush2.msra.mxu0 0.0
    %4653 = vmatprep.subr.mxu0 0.0
    %4654 = vmatpush2.msra.mxu0 0.0
    %4655 = vmatprep.subr.mxu0 0.0
    %4656 = vmatpush2.msra.mxu0 0.0
    %4657 = vmatprep.subr.mxu0 0.0
    %4658 = vmatpush2.msra.mxu0 0.0
    %4659 = vmatprep.subr.mxu0 0.0
    %4660 = vmatpush2.msra.mxu0 0.0
    %4661 = vmatprep.subr.mxu0 0.0
    %4662 = vmatpush2.msra.mxu0 0.0
    %4663 = vmatprep.mubr.f32.mxu0 0.0
    %v4664 = vand.u32 %v4186, 4294901760
    %4665 = vmatmul.mubr.f32.gmra.mxu0 %v4664
    %v4666 = vpop.f32.mrf.mxu0
    %v4667 = vadd.f32 %v4566, %v4666
    %v4668 = vpop.f32.mrf.mxu0
    %4669 = vdwg.mxu0
    %4670 = vmatprep.subr.mxu0 0.0
    %4671 = vmatpush1.msra.mxu0 0.0
    %4672 = vmatprep.subr.mxu0 0.0
    %4673 = vmatpush1.msra.mxu0 0.0
    %4674 = vmatprep.subr.mxu0 0.0
    %4675 = vmatpush1.msra.mxu0 0.0
    %4676 = vmatprep.subr.mxu0 0.0
    %4677 = vmatpush1.msra.mxu0 0.0
    %4678 = vmatprep.subr.mxu0 0.0
    %4679 = vmatpush1.msra.mxu0 0.0
    %4680 = vmatprep.subr.mxu0 0.0
    %4681 = vmatpush1.msra.mxu0 0.0
    %4682 = vmatprep.subr.mxu0 0.0
    %v4683 = vand.u32 %v4176, 4294901760
    %4684 = vmatpush1.msra.mxu0 %v4683
    %4685 = vmatprep.subr.mxu0 0.0
    %v4686 = vand.u32 %v4175, 4294901760
    %4687 = vmatpush1.msra.mxu0 %v4686
    %4688 = vmatprep.subr.mxu0 0.0
    %v4689 = vand.u32 %v4174, 4294901760
    %4690 = vmatpush1.msra.mxu0 %v4689
    %4691 = vmatprep.subr.mxu0 0.0
    %v4692 = vand.u32 %v4173, 4294901760
    %4693 = vmatpush1.msra.mxu0 %v4692
    %4694 = vmatprep.subr.mxu0 0.0
    %v4695 = vand.u32 %v4172, 4294901760
    %4696 = vmatpush1.msra.mxu0 %v4695
    %4697 = vmatprep.subr.mxu0 0.0
    %v4698 = vand.u32 %v4171, 4294901760
    %4699 = vmatpush1.msra.mxu0 %v4698
    %4700 = vmatprep.subr.mxu0 0.0
    %v4701 = vand.u32 %v4170, 4294901760
    %4702 = vmatpush1.msra.mxu0 %v4701
    %4703 = vmatprep.subr.mxu0 0.0
    %v4704 = vand.u32 %v4169, 4294901760
    %4705 = vmatpush1.msra.mxu0 %v4704
    %4706 = vmatprep.subr.mxu0 0.0
    %v4707 = vand.u32 %v4168, 4294901760
    %4708 = vmatpush1.msra.mxu0 %v4707
    %4709 = vmatprep.subr.mxu0 0.0
    %v4710 = vand.u32 %v4167, 4294901760
    %4711 = vmatpush1.msra.mxu0 %v4710
    %4712 = vmatprep.subr.mxu0 0.0
    %4713 = vmatpush2.msra.mxu0 0.0
    %4714 = vmatprep.subr.mxu0 0.0
    %4715 = vmatpush2.msra.mxu0 0.0
    %4716 = vmatprep.subr.mxu0 0.0
    %4717 = vmatpush2.msra.mxu0 0.0
    %4718 = vmatprep.subr.mxu0 0.0
    %4719 = vmatpush2.msra.mxu0 0.0
    %4720 = vmatprep.subr.mxu0 0.0
    %4721 = vmatpush2.msra.mxu0 0.0
    %4722 = vmatprep.subr.mxu0 0.0
    %4723 = vmatpush2.msra.mxu0 0.0
    %4724 = vmatprep.subr.mxu0 0.0
    %4725 = vmatpush2.msra.mxu0 0.0
    %4726 = vmatprep.subr.mxu0 0.0
    %4727 = vmatpush2.msra.mxu0 0.0
    %4728 = vmatprep.subr.mxu0 0.0
    %4729 = vmatpush2.msra.mxu0 0.0
    %4730 = vmatprep.subr.mxu0 0.0
    %4731 = vmatpush2.msra.mxu0 0.0
    %4732 = vmatprep.subr.mxu0 0.0
    %4733 = vmatpush2.msra.mxu0 0.0
    %4734 = vmatprep.subr.mxu0 0.0
    %4735 = vmatpush2.msra.mxu0 0.0
    %4736 = vmatprep.subr.mxu0 0.0
    %4737 = vmatpush2.msra.mxu0 0.0
    %4738 = vmatprep.subr.mxu0 0.0
    %4739 = vmatpush2.msra.mxu0 0.0
    %4740 = vmatprep.subr.mxu0 0.0
    %4741 = vmatpush2.msra.mxu0 0.0
    %4742 = vmatprep.subr.mxu0 0.0
    %4743 = vmatpush2.msra.mxu0 0.0
    %4744 = vmatprep.mubr.f32.mxu0 0.0
    %v4745 = vand.u32 %v4186, 4294901760
    %4746 = vmatmul.mubr.f32.gmra.mxu0 %v4745
    %v4747 = vpop.f32.mrf.mxu0
    %v4748 = vadd.f32 %v4667, %v4747
    %v4749 = vpop.f32.mrf.mxu0
    %4750 = vdwg.mxu0
    %4751 = vst [vmem:[#allocation3] sm:$0x3] %v4748
    // Predicated region
    $region26: #{cnn_forward.1} parent=1 // pred_check
      _
    $region27: #{cnn_forward.1} parent=1 // pred_check_branch
      %4753 = sbr.rel (0) target = $region29
    $region28: #{cnn_forward.1} parent=1 // pred_region
      %s4755 = ssub.s32 32, 32
      %4756 = vsyncadd [#allocation4], %s4755
      %s4758 = sshll.u32 [#allocation3], 4
      %s4759 = int_to_ptr.vmem [resolvable:$true] %s4758
      %4761 = dma.vmem_to_hbm [thread:$0]  %s4759, 32, %s6, [#allocation4]
    $region29: #{cnn_forward.1} parent=1 // pred_fallthru
      _
    // Predicated region
    $region30: #{cnn_forward.1} parent=1 // pred_check
      _
    $region31: #{cnn_forward.1} parent=1 // pred_check_branch
      %4763 = sbr.rel (0) target = $region33
    $region32: #{cnn_forward.1} parent=1 // pred_region
      %4764 = dma.done [#allocation4], 32
    $region33: #{cnn_forward.1} parent=1 // pred_fallthru
      _
    %4765 = vsyncpa [#allocation4], 1

</llo_original>
